<compile_context>
chip_gen: v6e
topology: v6e:2x2x1
jax: 0.10.0
libtpu: 0.0.40
codegen_flags: <defaults>
</compile_context>

<pallas_src>
import functools

import jax
import jax.numpy as jnp
from jax.experimental import pallas as pl
from jax.experimental.pallas import tpu as pltpu

F32 = jnp.float32
BF16 = jnp.bfloat16
_VMEM_LIMIT = 48 * 1024 * 1024   # <= v7x 64 MiB physical; raise on v5e/v6e if th grows


def _compiler_params():
    return pltpu.CompilerParams(
        dimension_semantics=("parallel", "parallel"),
        vmem_limit_bytes=_VMEM_LIMIT)


def _round_up(x, m):
    return (x + m - 1) // m * m


def _row_tile(h):
    for t in (16, 8):
        if h % t == 0:
            return t
    return h


# ----------------------------------------------------------------------------
# glue: padded, row-flattened, halo-tiled input windows (bf16)
# ----------------------------------------------------------------------------
def _halo_windows(x_nhwc, k, th):
    """(B, H, W, C) -> (B, H//th, (th+k)*Wp8, C) bf16 overlapping row-tile windows.

    Wp8 = round_up(W + K - 1, 8) so every kh*Wp8 offset used inside the kernel is
    sublane(8)-aligned.  Window ri covers padded rows [ri*th, ri*th + th + K), i.e.
    the tile plus its conv halo, so each grid step only DMAs O(tile) into VMEM.
    """
    b, h, w, c = x_nhwc.shape
    pad = k // 2
    wp8 = _round_up(w + k - 1, 8)
    xp = jnp.pad(x_nhwc, ((0, 0), (pad, k - pad), (pad, wp8 - w - pad), (0, 0)))
    xf = xp.reshape(b, (h + k) * wp8, c).astype(BF16)
    win = (th + k) * wp8
    nrt = h // th
    tiles = [xf[:, i * th * wp8: i * th * wp8 + win, :] for i in range(nrt)]
    return jnp.stack(tiles, axis=1), wp8


# ----------------------------------------------------------------------------
# shared in-kernel helpers
# ----------------------------------------------------------------------------
def _fill_staging(stage_ref, xw_ref, th, wp8, k, cin):
    """K shifted copies (one per kw) into the bf16 staging buffer.

    stage[:, kw*cin:(kw+1)*cin] = window rows shifted by kw.  The per-kh matmul
    LHS is then stage[kh*wp8 : kh*wp8 + th*wp8, :] -- an 8-aligned full-lane view
    (no second copy).  Replaces the previous K*K misaligned im2col copies.
    """
    srows = (th + k - 1) * wp8
    for kw in range(k):
        stage_ref[:, kw * cin:(kw + 1) * cin] = xw_ref[0, 0, pl.ds(kw, srows), :]


def _conv_accum(stage_ref, w_ref, th, wp8, k):
    """sum_kh  stage[kh*wp8 : kh*wp8 + M, :] @ w[kh]   (bf16 x bf16 -> f32 acc)."""
    m = th * wp8
    acc = jnp.dot(stage_ref[pl.ds(0, m), :], w_ref[0],
                  preferred_element_type=F32)
    for kh in range(1, k):
        acc = acc + jnp.dot(stage_ref[pl.ds(kh * wp8, m), :], w_ref[kh],
                            preferred_element_type=F32)
    return acc


# ----------------------------------------------------------------------------
# generic fused conv block: staging fill -> K deep matmuls -> (+residual)(ReLU)
# ----------------------------------------------------------------------------
def _conv_kernel(*refs, th, wp8, ow, k, cin, cout, relu, residual, dense_out):
    if residual:
        xw_ref, w_ref, b_ref, res_ref, o_ref, stage_ref = refs
    else:
        xw_ref, w_ref, b_ref, o_ref, stage_ref = refs
    _fill_staging(stage_ref, xw_ref, th, wp8, k, cin)
    acc = _conv_accum(stage_ref, w_ref, th, wp8, k) + b_ref[...]
    t = acc.reshape(th, wp8, cout)[:, :ow, :]       # drop the K-1 wrap columns
    if residual:
        t = t + res_ref[0]
    if relu:
        t = jnp.maximum(t, 0.0)
    if dense_out:
        o_ref[...] = t.reshape(1, th, ow * cout)    # lane-dense rows
    else:
        o_ref[...] = t.reshape(1, th, ow, cout)


def conv_block(x, w_hwio, bias, *, relu=True, residual=None, dense_out=False):
    """Stride-1 'same' conv (optionally + residual + ReLU).  x NHWC f32, w HWIO."""
    b, h, ow, cin = x.shape
    k = w_hwio.shape[0]
    cout = w_hwio.shape[-1]
    th = _row_tile(h)
    nrt = h // th
    xw, wp8 = _halo_windows(x, k, th)
    kern = functools.partial(_conv_kernel, th=th, wp8=wp8, ow=ow, k=k, cin=cin,
                             cout=cout, relu=relu,
                             residual=residual is not None, dense_out=dense_out)
    in_specs = [
        pl.BlockSpec((1, 1, (th + k) * wp8, cin), lambda bi, ri: (bi, ri, 0, 0)),
        pl.BlockSpec((k, k * cin, cout), lambda bi, ri: (0, 0, 0)),
        pl.BlockSpec((1, cout), lambda bi, ri: (0, 0)),
    ]
    args = [xw, w_hwio.reshape(k, k * cin, cout).astype(BF16),
            bias.reshape(1, cout).astype(F32)]
    if residual is not None:
        in_specs.append(pl.BlockSpec((1, th, ow, cout),
                                     lambda bi, ri: (bi, ri, 0, 0)))
        args.append(residual)
    if dense_out:
        out_shape = jax.ShapeDtypeStruct((b, h, ow * cout), F32)
        out_spec = pl.BlockSpec((1, th, ow * cout), lambda bi, ri: (bi, ri, 0))
    else:
        out_shape = jax.ShapeDtypeStruct((b, h, ow, cout), F32)
        out_spec = pl.BlockSpec((1, th, ow, cout), lambda bi, ri: (bi, ri, 0, 0))
    return pl.pallas_call(
        kern,
        out_shape=out_shape,
        grid=(b, nrt),
        in_specs=in_specs,
        out_specs=out_spec,
        scratch_shapes=[pltpu.VMEM(((th + k - 1) * wp8, k * cin), BF16)],
        compiler_params=_compiler_params(),
    )(*args)


# ----------------------------------------------------------------------------
# stage A: conv1 (7x7 zero-embedded to 9x9) + shallow1 (9x9) share one staging /
#          one set of matmuls; shallow2 (1x1) chained in the epilogue.
# ----------------------------------------------------------------------------
def _stage_a_kernel(xw_ref, w_ref, b_ref, w2_ref, b2_ref, o1_ref, o2_ref,
                    stage_ref, *, th, wp8, ow, k, cin, c1, c2):
    _fill_staging(stage_ref, xw_ref, th, wp8, k, cin)
    acc = _conv_accum(stage_ref, w_ref, th, wp8, k) + b_ref[...]
    acc = jnp.maximum(acc, 0.0)                     # relu(conv1) | relu(shallow1)
    out1 = acc[:, :c1]
    sh1 = acc[:, c1:]
    sh2 = jnp.maximum(
        jnp.dot(sh1.astype(BF16), w2_ref[...], preferred_element_type=F32)
        + b2_ref[...], 0.0)
    o1_ref[...] = out1.reshape(th, wp8, c1)[:, :ow, :].reshape(1, th, ow, c1)
    o2_ref[...] = sh2.reshape(th, wp8, c2)[:, :ow, :].reshape(1, th, ow, c2)


def stage_a(concat, w1_hwio, b1, w2_mat, b2):
    b, h, ow, cin = concat.shape
    k = w1_hwio.shape[0]
    ctot = w1_hwio.shape[-1]
    c1 = ctot - w2_mat.shape[0]                     # conv1 channels (60)
    c2 = w2_mat.shape[1]                            # shallow2 channels (32)
    th = _row_tile(h)
    nrt = h // th
    xw, wp8 = _halo_windows(concat, k, th)
    kern = functools.partial(_stage_a_kernel, th=th, wp8=wp8, ow=ow, k=k,
                             cin=cin, c1=c1, c2=c2)
    return pl.pallas_call(
        kern,
        out_shape=(jax.ShapeDtypeStruct((b, h, ow, c1), F32),
                   jax.ShapeDtypeStruct((b, h, ow, c2), F32)),
        grid=(b, nrt),
        in_specs=[
            pl.BlockSpec((1, 1, (th + k) * wp8, cin), lambda bi, ri: (bi, ri, 0, 0)),
            pl.BlockSpec((k, k * cin, ctot), lambda bi, ri: (0, 0, 0)),
            pl.BlockSpec((1, ctot), lambda bi, ri: (0, 0)),
            pl.BlockSpec(w2_mat.shape, lambda bi, ri: (0, 0)),
            pl.BlockSpec((1, c2), lambda bi, ri: (0, 0)),
        ],
        out_specs=(pl.BlockSpec((1, th, ow, c1), lambda bi, ri: (bi, ri, 0, 0)),
                   pl.BlockSpec((1, th, ow, c2), lambda bi, ri: (bi, ri, 0, 0))),
        scratch_shapes=[pltpu.VMEM(((th + k - 1) * wp8, k * cin), BF16)],
        compiler_params=_compiler_params(),
    )(xw, w1_hwio.reshape(k, k * cin, ctot).astype(BF16),
      b1.reshape(1, ctot).astype(F32),
      w2_mat.astype(BF16), b2.reshape(1, c2).astype(F32))


# ----------------------------------------------------------------------------
# SFAU head: 3x3 conv -> split (gate | detail), up_x = up + sigmoid(gate)*detail
# `up` input and output are lane-dense (W*4 = 256 lanes).
# ----------------------------------------------------------------------------
def _sfau_head_kernel(xw_ref, w_ref, b_ref, up_ref, o_ref, stage_ref,
                      *, th, wp8, ow, k, cin, cm):
    _fill_staging(stage_ref, xw_ref, th, wp8, k, cin)
    acc = _conv_accum(stage_ref, w_ref, th, wp8, k) + b_ref[...]
    t = acc.reshape(th, wp8, 2 * cm)[:, :ow, :]
    gate = 1.0 / (1.0 + jnp.exp(-t[..., :cm]))      # exact sigmoid
    detail = t[..., cm:]
    out = up_ref[0] + (gate * detail).reshape(th, ow * cm)
    o_ref[...] = out.reshape(1, th, ow * cm)


def sfau_head(feat, up_dense, w_hwio, bias):
    b, h, ow, cin = feat.shape
    k = w_hwio.shape[0]
    cm = w_hwio.shape[-1] // 2
    th = _row_tile(h)
    nrt = h // th
    xw, wp8 = _halo_windows(feat, k, th)
    kern = functools.partial(_sfau_head_kernel, th=th, wp8=wp8, ow=ow, k=k,
                             cin=cin, cm=cm)
    return pl.pallas_call(
        kern,
        out_shape=jax.ShapeDtypeStruct((b, h, ow * cm), F32),
        grid=(b, nrt),
        in_specs=[
            pl.BlockSpec((1, 1, (th + k) * wp8, cin), lambda bi, ri: (bi, ri, 0, 0)),
            pl.BlockSpec((k, k * cin, 2 * cm), lambda bi, ri: (0, 0, 0)),
            pl.BlockSpec((1, 2 * cm), lambda bi, ri: (0, 0)),
            pl.BlockSpec((1, th, ow * cm), lambda bi, ri: (bi, ri, 0)),
        ],
        out_specs=pl.BlockSpec((1, th, ow * cm), lambda bi, ri: (bi, ri, 0)),
        scratch_shapes=[pltpu.VMEM(((th + k - 1) * wp8, k * cin), BF16)],
        compiler_params=_compiler_params(),
    )(xw, w_hwio.reshape(k, k * cin, 2 * cm).astype(BF16),
      bias.reshape(1, 2 * cm).astype(F32), up_dense)


# ----------------------------------------------------------------------------
# parameters
# ----------------------------------------------------------------------------
def init_conv(key, k, cin, cout, scale=0.05):
    kw, kb = jax.random.split(key)
    return {'w': scale * jax.random.normal(kw, (k, k, cin, cout), F32),
            'b': scale * jax.random.normal(kb, (cout,), F32)}


def init_params(key, spectral_num=4):
    in_ch, out_ch = spectral_num + 1, spectral_num
    it = iter(jax.random.split(key, 16))
    p = {}
    p['sfau_feat'] = init_conv(next(it), 3, in_ch, 16)
    p['sfau_head'] = init_conv(next(it), 3, 16, 2 * spectral_num)
    p['conv1'] = init_conv(next(it), 7, in_ch, 60)
    p['conv2_1'] = init_conv(next(it), 3, 60, 20)
    p['conv2_2'] = init_conv(next(it), 5, 60, 20)
    p['conv2_3'] = init_conv(next(it), 7, 60, 20)
    p['conv3'] = init_conv(next(it), 3, 60, 30)
    p['conv4_1'] = init_conv(next(it), 3, 30, 10)
    p['conv4_2'] = init_conv(next(it), 5, 30, 10)
    p['conv4_3'] = init_conv(next(it), 7, 30, 10)
    p['conv5'] = init_conv(next(it), 5, 30, out_ch)
    p['shallow1'] = init_conv(next(it), 9, in_ch, 64)
    p['shallow2'] = init_conv(next(it), 1, 64, 32)
    p['shallow3'] = init_conv(next(it), 5, 32, out_ch)
    return p


def _embed_center(w, kbig):
    """Zero-embed a (k,k,Cin,Cout) kernel into (kbig,kbig,Cin,Cout), centered."""
    k = w.shape[0]
    if k == kbig:
        return w
    off = (kbig - k) // 2
    out = jnp.zeros((kbig, kbig) + w.shape[2:], w.dtype)
    return out.at[off:off + k, off:off + k].set(w)


# ----------------------------------------------------------------------------
# SFAU (SANM) stand-in and full forward
# ----------------------------------------------------------------------------
def sfau_forward(p, x_lms, pan):
    """Stand-in for the unspecified SFAU: nearest-4x upsample of the LMS modulated
    by a PAN-guided gated detail injection.  Returns a 3-tuple like the reference."""
    s = pan.shape[1] // x_lms.shape[1]
    up = jnp.repeat(jnp.repeat(x_lms, s, axis=1), s, axis=2)       # (B, H, W, 4)
    feat_in = jnp.concatenate([up, pan], axis=-1)                  # (B, H, W, 5)
    feat = conv_block(feat_in, p['sfau_feat']['w'], p['sfau_feat']['b'], relu=True)
    b, h, w, cm = up.shape
    up_x = sfau_head(feat, up.reshape(b, h, w * cm),
                     p['sfau_head']['w'], p['sfau_head']['b'])
    return up_x.reshape(b, h, w, cm), feat, up


def msdcnn_sanm_forward(p, x_nchw, y_nchw):
    x = jnp.transpose(x_nchw, (0, 2, 3, 1)).astype(F32)            # LMS -> NHWC
    y = jnp.transpose(y_nchw, (0, 2, 3, 1)).astype(F32)            # PAN -> NHWC

    up_x, _, _ = sfau_forward(p, x, y)                             # (B, H, W, 4)
    concat = jnp.concatenate([up_x, y], axis=-1)                   # (B, H, W, 5)

    # conv1 (embedded to 9x9) + shallow1 + shallow2 fused
    w_a = jnp.concatenate([_embed_center(p['conv1']['w'], 9),
                           p['shallow1']['w']], axis=-1)           # (9,9,5,124)
    b_a = jnp.concatenate([p['conv1']['b'], p['shallow1']['b']])
    out1, sh2 = stage_a(concat, w_a, b_a,
                        p['shallow2']['w'].reshape(64, 32), p['shallow2']['b'])

    # conv2_{1,2,3} fused (zero-embedded to 7x7) + residual + ReLU
    w_b = jnp.concatenate([_embed_center(p['conv2_1']['w'], 7),
                           _embed_center(p['conv2_2']['w'], 7),
                           p['conv2_3']['w']], axis=-1)            # (7,7,60,60)
    b_b = jnp.concatenate([p['conv2_1']['b'], p['conv2_2']['b'], p['conv2_3']['b']])
    out2 = conv_block(out1, w_b, b_b, relu=True, residual=out1)

    out3 = conv_block(out2, p['conv3']['w'], p['conv3']['b'], relu=True)

    # conv4_{1,2,3} fused + residual + ReLU
    w_d = jnp.concatenate([_embed_center(p['conv4_1']['w'], 7),
                           _embed_center(p['conv4_2']['w'], 7),
                           p['conv4_3']['w']], axis=-1)            # (7,7,30,30)
    b_d = jnp.concatenate([p['conv4_1']['b'], p['conv4_2']['b'], p['conv4_3']['b']])
    out4 = conv_block(out3, w_d, b_d, relu=True, residual=out3)

    # conv5(out4) + shallow3(sh2) + add + ReLU == ONE 5x5 conv on channel-concat
    # input with stacked weights [w5; w3] and summed bias (single deeper matmul).
    tail_in = jnp.concatenate([out4, sh2], axis=-1)                # (B, H, W, 62)
    w_e = jnp.concatenate([p['conv5']['w'], p['shallow3']['w']], axis=2)
    b_e = p['conv5']['b'] + p['shallow3']['b']
    bb, hh, ww, _ = tail_in.shape
    out = conv_block(tail_in, w_e, b_e, relu=True, dense_out=True) # (B, H, W*4)
    out = out.reshape(bb, hh, ww, 4)

    return (jnp.transpose(out, (0, 3, 1, 2)),                      # (B, 4, H, W)
            jnp.transpose(up_x, (0, 3, 1, 2)))                     # (B, 4, H, W)


# ----------------------------------------------------------------------------
def _check_conv_block():
    """Validate the staging/matmul conv kernel against XLA's conv."""
    k1, k2, k3 = jax.random.split(jax.random.PRNGKey(42), 3)
    x = jax.random.normal(k1, (1, 16, 16, 12), F32)
    w = 0.1 * jax.random.normal(k2, (5, 5, 12, 8), F32)
    b = 0.1 * jax.random.normal(k3, (8,), F32)
    got = conv_block(x, w, b, relu=True)
    ref = jax.lax.conv_general_dilated(
        x, w, (1, 1), ((2, 2), (2, 2)),
        dimension_numbers=('NHWC', 'HWIO', 'NHWC'),
        precision=jax.lax.Precision.HIGHEST) + b
    ref = jnp.maximum(ref, 0.0)
    err = float(jnp.max(jnp.abs(got - ref)))
    # bf16 matmul operands (f32 accumulation) => relaxed tolerance vs f32 ref.
    assert err < 6e-2, f"conv_block mismatch: max abs err {err}"


if __name__ == "__main__":
    _check_conv_block()

    key = jax.random.PRNGKey(0)
    kp, kx, ky = jax.random.split(key, 3)
    params = init_params(kp, spectral_num=4)

    B, h, w = 2, 16, 16                           # LMS 16x16 -> PAN 64x64
    x = jax.random.normal(kx, (B, 4, h, w), F32)              # LMS
    y = jax.random.normal(ky, (B, 1, 4 * h, 4 * w), F32)      # PAN

    fwd = jax.jit(msdcnn_sanm_forward)
    out, up_x = fwd(params, x, y)
    jax.block_until_ready((out, up_x))

    assert out.shape == (B, 4, 4 * h, 4 * w) and out.dtype == F32
    assert up_x.shape == (B, 4, 4 * h, 4 * w) and up_x.dtype == F32
    assert bool(jnp.all(jnp.isfinite(out))) and bool(jnp.all(jnp.isfinite(up_x)))
    print("KERNEL_OK")
</pallas_src>

<mosaic_0001>
module attributes {stable_mosaic.version = 11 : i64} {
  func.func @_conv_kernel(%arg0: i32, %arg1: i32, %arg2: memref<1x1x504x12xbf16, #tpu.memory_space<vmem>>, %arg3: memref<5x60x8xbf16, #tpu.memory_space<vmem>>, %arg4: memref<1x8xf32, #tpu.memory_space<vmem>>, %arg5: memref<1x16x16x8xf32, #tpu.memory_space<vmem>>, %arg6: memref<480x60xbf16, #tpu.memory_space<vmem>>) attributes {dimension_semantics = [#tpu.dimension_semantics<parallel>, #tpu.dimension_semantics<parallel>], iteration_bounds = array<i64: 1, 1>, scalar_prefetch = 0 : i64, scratch_operands = 1 : i64, tpu.core_type = #tpu.core_type<tc>, window_params = [{transform_indices = @transform_0, window_bounds = array<i64: 1, 1, 504, 12>}, {pipeline_mode = #tpu.pipeline_mode<synchronous>, transform_indices = @transform_1, window_bounds = array<i64: 5, 60, 8>}, {pipeline_mode = #tpu.pipeline_mode<synchronous>, transform_indices = @transform_2, window_bounds = array<i64: 1, 8>}, {transform_indices = @transform_3, window_bounds = array<i64: 1, 16, 16, 8>}]} {
    %c0 = arith.constant 0 : index
    %c0_0 = arith.constant 0 : index
    %c0_1 = arith.constant 0 : index
    %c0_2 = arith.constant 0 : index
    %0 = vector.load %arg2[%c0, %c0_0, %c0_1, %c0_2] : memref<1x1x504x12xbf16, #tpu.memory_space<vmem>>, vector<1x1x480x12xbf16>
    %1 = vector.shape_cast %0 : vector<1x1x480x12xbf16> to vector<480x12xbf16>
    %c0_3 = arith.constant 0 : index
    %c0_4 = arith.constant 0 : index
    %2 = vector.load %arg6[%c0_3, %c0_4] : memref<480x60xbf16, #tpu.memory_space<vmem>>, vector<480x12xbf16>
    tpu.vector_store %arg6[%c0_3, %c0_4], %1 {strides = array<i32>} : memref<480x60xbf16, #tpu.memory_space<vmem>>, vector<480x12xbf16>,
    %c0_5 = arith.constant 0 : index
    %c0_6 = arith.constant 0 : index
    %c1 = arith.constant 1 : index
    %c0_7 = arith.constant 0 : index
    %3 = vector.load %arg2[%c0_5, %c0_6, %c1, %c0_7] : memref<1x1x504x12xbf16, #tpu.memory_space<vmem>>, vector<1x1x480x12xbf16>
    %4 = vector.shape_cast %3 : vector<1x1x480x12xbf16> to vector<480x12xbf16>
    %c0_8 = arith.constant 0 : index
    %c12 = arith.constant 12 : index
    %5 = vector.load %arg6[%c0_8, %c12] : memref<480x60xbf16, #tpu.memory_space<vmem>>, vector<480x12xbf16>
    tpu.vector_store %arg6[%c0_8, %c12], %4 {strides = array<i32>} : memref<480x60xbf16, #tpu.memory_space<vmem>>, vector<480x12xbf16>,
    %c0_9 = arith.constant 0 : index
    %c0_10 = arith.constant 0 : index
    %c2 = arith.constant 2 : index
    %c0_11 = arith.constant 0 : index
    %6 = vector.load %arg2[%c0_9, %c0_10, %c2, %c0_11] : memref<1x1x504x12xbf16, #tpu.memory_space<vmem>>, vector<1x1x480x12xbf16>
    %7 = vector.shape_cast %6 : vector<1x1x480x12xbf16> to vector<480x12xbf16>
    %c0_12 = arith.constant 0 : index
    %c24 = arith.constant 24 : index
    %8 = vector.load %arg6[%c0_12, %c24] : memref<480x60xbf16, #tpu.memory_space<vmem>>, vector<480x12xbf16>
    tpu.vector_store %arg6[%c0_12, %c24], %7 {strides = array<i32>} : memref<480x60xbf16, #tpu.memory_space<vmem>>, vector<480x12xbf16>,
    %c0_13 = arith.constant 0 : index
    %c0_14 = arith.constant 0 : index
    %c3 = arith.constant 3 : index
    %c0_15 = arith.constant 0 : index
    %9 = vector.load %arg2[%c0_13, %c0_14, %c3, %c0_15] : memref<1x1x504x12xbf16, #tpu.memory_space<vmem>>, vector<1x1x480x12xbf16>
    %10 = vector.shape_cast %9 : vector<1x1x480x12xbf16> to vector<480x12xbf16>
    %c0_16 = arith.constant 0 : index
    %c36 = arith.constant 36 : index
    %11 = vector.load %arg6[%c0_16, %c36] : memref<480x60xbf16, #tpu.memory_space<vmem>>, vector<480x12xbf16>
    tpu.vector_store %arg6[%c0_16, %c36], %10 {strides = array<i32>} : memref<480x60xbf16, #tpu.memory_space<vmem>>, vector<480x12xbf16>,
    %c0_17 = arith.constant 0 : index
    %c0_18 = arith.constant 0 : index
    %c4 = arith.constant 4 : index
    %c0_19 = arith.constant 0 : index
    %12 = vector.load %arg2[%c0_17, %c0_18, %c4, %c0_19] : memref<1x1x504x12xbf16, #tpu.memory_space<vmem>>, vector<1x1x480x12xbf16>
    %13 = vector.shape_cast %12 : vector<1x1x480x12xbf16> to vector<480x12xbf16>
    %c0_20 = arith.constant 0 : index
    %c48 = arith.constant 48 : index
    %14 = vector.load %arg6[%c0_20, %c48] : memref<480x60xbf16, #tpu.memory_space<vmem>>, vector<480x12xbf16>
    tpu.vector_store %arg6[%c0_20, %c48], %13 {strides = array<i32>} : memref<480x60xbf16, #tpu.memory_space<vmem>>, vector<480x12xbf16>,
    %c0_21 = arith.constant 0 : index
    %c0_22 = arith.constant 0 : index
    %15 = vector.load %arg6[%c0_21, %c0_22] : memref<480x60xbf16, #tpu.memory_space<vmem>>, vector<384x60xbf16>
    %c0_23 = arith.constant 0 : index
    %c0_24 = arith.constant 0 : index
    %c0_25 = arith.constant 0 : index
    %16 = vector.load %arg3[%c0_23, %c0_24, %c0_25] : memref<5x60x8xbf16, #tpu.memory_space<vmem>>, vector<1x60x8xbf16>
    %17 = vector.shape_cast %16 : vector<1x60x8xbf16> to vector<60x8xbf16>
    %cst = arith.constant dense<0.000000e+00> : vector<384x8xf32>
    %18 = tpu.matmul %15, %17, %cst {dimension_numbers = #tpu.dot_dimension_numbers<[1], [0], [0], [1], [0, 0, 1, 1], [], []>} : vector<384x60xbf16>, vector<60x8xbf16>, vector<384x8xf32> -> vector<384x8xf32>
    %c24_26 = arith.constant 24 : index
    %c0_27 = arith.constant 0 : index
    %19 = vector.load %arg6[%c24_26, %c0_27] : memref<480x60xbf16, #tpu.memory_space<vmem>>, vector<384x60xbf16>
    %c1_28 = arith.constant 1 : index
    %c0_29 = arith.constant 0 : index
    %c0_30 = arith.constant 0 : index
    %20 = vector.load %arg3[%c1_28, %c0_29, %c0_30] : memref<5x60x8xbf16, #tpu.memory_space<vmem>>, vector<1x60x8xbf16>
    %21 = vector.shape_cast %20 : vector<1x60x8xbf16> to vector<60x8xbf16>
    %cst_31 = arith.constant dense<0.000000e+00> : vector<384x8xf32>
    %22 = tpu.matmul %19, %21, %cst_31 {dimension_numbers = #tpu.dot_dimension_numbers<[1], [0], [0], [1], [0, 0, 1, 1], [], []>} : vector<384x60xbf16>, vector<60x8xbf16>, vector<384x8xf32> -> vector<384x8xf32>
    %23 = arith.addf %18, %22 : vector<384x8xf32>
    %c48_32 = arith.constant 48 : index
    %c0_33 = arith.constant 0 : index
    %24 = vector.load %arg6[%c48_32, %c0_33] : memref<480x60xbf16, #tpu.memory_space<vmem>>, vector<384x60xbf16>
    %c2_34 = arith.constant 2 : index
    %c0_35 = arith.constant 0 : index
    %c0_36 = arith.constant 0 : index
    %25 = vector.load %arg3[%c2_34, %c0_35, %c0_36] : memref<5x60x8xbf16, #tpu.memory_space<vmem>>, vector<1x60x8xbf16>
    %26 = vector.shape_cast %25 : vector<1x60x8xbf16> to vector<60x8xbf16>
    %cst_37 = arith.constant dense<0.000000e+00> : vector<384x8xf32>
    %27 = tpu.matmul %24, %26, %cst_37 {dimension_numbers = #tpu.dot_dimension_numbers<[1], [0], [0], [1], [0, 0, 1, 1], [], []>} : vector<384x60xbf16>, vector<60x8xbf16>, vector<384x8xf32> -> vector<384x8xf32>
    %28 = arith.addf %23, %27 : vector<384x8xf32>
    %c72 = arith.constant 72 : index
    %c0_38 = arith.constant 0 : index
    %29 = vector.load %arg6[%c72, %c0_38] : memref<480x60xbf16, #tpu.memory_space<vmem>>, vector<384x60xbf16>
    %c3_39 = arith.constant 3 : index
    %c0_40 = arith.constant 0 : index
    %c0_41 = arith.constant 0 : index
    %30 = vector.load %arg3[%c3_39, %c0_40, %c0_41] : memref<5x60x8xbf16, #tpu.memory_space<vmem>>, vector<1x60x8xbf16>
    %31 = vector.shape_cast %30 : vector<1x60x8xbf16> to vector<60x8xbf16>
    %cst_42 = arith.constant dense<0.000000e+00> : vector<384x8xf32>
    %32 = tpu.matmul %29, %31, %cst_42 {dimension_numbers = #tpu.dot_dimension_numbers<[1], [0], [0], [1], [0, 0, 1, 1], [], []>} : vector<384x60xbf16>, vector<60x8xbf16>, vector<384x8xf32> -> vector<384x8xf32>
    %33 = arith.addf %28, %32 : vector<384x8xf32>
    %c96 = arith.constant 96 : index
    %c0_43 = arith.constant 0 : index
    %34 = vector.load %arg6[%c96, %c0_43] : memref<480x60xbf16, #tpu.memory_space<vmem>>, vector<384x60xbf16>
    %c4_44 = arith.constant 4 : index
    %c0_45 = arith.constant 0 : index
    %c0_46 = arith.constant 0 : index
    %35 = vector.load %arg3[%c4_44, %c0_45, %c0_46] : memref<5x60x8xbf16, #tpu.memory_space<vmem>>, vector<1x60x8xbf16>
    %36 = vector.shape_cast %35 : vector<1x60x8xbf16> to vector<60x8xbf16>
    %cst_47 = arith.constant dense<0.000000e+00> : vector<384x8xf32>
    %37 = tpu.matmul %34, %36, %cst_47 {dimension_numbers = #tpu.dot_dimension_numbers<[1], [0], [0], [1], [0, 0, 1, 1], [], []>} : vector<384x60xbf16>, vector<60x8xbf16>, vector<384x8xf32> -> vector<384x8xf32>
    %38 = arith.addf %33, %37 : vector<384x8xf32>
    %c0_48 = arith.constant 0 : index
    %c0_49 = arith.constant 0 : index
    %39 = vector.load %arg4[%c0_48, %c0_49] : memref<1x8xf32, #tpu.memory_space<vmem>>, vector<1x8xf32>
    %40 = vector.broadcast %39 : vector<1x8xf32> to vector<384x8xf32>
    %41 = arith.addf %38, %40 : vector<384x8xf32>
    %42 = vector.shape_cast %41 : vector<384x8xf32> to vector<16x24x8xf32>
    %43 = vector.extract_strided_slice %42 {offsets = [0, 0, 0], sizes = [16, 16, 8], strides = [1, 1, 1]} : vector<16x24x8xf32> to vector<16x16x8xf32>
    %cst_50 = arith.constant 0.000000e+00 : f32
    %44 = vector.broadcast %cst_50 : f32 to vector<16x16x8xf32>
    %45 = arith.maximumf %43, %44 : vector<16x16x8xf32>
    %46 = vector.shape_cast %45 : vector<16x16x8xf32> to vector<1x16x16x8xf32>
    %c0_51 = arith.constant 0 : index
    %c0_52 = arith.constant 0 : index
    %c0_53 = arith.constant 0 : index
    %c0_54 = arith.constant 0 : index
    %47 = vector.load %arg5[%c0_51, %c0_52, %c0_53, %c0_54] : memref<1x16x16x8xf32, #tpu.memory_space<vmem>>, vector<1x16x16x8xf32>
    tpu.vector_store %arg5[%c0_51, %c0_52, %c0_53, %c0_54], %46 {strides = array<i32>} : memref<1x16x16x8xf32, #tpu.memory_space<vmem>>, vector<1x16x16x8xf32>,
    return
  }
  func.func @transform_0(%arg0: i32, %arg1: i32) -> (i32, i32, i32, i32) {
    %c0_i32 = arith.constant 0 : i32
    %c0_i32_0 = arith.constant 0 : i32
    %c0_i32_1 = arith.constant 0 : i32
    return %arg0, %arg1, %c0_i32, %c0_i32_0 : i32, i32, i32, i32
  }
  func.func @transform_1(%arg0: i32, %arg1: i32) -> (i32, i32, i32) {
    %c0_i32 = arith.constant 0 : i32
    %c0_i32_0 = arith.constant 0 : i32
    %c0_i32_1 = arith.constant 0 : i32
    %c0_i32_2 = arith.constant 0 : i32
    return %c0_i32, %c0_i32_0, %c0_i32_1 : i32, i32, i32
  }
  func.func @transform_2(%arg0: i32, %arg1: i32) -> (i32, i32) {
    %c0_i32 = arith.constant 0 : i32
    %c0_i32_0 = arith.constant 0 : i32
    %c0_i32_1 = arith.constant 0 : i32
    return %c0_i32, %c0_i32_0 : i32, i32
  }
  func.func @transform_3(%arg0: i32, %arg1: i32) -> (i32, i32, i32, i32) {
    %c0_i32 = arith.constant 0 : i32
    %c0_i32_0 = arith.constant 0 : i32
    %c0_i32_1 = arith.constant 0 : i32
    return %arg0, %arg1, %c0_i32, %c0_i32_0 : i32, i32, i32, i32
  }
}

</mosaic_0001>

<llo_original>
// kernel: tpu_custom_call.1
$region0: #{tpu_custom_call.1}
  #allocation0 [shape = 'u32[]', space=smem, size = 0x4, offset = 0x4, fixed_abs, tag = 'smem constant byte address 0x4 - core index']
  #allocation1 [shape = 'u32[144,128]{1,0:T(1,128)}', space=vmem, size = 0x12000, scoped, tag = 'internal scratch']
  #allocation2 [shape = 'bf16[480,60]{1,0:T(8,128)(2,1)}', space=vmem, size = 0x1e000, scoped, tag = 'scratch operand']
  %s0 = inlined_call_operand.vmem [shape: bf16[1,1,504,12], index: 0, kind: input, shape index: {}]
  %s1 = inlined_call_operand.vmem [shape: bf16[5,60,8], index: 1, kind: input, shape index: {}]
  %s2 = inlined_call_operand.vmem [shape: f32[1,8], index: 2, kind: input, shape index: {}]
  %s3 = inlined_call_operand.vmem [shape: f32[1,16,16,8], index: 3, kind: output, shape index: {}]
  %s4 = sld [smem:[#allocation0]]
  $region22: #{tpu_custom_call.1} parent=0
    _
  %s6 = ssub.s32 1, %s4
  %s7 = scalar_select 0, %s6, %s4
  // Predicated region
  $region2: #{tpu_custom_call.1} parent=0 // pred_check
    _
  $region3: #{tpu_custom_call.1} parent=0 // pred_check_branch
    %9 = sbr.rel (0) target = $region5
  $region4: #{tpu_custom_call.1} parent=0 // pred_region
    _
  $region5: #{tpu_custom_call.1} parent=0 // pred_fallthru
    _
  // Predicated region
  $region6: #{tpu_custom_call.1} parent=0 // pred_check
    _
  $region7: #{tpu_custom_call.1} parent=0 // pred_check_branch
    %11 = sbr.rel (0) target = $region9
  $region8: #{tpu_custom_call.1} parent=0 // pred_region
    _
  $region9: #{tpu_custom_call.1} parent=0 // pred_fallthru
    _
  // Predicated region
  $region10: #{tpu_custom_call.1} parent=0 // pred_check
    _
  $region11: #{tpu_custom_call.1} parent=0 // pred_check_branch
    %13 = sbr.rel (0) target = $region13
  $region12: #{tpu_custom_call.1} parent=0 // pred_region
    _
  $region13: #{tpu_custom_call.1} parent=0 // pred_fallthru
    _
  %v15 = vld [vmem:[%s0] sm:$0xf]
  %v16 = vld [vmem:[%s0 + $0x4] sm:$0xf]
  %v17 = vld [vmem:[%s0 + $0x8] sm:$0xf]
  %v18 = vld [vmem:[%s0 + $0xc] sm:$0xf]
  %v19 = vld [vmem:[%s0 + $0x10] sm:$0xf]
  %v20 = vld [vmem:[%s0 + $0x14] sm:$0xf]
  %v21 = vld [vmem:[%s0 + $0x18] sm:$0xf]
  %v22 = vld [vmem:[%s0 + $0x1c] sm:$0xf]
  %v23 = vld [vmem:[%s0 + $0x20] sm:$0xf]
  %v24 = vld [vmem:[%s0 + $0x24] sm:$0xf]
  %v25 = vld [vmem:[%s0 + $0x28] sm:$0xf]
  %v26 = vld [vmem:[%s0 + $0x2c] sm:$0xf]
  %v27 = vld [vmem:[%s0 + $0x30] sm:$0xf]
  %v28 = vld [vmem:[%s0 + $0x34] sm:$0xf]
  %v29 = vld [vmem:[%s0 + $0x38] sm:$0xf]
  %v30 = vld [vmem:[%s0 + $0x3c] sm:$0xf]
  %v31 = vld [vmem:[%s0 + $0x40] sm:$0xf]
  %v32 = vld [vmem:[%s0 + $0x44] sm:$0xf]
  %v33 = vld [vmem:[%s0 + $0x48] sm:$0xf]
  %v34 = vld [vmem:[%s0 + $0x4c] sm:$0xf]
  %v35 = vld [vmem:[%s0 + $0x50] sm:$0xf]
  %v36 = vld [vmem:[%s0 + $0x54] sm:$0xf]
  %v37 = vld [vmem:[%s0 + $0x58] sm:$0xf]
  %v38 = vld [vmem:[%s0 + $0x5c] sm:$0xf]
  %v39 = vld [vmem:[%s0 + $0x60] sm:$0xf]
  %v40 = vld [vmem:[%s0 + $0x64] sm:$0xf]
  %v41 = vld [vmem:[%s0 + $0x68] sm:$0xf]
  %v42 = vld [vmem:[%s0 + $0x6c] sm:$0xf]
  %v43 = vld [vmem:[%s0 + $0x70] sm:$0xf]
  %v44 = vld [vmem:[%s0 + $0x74] sm:$0xf]
  %v45 = vld [vmem:[%s0 + $0x78] sm:$0xf]
  %v46 = vld [vmem:[%s0 + $0x7c] sm:$0xf]
  %v47 = vld [vmem:[%s0 + $0x80] sm:$0xf]
  %v48 = vld [vmem:[%s0 + $0x84] sm:$0xf]
  %v49 = vld [vmem:[%s0 + $0x88] sm:$0xf]
  %v50 = vld [vmem:[%s0 + $0x8c] sm:$0xf]
  %v51 = vld [vmem:[%s0 + $0x90] sm:$0xf]
  %v52 = vld [vmem:[%s0 + $0x94] sm:$0xf]
  %v53 = vld [vmem:[%s0 + $0x98] sm:$0xf]
  %v54 = vld [vmem:[%s0 + $0x9c] sm:$0xf]
  %v55 = vld [vmem:[%s0 + $0xa0] sm:$0xf]
  %v56 = vld [vmem:[%s0 + $0xa4] sm:$0xf]
  %v57 = vld [vmem:[%s0 + $0xa8] sm:$0xf]
  %v58 = vld [vmem:[%s0 + $0xac] sm:$0xf]
  %v59 = vld [vmem:[%s0 + $0xb0] sm:$0xf]
  %v60 = vld [vmem:[%s0 + $0xb4] sm:$0xf]
  %v61 = vld [vmem:[%s0 + $0xb8] sm:$0xf]
  %v62 = vld [vmem:[%s0 + $0xbc] sm:$0xf]
  %v63 = vld [vmem:[%s0 + $0xc0] sm:$0xf]
  %v64 = vld [vmem:[%s0 + $0xc4] sm:$0xf]
  %v65 = vld [vmem:[%s0 + $0xc8] sm:$0xf]
  %v66 = vld [vmem:[%s0 + $0xcc] sm:$0xf]
  %v67 = vld [vmem:[%s0 + $0xd0] sm:$0xf]
  %v68 = vld [vmem:[%s0 + $0xd4] sm:$0xf]
  %v69 = vld [vmem:[%s0 + $0xd8] sm:$0xf]
  %v70 = vld [vmem:[%s0 + $0xdc] sm:$0xf]
  %v71 = vld [vmem:[%s0 + $0xe0] sm:$0xf]
  %v72 = vld [vmem:[%s0 + $0xe4] sm:$0xf]
  %v73 = vld [vmem:[%s0 + $0xe8] sm:$0xf]
  %v74 = vld [vmem:[%s0 + $0xec] sm:$0xf]
  %vm75 = vcmask 93184
  %76 = vst.msk [vmem:[#allocation2] sm:$0xf] %vm75, %v15
  %77 = vst.msk [vmem:[#allocation2 + $0x4] sm:$0xf] %vm75, %v16
  %78 = vst.msk [vmem:[#allocation2 + $0x8] sm:$0xf] %vm75, %v17
  %79 = vst.msk [vmem:[#allocation2 + $0xc] sm:$0xf] %vm75, %v18
  %80 = vst.msk [vmem:[#allocation2 + $0x10] sm:$0xf] %vm75, %v19
  %81 = vst.msk [vmem:[#allocation2 + $0x14] sm:$0xf] %vm75, %v20
  %82 = vst.msk [vmem:[#allocation2 + $0x18] sm:$0xf] %vm75, %v21
  %83 = vst.msk [vmem:[#allocation2 + $0x1c] sm:$0xf] %vm75, %v22
  %84 = vst.msk [vmem:[#allocation2 + $0x20] sm:$0xf] %vm75, %v23
  %85 = vst.msk [vmem:[#allocation2 + $0x24] sm:$0xf] %vm75, %v24
  %86 = vst.msk [vmem:[#allocation2 + $0x28] sm:$0xf] %vm75, %v25
  %87 = vst.msk [vmem:[#allocation2 + $0x2c] sm:$0xf] %vm75, %v26
  %88 = vst.msk [vmem:[#allocation2 + $0x30] sm:$0xf] %vm75, %v27
  %89 = vst.msk [vmem:[#allocation2 + $0x34] sm:$0xf] %vm75, %v28
  %90 = vst.msk [vmem:[#allocation2 + $0x38] sm:$0xf] %vm75, %v29
  %91 = vst.msk [vmem:[#allocation2 + $0x3c] sm:$0xf] %vm75, %v30
  %92 = vst.msk [vmem:[#allocation2 + $0x40] sm:$0xf] %vm75, %v31
  %93 = vst.msk [vmem:[#allocation2 + $0x44] sm:$0xf] %vm75, %v32
  %94 = vst.msk [vmem:[#allocation2 + $0x48] sm:$0xf] %vm75, %v33
  %95 = vst.msk [vmem:[#allocation2 + $0x4c] sm:$0xf] %vm75, %v34
  %96 = vst.msk [vmem:[#allocation2 + $0x50] sm:$0xf] %vm75, %v35
  %97 = vst.msk [vmem:[#allocation2 + $0x54] sm:$0xf] %vm75, %v36
  %98 = vst.msk [vmem:[#allocation2 + $0x58] sm:$0xf] %vm75, %v37
  %99 = vst.msk [vmem:[#allocation2 + $0x5c] sm:$0xf] %vm75, %v38
  %100 = vst.msk [vmem:[#allocation2 + $0x60] sm:$0xf] %vm75, %v39
  %101 = vst.msk [vmem:[#allocation2 + $0x64] sm:$0xf] %vm75, %v40
  %102 = vst.msk [vmem:[#allocation2 + $0x68] sm:$0xf] %vm75, %v41
  %103 = vst.msk [vmem:[#allocation2 + $0x6c] sm:$0xf] %vm75, %v42
  %104 = vst.msk [vmem:[#allocation2 + $0x70] sm:$0xf] %vm75, %v43
  %105 = vst.msk [vmem:[#allocation2 + $0x74] sm:$0xf] %vm75, %v44
  %106 = vst.msk [vmem:[#allocation2 + $0x78] sm:$0xf] %vm75, %v45
  %107 = vst.msk [vmem:[#allocation2 + $0x7c] sm:$0xf] %vm75, %v46
  %108 = vst.msk [vmem:[#allocation2 + $0x80] sm:$0xf] %vm75, %v47
  %109 = vst.msk [vmem:[#allocation2 + $0x84] sm:$0xf] %vm75, %v48
  %110 = vst.msk [vmem:[#allocation2 + $0x88] sm:$0xf] %vm75, %v49
  %111 = vst.msk [vmem:[#allocation2 + $0x8c] sm:$0xf] %vm75, %v50
  %112 = vst.msk [vmem:[#allocation2 + $0x90] sm:$0xf] %vm75, %v51
  %113 = vst.msk [vmem:[#allocation2 + $0x94] sm:$0xf] %vm75, %v52
  %114 = vst.msk [vmem:[#allocation2 + $0x98] sm:$0xf] %vm75, %v53
  %115 = vst.msk [vmem:[#allocation2 + $0x9c] sm:$0xf] %vm75, %v54
  %116 = vst.msk [vmem:[#allocation2 + $0xa0] sm:$0xf] %vm75, %v55
  %117 = vst.msk [vmem:[#allocation2 + $0xa4] sm:$0xf] %vm75, %v56
  %118 = vst.msk [vmem:[#allocation2 + $0xa8] sm:$0xf] %vm75, %v57
  %119 = vst.msk [vmem:[#allocation2 + $0xac] sm:$0xf] %vm75, %v58
  %120 = vst.msk [vmem:[#allocation2 + $0xb0] sm:$0xf] %vm75, %v59
  %121 = vst.msk [vmem:[#allocation2 + $0xb4] sm:$0xf] %vm75, %v60
  %122 = vst.msk [vmem:[#allocation2 + $0xb8] sm:$0xf] %vm75, %v61
  %123 = vst.msk [vmem:[#allocation2 + $0xbc] sm:$0xf] %vm75, %v62
  %124 = vst.msk [vmem:[#allocation2 + $0xc0] sm:$0xf] %vm75, %v63
  %125 = vst.msk [vmem:[#allocation2 + $0xc4] sm:$0xf] %vm75, %v64
  %126 = vst.msk [vmem:[#allocation2 + $0xc8] sm:$0xf] %vm75, %v65
  %127 = vst.msk [vmem:[#allocation2 + $0xcc] sm:$0xf] %vm75, %v66
  %128 = vst.msk [vmem:[#allocation2 + $0xd0] sm:$0xf] %vm75, %v67
  %129 = vst.msk [vmem:[#allocation2 + $0xd4] sm:$0xf] %vm75, %v68
  %130 = vst.msk [vmem:[#allocation2 + $0xd8] sm:$0xf] %vm75, %v69
  %131 = vst.msk [vmem:[#allocation2 + $0xdc] sm:$0xf] %vm75, %v70
  %132 = vst.msk [vmem:[#allocation2 + $0xe0] sm:$0xf] %vm75, %v71
  %133 = vst.msk [vmem:[#allocation2 + $0xe4] sm:$0xf] %vm75, %v72
  %134 = vst.msk [vmem:[#allocation2 + $0xe8] sm:$0xf] %vm75, %v73
  %135 = vst.msk [vmem:[#allocation2 + $0xec] sm:$0xf] %vm75, %v74
  %v136 = vld [vmem:[%s0] sm:$0xf]
  %v137 = vld [vmem:[%s0 + $0x4] sm:$0xf]
  %v138 = vld [vmem:[%s0 + $0x8] sm:$0xf]
  %v139 = vld [vmem:[%s0 + $0xc] sm:$0xf]
  %v140 = vld [vmem:[%s0 + $0x10] sm:$0xf]
  %v141 = vld [vmem:[%s0 + $0x14] sm:$0xf]
  %v142 = vld [vmem:[%s0 + $0x18] sm:$0xf]
  %v143 = vld [vmem:[%s0 + $0x1c] sm:$0xf]
  %v144 = vld [vmem:[%s0 + $0x20] sm:$0xf]
  %v145 = vld [vmem:[%s0 + $0x24] sm:$0xf]
  %v146 = vld [vmem:[%s0 + $0x28] sm:$0xf]
  %v147 = vld [vmem:[%s0 + $0x2c] sm:$0xf]
  %v148 = vld [vmem:[%s0 + $0x30] sm:$0xf]
  %v149 = vld [vmem:[%s0 + $0x34] sm:$0xf]
  %v150 = vld [vmem:[%s0 + $0x38] sm:$0xf]
  %v151 = vld [vmem:[%s0 + $0x3c] sm:$0xf]
  %v152 = vld [vmem:[%s0 + $0x40] sm:$0xf]
  %v153 = vld [vmem:[%s0 + $0x44] sm:$0xf]
  %v154 = vld [vmem:[%s0 + $0x48] sm:$0xf]
  %v155 = vld [vmem:[%s0 + $0x4c] sm:$0xf]
  %v156 = vld [vmem:[%s0 + $0x50] sm:$0xf]
  %v157 = vld [vmem:[%s0 + $0x54] sm:$0xf]
  %v158 = vld [vmem:[%s0 + $0x58] sm:$0xf]
  %v159 = vld [vmem:[%s0 + $0x5c] sm:$0xf]
  %v160 = vld [vmem:[%s0 + $0x60] sm:$0xf]
  %v161 = vld [vmem:[%s0 + $0x64] sm:$0xf]
  %v162 = vld [vmem:[%s0 + $0x68] sm:$0xf]
  %v163 = vld [vmem:[%s0 + $0x6c] sm:$0xf]
  %v164 = vld [vmem:[%s0 + $0x70] sm:$0xf]
  %v165 = vld [vmem:[%s0 + $0x74] sm:$0xf]
  %v166 = vld [vmem:[%s0 + $0x78] sm:$0xf]
  %v167 = vld [vmem:[%s0 + $0x7c] sm:$0xf]
  %v168 = vld [vmem:[%s0 + $0x80] sm:$0xf]
  %v169 = vld [vmem:[%s0 + $0x84] sm:$0xf]
  %v170 = vld [vmem:[%s0 + $0x88] sm:$0xf]
  %v171 = vld [vmem:[%s0 + $0x8c] sm:$0xf]
  %v172 = vld [vmem:[%s0 + $0x90] sm:$0xf]
  %v173 = vld [vmem:[%s0 + $0x94] sm:$0xf]
  %v174 = vld [vmem:[%s0 + $0x98] sm:$0xf]
  %v175 = vld [vmem:[%s0 + $0x9c] sm:$0xf]
  %v176 = vld [vmem:[%s0 + $0xa0] sm:$0xf]
  %v177 = vld [vmem:[%s0 + $0xa4] sm:$0xf]
  %v178 = vld [vmem:[%s0 + $0xa8] sm:$0xf]
  %v179 = vld [vmem:[%s0 + $0xac] sm:$0xf]
  %v180 = vld [vmem:[%s0 + $0xb0] sm:$0xf]
  %v181 = vld [vmem:[%s0 + $0xb4] sm:$0xf]
  %v182 = vld [vmem:[%s0 + $0xb8] sm:$0xf]
  %v183 = vld [vmem:[%s0 + $0xbc] sm:$0xf]
  %v184 = vld [vmem:[%s0 + $0xc0] sm:$0xf]
  %v185 = vld [vmem:[%s0 + $0xc4] sm:$0xf]
  %v186 = vld [vmem:[%s0 + $0xc8] sm:$0xf]
  %v187 = vld [vmem:[%s0 + $0xcc] sm:$0xf]
  %v188 = vld [vmem:[%s0 + $0xd0] sm:$0xf]
  %v189 = vld [vmem:[%s0 + $0xd4] sm:$0xf]
  %v190 = vld [vmem:[%s0 + $0xd8] sm:$0xf]
  %v191 = vld [vmem:[%s0 + $0xdc] sm:$0xf]
  %v192 = vld [vmem:[%s0 + $0xe0] sm:$0xf]
  %v193 = vld [vmem:[%s0 + $0xe4] sm:$0xf]
  %v194 = vld [vmem:[%s0 + $0xe8] sm:$0xf]
  %v195 = vld [vmem:[%s0 + $0xec] sm:$0xf]
  %v196 = vld [vmem:[%s0 + $0xf0] sm:$0x1]
  %vm197 = vsmask.f32 3328
  %vm198 = vsmask.f32 7440
  %vm199 = vmor %vm197, %vm198
  %v201 = vshrl.u32 %v136, 16
  %v203 = vrot.slane %v201, 4
  %v204 = vshll.u32 %v136, 16
  %v206 = vrot.slane %v204, 5
  %v207 = vor.u32 %v203, %v206
  %v208 = vrot.slane %v207, 4
  %v210 = vshll.u32 %v137, 16
  %v212 = vrot.slane %v210, 5
  %v213 = vsel %vm199, %v208, %v212
  %v214 = vshrl.u32 %v137, 16
  %v216 = vrot.slane %v214, 4
  %v217 = vor.u32 %v216, %v212
  %v218 = vrot.slane %v217, 4
  %v220 = vshll.u32 %v138, 16
  %v222 = vrot.slane %v220, 5
  %v223 = vsel %vm199, %v218, %v222
  %v224 = vshrl.u32 %v138, 16
  %v226 = vrot.slane %v224, 4
  %v227 = vor.u32 %v226, %v222
  %v228 = vrot.slane %v227, 4
  %v230 = vshll.u32 %v139, 16
  %v232 = vrot.slane %v230, 5
  %v233 = vsel %vm199, %v228, %v232
  %v234 = vshrl.u32 %v139, 16
  %v236 = vrot.slane %v234, 4
  %v237 = vor.u32 %v236, %v232
  %v238 = vrot.slane %v237, 4
  %v240 = vshll.u32 %v140, 16
  %v242 = vrot.slane %v240, 5
  %v243 = vsel %vm199, %v238, %v242
  %v244 = vshrl.u32 %v140, 16
  %v246 = vrot.slane %v244, 4
  %v247 = vor.u32 %v246, %v242
  %v248 = vrot.slane %v247, 4
  %v250 = vshll.u32 %v141, 16
  %v252 = vrot.slane %v250, 5
  %v253 = vsel %vm199, %v248, %v252
  %v254 = vshrl.u32 %v141, 16
  %v256 = vrot.slane %v254, 4
  %v257 = vor.u32 %v256, %v252
  %v258 = vrot.slane %v257, 4
  %v260 = vshll.u32 %v142, 16
  %v262 = vrot.slane %v260, 5
  %v263 = vsel %vm199, %v258, %v262
  %v264 = vshrl.u32 %v142, 16
  %v266 = vrot.slane %v264, 4
  %v267 = vor.u32 %v266, %v262
  %v268 = vrot.slane %v267, 4
  %v270 = vshll.u32 %v143, 16
  %v272 = vrot.slane %v270, 5
  %v273 = vsel %vm199, %v268, %v272
  %v274 = vshrl.u32 %v143, 16
  %v276 = vrot.slane %v274, 4
  %v277 = vor.u32 %v276, %v272
  %v278 = vrot.slane %v277, 4
  %v280 = vshll.u32 %v144, 16
  %v282 = vrot.slane %v280, 5
  %v283 = vsel %vm199, %v278, %v282
  %v284 = vshrl.u32 %v144, 16
  %v286 = vrot.slane %v284, 4
  %v287 = vor.u32 %v286, %v282
  %v288 = vrot.slane %v287, 4
  %v290 = vshll.u32 %v145, 16
  %v292 = vrot.slane %v290, 5
  %v293 = vsel %vm199, %v288, %v292
  %v294 = vshrl.u32 %v145, 16
  %v296 = vrot.slane %v294, 4
  %v297 = vor.u32 %v296, %v292
  %v298 = vrot.slane %v297, 4
  %v300 = vshll.u32 %v146, 16
  %v302 = vrot.slane %v300, 5
  %v303 = vsel %vm199, %v298, %v302
  %v304 = vshrl.u32 %v146, 16
  %v306 = vrot.slane %v304, 4
  %v307 = vor.u32 %v306, %v302
  %v308 = vrot.slane %v307, 4
  %v310 = vshll.u32 %v147, 16
  %v312 = vrot.slane %v310, 5
  %v313 = vsel %vm199, %v308, %v312
  %v314 = vshrl.u32 %v147, 16
  %v316 = vrot.slane %v314, 4
  %v317 = vor.u32 %v316, %v312
  %v318 = vrot.slane %v317, 4
  %v320 = vshll.u32 %v148, 16
  %v322 = vrot.slane %v320, 5
  %v323 = vsel %vm199, %v318, %v322
  %v324 = vshrl.u32 %v148, 16
  %v326 = vrot.slane %v324, 4
  %v327 = vor.u32 %v326, %v322
  %v328 = vrot.slane %v327, 4
  %v330 = vshll.u32 %v149, 16
  %v332 = vrot.slane %v330, 5
  %v333 = vsel %vm199, %v328, %v332
  %v334 = vshrl.u32 %v149, 16
  %v336 = vrot.slane %v334, 4
  %v337 = vor.u32 %v336, %v332
  %v338 = vrot.slane %v337, 4
  %v340 = vshll.u32 %v150, 16
  %v342 = vrot.slane %v340, 5
  %v343 = vsel %vm199, %v338, %v342
  %v344 = vshrl.u32 %v150, 16
  %v346 = vrot.slane %v344, 4
  %v347 = vor.u32 %v346, %v342
  %v348 = vrot.slane %v347, 4
  %v350 = vshll.u32 %v151, 16
  %v352 = vrot.slane %v350, 5
  %v353 = vsel %vm199, %v348, %v352
  %v354 = vshrl.u32 %v151, 16
  %v356 = vrot.slane %v354, 4
  %v357 = vor.u32 %v356, %v352
  %v358 = vrot.slane %v357, 4
  %v360 = vshll.u32 %v152, 16
  %v362 = vrot.slane %v360, 5
  %v363 = vsel %vm199, %v358, %v362
  %v364 = vshrl.u32 %v152, 16
  %v366 = vrot.slane %v364, 4
  %v367 = vor.u32 %v366, %v362
  %v368 = vrot.slane %v367, 4
  %v370 = vshll.u32 %v153, 16
  %v372 = vrot.slane %v370, 5
  %v373 = vsel %vm199, %v368, %v372
  %v374 = vshrl.u32 %v153, 16
  %v376 = vrot.slane %v374, 4
  %v377 = vor.u32 %v376, %v372
  %v378 = vrot.slane %v377, 4
  %v380 = vshll.u32 %v154, 16
  %v382 = vrot.slane %v380, 5
  %v383 = vsel %vm199, %v378, %v382
  %v384 = vshrl.u32 %v154, 16
  %v386 = vrot.slane %v384, 4
  %v387 = vor.u32 %v386, %v382
  %v388 = vrot.slane %v387, 4
  %v390 = vshll.u32 %v155, 16
  %v392 = vrot.slane %v390, 5
  %v393 = vsel %vm199, %v388, %v392
  %v394 = vshrl.u32 %v155, 16
  %v396 = vrot.slane %v394, 4
  %v397 = vor.u32 %v396, %v392
  %v398 = vrot.slane %v397, 4
  %v400 = vshll.u32 %v156, 16
  %v402 = vrot.slane %v400, 5
  %v403 = vsel %vm199, %v398, %v402
  %v404 = vshrl.u32 %v156, 16
  %v406 = vrot.slane %v404, 4
  %v407 = vor.u32 %v406, %v402
  %v408 = vrot.slane %v407, 4
  %v410 = vshll.u32 %v157, 16
  %v412 = vrot.slane %v410, 5
  %v413 = vsel %vm199, %v408, %v412
  %v414 = vshrl.u32 %v157, 16
  %v416 = vrot.slane %v414, 4
  %v417 = vor.u32 %v416, %v412
  %v418 = vrot.slane %v417, 4
  %v420 = vshll.u32 %v158, 16
  %v422 = vrot.slane %v420, 5
  %v423 = vsel %vm199, %v418, %v422
  %v424 = vshrl.u32 %v158, 16
  %v426 = vrot.slane %v424, 4
  %v427 = vor.u32 %v426, %v422
  %v428 = vrot.slane %v427, 4
  %v430 = vshll.u32 %v159, 16
  %v432 = vrot.slane %v430, 5
  %v433 = vsel %vm199, %v428, %v432
  %v434 = vshrl.u32 %v159, 16
  %v436 = vrot.slane %v434, 4
  %v437 = vor.u32 %v436, %v432
  %v438 = vrot.slane %v437, 4
  %v440 = vshll.u32 %v160, 16
  %v442 = vrot.slane %v440, 5
  %v443 = vsel %vm199, %v438, %v442
  %v444 = vshrl.u32 %v160, 16
  %v446 = vrot.slane %v444, 4
  %v447 = vor.u32 %v446, %v442
  %v448 = vrot.slane %v447, 4
  %v450 = vshll.u32 %v161, 16
  %v452 = vrot.slane %v450, 5
  %v453 = vsel %vm199, %v448, %v452
  %v454 = vshrl.u32 %v161, 16
  %v456 = vrot.slane %v454, 4
  %v457 = vor.u32 %v456, %v452
  %v458 = vrot.slane %v457, 4
  %v460 = vshll.u32 %v162, 16
  %v462 = vrot.slane %v460, 5
  %v463 = vsel %vm199, %v458, %v462
  %v464 = vshrl.u32 %v162, 16
  %v466 = vrot.slane %v464, 4
  %v467 = vor.u32 %v466, %v462
  %v468 = vrot.slane %v467, 4
  %v470 = vshll.u32 %v163, 16
  %v472 = vrot.slane %v470, 5
  %v473 = vsel %vm199, %v468, %v472
  %v474 = vshrl.u32 %v163, 16
  %v476 = vrot.slane %v474, 4
  %v477 = vor.u32 %v476, %v472
  %v478 = vrot.slane %v477, 4
  %v480 = vshll.u32 %v164, 16
  %v482 = vrot.slane %v480, 5
  %v483 = vsel %vm199, %v478, %v482
  %v484 = vshrl.u32 %v164, 16
  %v486 = vrot.slane %v484, 4
  %v487 = vor.u32 %v486, %v482
  %v488 = vrot.slane %v487, 4
  %v490 = vshll.u32 %v165, 16
  %v492 = vrot.slane %v490, 5
  %v493 = vsel %vm199, %v488, %v492
  %v494 = vshrl.u32 %v165, 16
  %v496 = vrot.slane %v494, 4
  %v497 = vor.u32 %v496, %v492
  %v498 = vrot.slane %v497, 4
  %v500 = vshll.u32 %v166, 16
  %v502 = vrot.slane %v500, 5
  %v503 = vsel %vm199, %v498, %v502
  %v504 = vshrl.u32 %v166, 16
  %v506 = vrot.slane %v504, 4
  %v507 = vor.u32 %v506, %v502
  %v508 = vrot.slane %v507, 4
  %v510 = vshll.u32 %v167, 16
  %v512 = vrot.slane %v510, 5
  %v513 = vsel %vm199, %v508, %v512
  %v514 = vshrl.u32 %v167, 16
  %v516 = vrot.slane %v514, 4
  %v517 = vor.u32 %v516, %v512
  %v518 = vrot.slane %v517, 4
  %v520 = vshll.u32 %v168, 16
  %v522 = vrot.slane %v520, 5
  %v523 = vsel %vm199, %v518, %v522
  %v524 = vshrl.u32 %v168, 16
  %v526 = vrot.slane %v524, 4
  %v527 = vor.u32 %v526, %v522
  %v528 = vrot.slane %v527, 4
  %v530 = vshll.u32 %v169, 16
  %v532 = vrot.slane %v530, 5
  %v533 = vsel %vm199, %v528, %v532
  %v534 = vshrl.u32 %v169, 16
  %v536 = vrot.slane %v534, 4
  %v537 = vor.u32 %v536, %v532
  %v538 = vrot.slane %v537, 4
  %v540 = vshll.u32 %v170, 16
  %v542 = vrot.slane %v540, 5
  %v543 = vsel %vm199, %v538, %v542
  %v544 = vshrl.u32 %v170, 16
  %v546 = vrot.slane %v544, 4
  %v547 = vor.u32 %v546, %v542
  %v548 = vrot.slane %v547, 4
  %v550 = vshll.u32 %v171, 16
  %v552 = vrot.slane %v550, 5
  %v553 = vsel %vm199, %v548, %v552
  %v554 = vshrl.u32 %v171, 16
  %v556 = vrot.slane %v554, 4
  %v557 = vor.u32 %v556, %v552
  %v558 = vrot.slane %v557, 4
  %v560 = vshll.u32 %v172, 16
  %v562 = vrot.slane %v560, 5
  %v563 = vsel %vm199, %v558, %v562
  %v564 = vshrl.u32 %v172, 16
  %v566 = vrot.slane %v564, 4
  %v567 = vor.u32 %v566, %v562
  %v568 = vrot.slane %v567, 4
  %v570 = vshll.u32 %v173, 16
  %v572 = vrot.slane %v570, 5
  %v573 = vsel %vm199, %v568, %v572
  %v574 = vshrl.u32 %v173, 16
  %v576 = vrot.slane %v574, 4
  %v577 = vor.u32 %v576, %v572
  %v578 = vrot.slane %v577, 4
  %v580 = vshll.u32 %v174, 16
  %v582 = vrot.slane %v580, 5
  %v583 = vsel %vm199, %v578, %v582
  %v584 = vshrl.u32 %v174, 16
  %v586 = vrot.slane %v584, 4
  %v587 = vor.u32 %v586, %v582
  %v588 = vrot.slane %v587, 4
  %v590 = vshll.u32 %v175, 16
  %v592 = vrot.slane %v590, 5
  %v593 = vsel %vm199, %v588, %v592
  %v594 = vshrl.u32 %v175, 16
  %v596 = vrot.slane %v594, 4
  %v597 = vor.u32 %v596, %v592
  %v598 = vrot.slane %v597, 4
  %v600 = vshll.u32 %v176, 16
  %v602 = vrot.slane %v600, 5
  %v603 = vsel %vm199, %v598, %v602
  %v604 = vshrl.u32 %v176, 16
  %v606 = vrot.slane %v604, 4
  %v607 = vor.u32 %v606, %v602
  %v608 = vrot.slane %v607, 4
  %v610 = vshll.u32 %v177, 16
  %v612 = vrot.slane %v610, 5
  %v613 = vsel %vm199, %v608, %v612
  %v614 = vshrl.u32 %v177, 16
  %v616 = vrot.slane %v614, 4
  %v617 = vor.u32 %v616, %v612
  %v618 = vrot.slane %v617, 4
  %v620 = vshll.u32 %v178, 16
  %v622 = vrot.slane %v620, 5
  %v623 = vsel %vm199, %v618, %v622
  %v624 = vshrl.u32 %v178, 16
  %v626 = vrot.slane %v624, 4
  %v627 = vor.u32 %v626, %v622
  %v628 = vrot.slane %v627, 4
  %v630 = vshll.u32 %v179, 16
  %v632 = vrot.slane %v630, 5
  %v633 = vsel %vm199, %v628, %v632
  %v634 = vshrl.u32 %v179, 16
  %v636 = vrot.slane %v634, 4
  %v637 = vor.u32 %v636, %v632
  %v638 = vrot.slane %v637, 4
  %v640 = vshll.u32 %v180, 16
  %v642 = vrot.slane %v640, 5
  %v643 = vsel %vm199, %v638, %v642
  %v644 = vshrl.u32 %v180, 16
  %v646 = vrot.slane %v644, 4
  %v647 = vor.u32 %v646, %v642
  %v648 = vrot.slane %v647, 4
  %v650 = vshll.u32 %v181, 16
  %v652 = vrot.slane %v650, 5
  %v653 = vsel %vm199, %v648, %v652
  %v654 = vshrl.u32 %v181, 16
  %v656 = vrot.slane %v654, 4
  %v657 = vor.u32 %v656, %v652
  %v658 = vrot.slane %v657, 4
  %v660 = vshll.u32 %v182, 16
  %v662 = vrot.slane %v660, 5
  %v663 = vsel %vm199, %v658, %v662
  %v664 = vshrl.u32 %v182, 16
  %v666 = vrot.slane %v664, 4
  %v667 = vor.u32 %v666, %v662
  %v668 = vrot.slane %v667, 4
  %v670 = vshll.u32 %v183, 16
  %v672 = vrot.slane %v670, 5
  %v673 = vsel %vm199, %v668, %v672
  %v674 = vshrl.u32 %v183, 16
  %v676 = vrot.slane %v674, 4
  %v677 = vor.u32 %v676, %v672
  %v678 = vrot.slane %v677, 4
  %v680 = vshll.u32 %v184, 16
  %v682 = vrot.slane %v680, 5
  %v683 = vsel %vm199, %v678, %v682
  %v684 = vshrl.u32 %v184, 16
  %v686 = vrot.slane %v684, 4
  %v687 = vor.u32 %v686, %v682
  %v688 = vrot.slane %v687, 4
  %v690 = vshll.u32 %v185, 16
  %v692 = vrot.slane %v690, 5
  %v693 = vsel %vm199, %v688, %v692
  %v694 = vshrl.u32 %v185, 16
  %v696 = vrot.slane %v694, 4
  %v697 = vor.u32 %v696, %v692
  %v698 = vrot.slane %v697, 4
  %v700 = vshll.u32 %v186, 16
  %v702 = vrot.slane %v700, 5
  %v703 = vsel %vm199, %v698, %v702
  %v704 = vshrl.u32 %v186, 16
  %v706 = vrot.slane %v704, 4
  %v707 = vor.u32 %v706, %v702
  %v708 = vrot.slane %v707, 4
  %v710 = vshll.u32 %v187, 16
  %v712 = vrot.slane %v710, 5
  %v713 = vsel %vm199, %v708, %v712
  %v714 = vshrl.u32 %v187, 16
  %v716 = vrot.slane %v714, 4
  %v717 = vor.u32 %v716, %v712
  %v718 = vrot.slane %v717, 4
  %v720 = vshll.u32 %v188, 16
  %v722 = vrot.slane %v720, 5
  %v723 = vsel %vm199, %v718, %v722
  %v724 = vshrl.u32 %v188, 16
  %v726 = vrot.slane %v724, 4
  %v727 = vor.u32 %v726, %v722
  %v728 = vrot.slane %v727, 4
  %v730 = vshll.u32 %v189, 16
  %v732 = vrot.slane %v730, 5
  %v733 = vsel %vm199, %v728, %v732
  %v734 = vshrl.u32 %v189, 16
  %v736 = vrot.slane %v734, 4
  %v737 = vor.u32 %v736, %v732
  %v738 = vrot.slane %v737, 4
  %v740 = vshll.u32 %v190, 16
  %v742 = vrot.slane %v740, 5
  %v743 = vsel %vm199, %v738, %v742
  %v744 = vshrl.u32 %v190, 16
  %v746 = vrot.slane %v744, 4
  %v747 = vor.u32 %v746, %v742
  %v748 = vrot.slane %v747, 4
  %v750 = vshll.u32 %v191, 16
  %v752 = vrot.slane %v750, 5
  %v753 = vsel %vm199, %v748, %v752
  %v754 = vshrl.u32 %v191, 16
  %v756 = vrot.slane %v754, 4
  %v757 = vor.u32 %v756, %v752
  %v758 = vrot.slane %v757, 4
  %v760 = vshll.u32 %v192, 16
  %v762 = vrot.slane %v760, 5
  %v763 = vsel %vm199, %v758, %v762
  %v764 = vshrl.u32 %v192, 16
  %v766 = vrot.slane %v764, 4
  %v767 = vor.u32 %v766, %v762
  %v768 = vrot.slane %v767, 4
  %v770 = vshll.u32 %v193, 16
  %v772 = vrot.slane %v770, 5
  %v773 = vsel %vm199, %v768, %v772
  %v774 = vshrl.u32 %v193, 16
  %v776 = vrot.slane %v774, 4
  %v777 = vor.u32 %v776, %v772
  %v778 = vrot.slane %v777, 4
  %v780 = vshll.u32 %v194, 16
  %v782 = vrot.slane %v780, 5
  %v783 = vsel %vm199, %v778, %v782
  %v784 = vshrl.u32 %v194, 16
  %v786 = vrot.slane %v784, 4
  %v787 = vor.u32 %v786, %v782
  %v788 = vrot.slane %v787, 4
  %v790 = vshll.u32 %v195, 16
  %v792 = vrot.slane %v790, 5
  %v793 = vsel %vm199, %v788, %v792
  %v794 = vshrl.u32 %v195, 16
  %v796 = vrot.slane %v794, 4
  %v797 = vor.u32 %v796, %v792
  %v798 = vrot.slane %v797, 4
  %v800 = vshll.u32 %v196, 16
  %v802 = vrot.slane %v800, 5
  %v803 = vsel %vm199, %v798, %v802
  %804 = vrot.lane.b32.xlu0 %v213, 12
  %v805 = vpop.permute.xlu0 %804
  %806 = vrot.lane.b32.xlu0 %v223, 12
  %v807 = vpop.permute.xlu0 %806
  %808 = vrot.lane.b32.xlu0 %v233, 12
  %v809 = vpop.permute.xlu0 %808
  %810 = vrot.lane.b32.xlu0 %v243, 12
  %v811 = vpop.permute.xlu0 %810
  %812 = vrot.lane.b32.xlu0 %v253, 12
  %v813 = vpop.permute.xlu0 %812
  %814 = vrot.lane.b32.xlu0 %v263, 12
  %v815 = vpop.permute.xlu0 %814
  %816 = vrot.lane.b32.xlu0 %v273, 12
  %v817 = vpop.permute.xlu0 %816
  %818 = vrot.lane.b32.xlu0 %v283, 12
  %v819 = vpop.permute.xlu0 %818
  %820 = vrot.lane.b32.xlu0 %v293, 12
  %v821 = vpop.permute.xlu0 %820
  %822 = vrot.lane.b32.xlu0 %v303, 12
  %v823 = vpop.permute.xlu0 %822
  %824 = vrot.lane.b32.xlu0 %v313, 12
  %v825 = vpop.permute.xlu0 %824
  %826 = vrot.lane.b32.xlu0 %v323, 12
  %v827 = vpop.permute.xlu0 %826
  %828 = vrot.lane.b32.xlu0 %v333, 12
  %v829 = vpop.permute.xlu0 %828
  %830 = vrot.lane.b32.xlu0 %v343, 12
  %v831 = vpop.permute.xlu0 %830
  %832 = vrot.lane.b32.xlu0 %v353, 12
  %v833 = vpop.permute.xlu0 %832
  %834 = vrot.lane.b32.xlu0 %v363, 12
  %v835 = vpop.permute.xlu0 %834
  %836 = vrot.lane.b32.xlu0 %v373, 12
  %v837 = vpop.permute.xlu0 %836
  %838 = vrot.lane.b32.xlu0 %v383, 12
  %v839 = vpop.permute.xlu0 %838
  %840 = vrot.lane.b32.xlu0 %v393, 12
  %v841 = vpop.permute.xlu0 %840
  %842 = vrot.lane.b32.xlu0 %v403, 12
  %v843 = vpop.permute.xlu0 %842
  %844 = vrot.lane.b32.xlu0 %v413, 12
  %v845 = vpop.permute.xlu0 %844
  %846 = vrot.lane.b32.xlu0 %v423, 12
  %v847 = vpop.permute.xlu0 %846
  %848 = vrot.lane.b32.xlu0 %v433, 12
  %v849 = vpop.permute.xlu0 %848
  %850 = vrot.lane.b32.xlu0 %v443, 12
  %v851 = vpop.permute.xlu0 %850
  %852 = vrot.lane.b32.xlu0 %v453, 12
  %v853 = vpop.permute.xlu0 %852
  %854 = vrot.lane.b32.xlu0 %v463, 12
  %v855 = vpop.permute.xlu0 %854
  %856 = vrot.lane.b32.xlu0 %v473, 12
  %v857 = vpop.permute.xlu0 %856
  %858 = vrot.lane.b32.xlu0 %v483, 12
  %v859 = vpop.permute.xlu0 %858
  %860 = vrot.lane.b32.xlu0 %v493, 12
  %v861 = vpop.permute.xlu0 %860
  %862 = vrot.lane.b32.xlu0 %v503, 12
  %v863 = vpop.permute.xlu0 %862
  %864 = vrot.lane.b32.xlu0 %v513, 12
  %v865 = vpop.permute.xlu0 %864
  %866 = vrot.lane.b32.xlu0 %v523, 12
  %v867 = vpop.permute.xlu0 %866
  %868 = vrot.lane.b32.xlu0 %v533, 12
  %v869 = vpop.permute.xlu0 %868
  %870 = vrot.lane.b32.xlu0 %v543, 12
  %v871 = vpop.permute.xlu0 %870
  %872 = vrot.lane.b32.xlu0 %v553, 12
  %v873 = vpop.permute.xlu0 %872
  %874 = vrot.lane.b32.xlu0 %v563, 12
  %v875 = vpop.permute.xlu0 %874
  %876 = vrot.lane.b32.xlu0 %v573, 12
  %v877 = vpop.permute.xlu0 %876
  %878 = vrot.lane.b32.xlu0 %v583, 12
  %v879 = vpop.permute.xlu0 %878
  %880 = vrot.lane.b32.xlu0 %v593, 12
  %v881 = vpop.permute.xlu0 %880
  %882 = vrot.lane.b32.xlu0 %v603, 12
  %v883 = vpop.permute.xlu0 %882
  %884 = vrot.lane.b32.xlu0 %v613, 12
  %v885 = vpop.permute.xlu0 %884
  %886 = vrot.lane.b32.xlu0 %v623, 12
  %v887 = vpop.permute.xlu0 %886
  %888 = vrot.lane.b32.xlu0 %v633, 12
  %v889 = vpop.permute.xlu0 %888
  %890 = vrot.lane.b32.xlu0 %v643, 12
  %v891 = vpop.permute.xlu0 %890
  %892 = vrot.lane.b32.xlu0 %v653, 12
  %v893 = vpop.permute.xlu0 %892
  %894 = vrot.lane.b32.xlu0 %v663, 12
  %v895 = vpop.permute.xlu0 %894
  %896 = vrot.lane.b32.xlu0 %v673, 12
  %v897 = vpop.permute.xlu0 %896
  %898 = vrot.lane.b32.xlu0 %v683, 12
  %v899 = vpop.permute.xlu0 %898
  %900 = vrot.lane.b32.xlu0 %v693, 12
  %v901 = vpop.permute.xlu0 %900
  %902 = vrot.lane.b32.xlu0 %v703, 12
  %v903 = vpop.permute.xlu0 %902
  %904 = vrot.lane.b32.xlu0 %v713, 12
  %v905 = vpop.permute.xlu0 %904
  %906 = vrot.lane.b32.xlu0 %v723, 12
  %v907 = vpop.permute.xlu0 %906
  %908 = vrot.lane.b32.xlu0 %v733, 12
  %v909 = vpop.permute.xlu0 %908
  %910 = vrot.lane.b32.xlu0 %v743, 12
  %v911 = vpop.permute.xlu0 %910
  %912 = vrot.lane.b32.xlu0 %v753, 12
  %v913 = vpop.permute.xlu0 %912
  %914 = vrot.lane.b32.xlu0 %v763, 12
  %v915 = vpop.permute.xlu0 %914
  %916 = vrot.lane.b32.xlu0 %v773, 12
  %v917 = vpop.permute.xlu0 %916
  %918 = vrot.lane.b32.xlu0 %v783, 12
  %v919 = vpop.permute.xlu0 %918
  %920 = vrot.lane.b32.xlu0 %v793, 12
  %v921 = vpop.permute.xlu0 %920
  %922 = vrot.lane.b32.xlu0 %v803, 12
  %v923 = vpop.permute.xlu0 %922
  %vm984 = vcmask 191584
  %985 = vst.msk [vmem:[#allocation2] sm:$0xf] %vm984, %v805
  %986 = vst.msk [vmem:[#allocation2 + $0x4] sm:$0xf] %vm984, %v807
  %987 = vst.msk [vmem:[#allocation2 + $0x8] sm:$0xf] %vm984, %v809
  %988 = vst.msk [vmem:[#allocation2 + $0xc] sm:$0xf] %vm984, %v811
  %989 = vst.msk [vmem:[#allocation2 + $0x10] sm:$0xf] %vm984, %v813
  %990 = vst.msk [vmem:[#allocation2 + $0x14] sm:$0xf] %vm984, %v815
  %991 = vst.msk [vmem:[#allocation2 + $0x18] sm:$0xf] %vm984, %v817
  %992 = vst.msk [vmem:[#allocation2 + $0x1c] sm:$0xf] %vm984, %v819
  %993 = vst.msk [vmem:[#allocation2 + $0x20] sm:$0xf] %vm984, %v821
  %994 = vst.msk [vmem:[#allocation2 + $0x24] sm:$0xf] %vm984, %v823
  %995 = vst.msk [vmem:[#allocation2 + $0x28] sm:$0xf] %vm984, %v825
  %996 = vst.msk [vmem:[#allocation2 + $0x2c] sm:$0xf] %vm984, %v827
  %997 = vst.msk [vmem:[#allocation2 + $0x30] sm:$0xf] %vm984, %v829
  %998 = vst.msk [vmem:[#allocation2 + $0x34] sm:$0xf] %vm984, %v831
  %999 = vst.msk [vmem:[#allocation2 + $0x38] sm:$0xf] %vm984, %v833
  %1000 = vst.msk [vmem:[#allocation2 + $0x3c] sm:$0xf] %vm984, %v835
  %1001 = vst.msk [vmem:[#allocation2 + $0x40] sm:$0xf] %vm984, %v837
  %1002 = vst.msk [vmem:[#allocation2 + $0x44] sm:$0xf] %vm984, %v839
  %1003 = vst.msk [vmem:[#allocation2 + $0x48] sm:$0xf] %vm984, %v841
  %1004 = vst.msk [vmem:[#allocation2 + $0x4c] sm:$0xf] %vm984, %v843
  %1005 = vst.msk [vmem:[#allocation2 + $0x50] sm:$0xf] %vm984, %v845
  %1006 = vst.msk [vmem:[#allocation2 + $0x54] sm:$0xf] %vm984, %v847
  %1007 = vst.msk [vmem:[#allocation2 + $0x58] sm:$0xf] %vm984, %v849
  %1008 = vst.msk [vmem:[#allocation2 + $0x5c] sm:$0xf] %vm984, %v851
  %1009 = vst.msk [vmem:[#allocation2 + $0x60] sm:$0xf] %vm984, %v853
  %1010 = vst.msk [vmem:[#allocation2 + $0x64] sm:$0xf] %vm984, %v855
  %1011 = vst.msk [vmem:[#allocation2 + $0x68] sm:$0xf] %vm984, %v857
  %1012 = vst.msk [vmem:[#allocation2 + $0x6c] sm:$0xf] %vm984, %v859
  %1013 = vst.msk [vmem:[#allocation2 + $0x70] sm:$0xf] %vm984, %v861
  %1014 = vst.msk [vmem:[#allocation2 + $0x74] sm:$0xf] %vm984, %v863
  %1015 = vst.msk [vmem:[#allocation2 + $0x78] sm:$0xf] %vm984, %v865
  %1016 = vst.msk [vmem:[#allocation2 + $0x7c] sm:$0xf] %vm984, %v867
  %1017 = vst.msk [vmem:[#allocation2 + $0x80] sm:$0xf] %vm984, %v869
  %1018 = vst.msk [vmem:[#allocation2 + $0x84] sm:$0xf] %vm984, %v871
  %1019 = vst.msk [vmem:[#allocation2 + $0x88] sm:$0xf] %vm984, %v873
  %1020 = vst.msk [vmem:[#allocation2 + $0x8c] sm:$0xf] %vm984, %v875
  %1021 = vst.msk [vmem:[#allocation2 + $0x90] sm:$0xf] %vm984, %v877
  %1022 = vst.msk [vmem:[#allocation2 + $0x94] sm:$0xf] %vm984, %v879
  %1023 = vst.msk [vmem:[#allocation2 + $0x98] sm:$0xf] %vm984, %v881
  %1024 = vst.msk [vmem:[#allocation2 + $0x9c] sm:$0xf] %vm984, %v883
  %1025 = vst.msk [vmem:[#allocation2 + $0xa0] sm:$0xf] %vm984, %v885
  %1026 = vst.msk [vmem:[#allocation2 + $0xa4] sm:$0xf] %vm984, %v887
  %1027 = vst.msk [vmem:[#allocation2 + $0xa8] sm:$0xf] %vm984, %v889
  %1028 = vst.msk [vmem:[#allocation2 + $0xac] sm:$0xf] %vm984, %v891
  %1029 = vst.msk [vmem:[#allocation2 + $0xb0] sm:$0xf] %vm984, %v893
  %1030 = vst.msk [vmem:[#allocation2 + $0xb4] sm:$0xf] %vm984, %v895
  %1031 = vst.msk [vmem:[#allocation2 + $0xb8] sm:$0xf] %vm984, %v897
  %1032 = vst.msk [vmem:[#allocation2 + $0xbc] sm:$0xf] %vm984, %v899
  %1033 = vst.msk [vmem:[#allocation2 + $0xc0] sm:$0xf] %vm984, %v901
  %1034 = vst.msk [vmem:[#allocation2 + $0xc4] sm:$0xf] %vm984, %v903
  %1035 = vst.msk [vmem:[#allocation2 + $0xc8] sm:$0xf] %vm984, %v905
  %1036 = vst.msk [vmem:[#allocation2 + $0xcc] sm:$0xf] %vm984, %v907
  %1037 = vst.msk [vmem:[#allocation2 + $0xd0] sm:$0xf] %vm984, %v909
  %1038 = vst.msk [vmem:[#allocation2 + $0xd4] sm:$0xf] %vm984, %v911
  %1039 = vst.msk [vmem:[#allocation2 + $0xd8] sm:$0xf] %vm984, %v913
  %1040 = vst.msk [vmem:[#allocation2 + $0xdc] sm:$0xf] %vm984, %v915
  %1041 = vst.msk [vmem:[#allocation2 + $0xe0] sm:$0xf] %vm984, %v917
  %1042 = vst.msk [vmem:[#allocation2 + $0xe4] sm:$0xf] %vm984, %v919
  %1043 = vst.msk [vmem:[#allocation2 + $0xe8] sm:$0xf] %vm984, %v921
  %1044 = vst.msk [vmem:[#allocation2 + $0xec] sm:$0xf] %vm984, %v923
  %v1045 = vld [vmem:[%s0] sm:$0xe]
  %v1046 = vld [vmem:[%s0 + $0x4] sm:$0xf]
  %v1047 = vld [vmem:[%s0 + $0x8] sm:$0xf]
  %v1048 = vld [vmem:[%s0 + $0xc] sm:$0xf]
  %v1049 = vld [vmem:[%s0 + $0x10] sm:$0xf]
  %v1050 = vld [vmem:[%s0 + $0x14] sm:$0xf]
  %v1051 = vld [vmem:[%s0 + $0x18] sm:$0xf]
  %v1052 = vld [vmem:[%s0 + $0x1c] sm:$0xf]
  %v1053 = vld [vmem:[%s0 + $0x20] sm:$0xf]
  %v1054 = vld [vmem:[%s0 + $0x24] sm:$0xf]
  %v1055 = vld [vmem:[%s0 + $0x28] sm:$0xf]
  %v1056 = vld [vmem:[%s0 + $0x2c] sm:$0xf]
  %v1057 = vld [vmem:[%s0 + $0x30] sm:$0xf]
  %v1058 = vld [vmem:[%s0 + $0x34] sm:$0xf]
  %v1059 = vld [vmem:[%s0 + $0x38] sm:$0xf]
  %v1060 = vld [vmem:[%s0 + $0x3c] sm:$0xf]
  %v1061 = vld [vmem:[%s0 + $0x40] sm:$0xf]
  %v1062 = vld [vmem:[%s0 + $0x44] sm:$0xf]
  %v1063 = vld [vmem:[%s0 + $0x48] sm:$0xf]
  %v1064 = vld [vmem:[%s0 + $0x4c] sm:$0xf]
  %v1065 = vld [vmem:[%s0 + $0x50] sm:$0xf]
  %v1066 = vld [vmem:[%s0 + $0x54] sm:$0xf]
  %v1067 = vld [vmem:[%s0 + $0x58] sm:$0xf]
  %v1068 = vld [vmem:[%s0 + $0x5c] sm:$0xf]
  %v1069 = vld [vmem:[%s0 + $0x60] sm:$0xf]
  %v1070 = vld [vmem:[%s0 + $0x64] sm:$0xf]
  %v1071 = vld [vmem:[%s0 + $0x68] sm:$0xf]
  %v1072 = vld [vmem:[%s0 + $0x6c] sm:$0xf]
  %v1073 = vld [vmem:[%s0 + $0x70] sm:$0xf]
  %v1074 = vld [vmem:[%s0 + $0x74] sm:$0xf]
  %v1075 = vld [vmem:[%s0 + $0x78] sm:$0xf]
  %v1076 = vld [vmem:[%s0 + $0x7c] sm:$0xf]
  %v1077 = vld [vmem:[%s0 + $0x80] sm:$0xf]
  %v1078 = vld [vmem:[%s0 + $0x84] sm:$0xf]
  %v1079 = vld [vmem:[%s0 + $0x88] sm:$0xf]
  %v1080 = vld [vmem:[%s0 + $0x8c] sm:$0xf]
  %v1081 = vld [vmem:[%s0 + $0x90] sm:$0xf]
  %v1082 = vld [vmem:[%s0 + $0x94] sm:$0xf]
  %v1083 = vld [vmem:[%s0 + $0x98] sm:$0xf]
  %v1084 = vld [vmem:[%s0 + $0x9c] sm:$0xf]
  %v1085 = vld [vmem:[%s0 + $0xa0] sm:$0xf]
  %v1086 = vld [vmem:[%s0 + $0xa4] sm:$0xf]
  %v1087 = vld [vmem:[%s0 + $0xa8] sm:$0xf]
  %v1088 = vld [vmem:[%s0 + $0xac] sm:$0xf]
  %v1089 = vld [vmem:[%s0 + $0xb0] sm:$0xf]
  %v1090 = vld [vmem:[%s0 + $0xb4] sm:$0xf]
  %v1091 = vld [vmem:[%s0 + $0xb8] sm:$0xf]
  %v1092 = vld [vmem:[%s0 + $0xbc] sm:$0xf]
  %v1093 = vld [vmem:[%s0 + $0xc0] sm:$0xf]
  %v1094 = vld [vmem:[%s0 + $0xc4] sm:$0xf]
  %v1095 = vld [vmem:[%s0 + $0xc8] sm:$0xf]
  %v1096 = vld [vmem:[%s0 + $0xcc] sm:$0xf]
  %v1097 = vld [vmem:[%s0 + $0xd0] sm:$0xf]
  %v1098 = vld [vmem:[%s0 + $0xd4] sm:$0xf]
  %v1099 = vld [vmem:[%s0 + $0xd8] sm:$0xf]
  %v1100 = vld [vmem:[%s0 + $0xdc] sm:$0xf]
  %v1101 = vld [vmem:[%s0 + $0xe0] sm:$0xf]
  %v1102 = vld [vmem:[%s0 + $0xe4] sm:$0xf]
  %v1103 = vld [vmem:[%s0 + $0xe8] sm:$0xf]
  %v1104 = vld [vmem:[%s0 + $0xec] sm:$0xf]
  %v1105 = vld [vmem:[%s0 + $0xf0] sm:$0x1]
  %vm1167 = vcmask 1042432
  %vm1168 = vcmask 1046532
  %vm1169 = vmor %vm1167, %vm1168
  %v1170 = vrot.slane %v1045, 5
  %v1171 = vrot.slane %v1170, 4
  %v1172 = vrot.slane %v1046, 5
  %v1173 = vsel %vm1169, %v1171, %v1172
  %v1174 = vrot.slane %v1172, 4
  %v1175 = vrot.slane %v1047, 5
  %v1176 = vsel %vm1169, %v1174, %v1175
  %v1177 = vrot.slane %v1175, 4
  %v1178 = vrot.slane %v1048, 5
  %v1179 = vsel %vm1169, %v1177, %v1178
  %v1180 = vrot.slane %v1178, 4
  %v1181 = vrot.slane %v1049, 5
  %v1182 = vsel %vm1169, %v1180, %v1181
  %v1183 = vrot.slane %v1181, 4
  %v1184 = vrot.slane %v1050, 5
  %v1185 = vsel %vm1169, %v1183, %v1184
  %v1186 = vrot.slane %v1184, 4
  %v1187 = vrot.slane %v1051, 5
  %v1188 = vsel %vm1169, %v1186, %v1187
  %v1189 = vrot.slane %v1187, 4
  %v1190 = vrot.slane %v1052, 5
  %v1191 = vsel %vm1169, %v1189, %v1190
  %v1192 = vrot.slane %v1190, 4
  %v1193 = vrot.slane %v1053, 5
  %v1194 = vsel %vm1169, %v1192, %v1193
  %v1195 = vrot.slane %v1193, 4
  %v1196 = vrot.slane %v1054, 5
  %v1197 = vsel %vm1169, %v1195, %v1196
  %v1198 = vrot.slane %v1196, 4
  %v1199 = vrot.slane %v1055, 5
  %v1200 = vsel %vm1169, %v1198, %v1199
  %v1201 = vrot.slane %v1199, 4
  %v1202 = vrot.slane %v1056, 5
  %v1203 = vsel %vm1169, %v1201, %v1202
  %v1204 = vrot.slane %v1202, 4
  %v1205 = vrot.slane %v1057, 5
  %v1206 = vsel %vm1169, %v1204, %v1205
  %v1207 = vrot.slane %v1205, 4
  %v1208 = vrot.slane %v1058, 5
  %v1209 = vsel %vm1169, %v1207, %v1208
  %v1210 = vrot.slane %v1208, 4
  %v1211 = vrot.slane %v1059, 5
  %v1212 = vsel %vm1169, %v1210, %v1211
  %v1213 = vrot.slane %v1211, 4
  %v1214 = vrot.slane %v1060, 5
  %v1215 = vsel %vm1169, %v1213, %v1214
  %v1216 = vrot.slane %v1214, 4
  %v1217 = vrot.slane %v1061, 5
  %v1218 = vsel %vm1169, %v1216, %v1217
  %v1219 = vrot.slane %v1217, 4
  %v1220 = vrot.slane %v1062, 5
  %v1221 = vsel %vm1169, %v1219, %v1220
  %v1222 = vrot.slane %v1220, 4
  %v1223 = vrot.slane %v1063, 5
  %v1224 = vsel %vm1169, %v1222, %v1223
  %v1225 = vrot.slane %v1223, 4
  %v1226 = vrot.slane %v1064, 5
  %v1227 = vsel %vm1169, %v1225, %v1226
  %v1228 = vrot.slane %v1226, 4
  %v1229 = vrot.slane %v1065, 5
  %v1230 = vsel %vm1169, %v1228, %v1229
  %v1231 = vrot.slane %v1229, 4
  %v1232 = vrot.slane %v1066, 5
  %v1233 = vsel %vm1169, %v1231, %v1232
  %v1234 = vrot.slane %v1232, 4
  %v1235 = vrot.slane %v1067, 5
  %v1236 = vsel %vm1169, %v1234, %v1235
  %v1237 = vrot.slane %v1235, 4
  %v1238 = vrot.slane %v1068, 5
  %v1239 = vsel %vm1169, %v1237, %v1238
  %v1240 = vrot.slane %v1238, 4
  %v1241 = vrot.slane %v1069, 5
  %v1242 = vsel %vm1169, %v1240, %v1241
  %v1243 = vrot.slane %v1241, 4
  %v1244 = vrot.slane %v1070, 5
  %v1245 = vsel %vm1169, %v1243, %v1244
  %v1246 = vrot.slane %v1244, 4
  %v1247 = vrot.slane %v1071, 5
  %v1248 = vsel %vm1169, %v1246, %v1247
  %v1249 = vrot.slane %v1247, 4
  %v1250 = vrot.slane %v1072, 5
  %v1251 = vsel %vm1169, %v1249, %v1250
  %v1252 = vrot.slane %v1250, 4
  %v1253 = vrot.slane %v1073, 5
  %v1254 = vsel %vm1169, %v1252, %v1253
  %v1255 = vrot.slane %v1253, 4
  %v1256 = vrot.slane %v1074, 5
  %v1257 = vsel %vm1169, %v1255, %v1256
  %v1258 = vrot.slane %v1256, 4
  %v1259 = vrot.slane %v1075, 5
  %v1260 = vsel %vm1169, %v1258, %v1259
  %v1261 = vrot.slane %v1259, 4
  %v1262 = vrot.slane %v1076, 5
  %v1263 = vsel %vm1169, %v1261, %v1262
  %v1264 = vrot.slane %v1262, 4
  %v1265 = vrot.slane %v1077, 5
  %v1266 = vsel %vm1169, %v1264, %v1265
  %v1267 = vrot.slane %v1265, 4
  %v1268 = vrot.slane %v1078, 5
  %v1269 = vsel %vm1169, %v1267, %v1268
  %v1270 = vrot.slane %v1268, 4
  %v1271 = vrot.slane %v1079, 5
  %v1272 = vsel %vm1169, %v1270, %v1271
  %v1273 = vrot.slane %v1271, 4
  %v1274 = vrot.slane %v1080, 5
  %v1275 = vsel %vm1169, %v1273, %v1274
  %v1276 = vrot.slane %v1274, 4
  %v1277 = vrot.slane %v1081, 5
  %v1278 = vsel %vm1169, %v1276, %v1277
  %v1279 = vrot.slane %v1277, 4
  %v1280 = vrot.slane %v1082, 5
  %v1281 = vsel %vm1169, %v1279, %v1280
  %v1282 = vrot.slane %v1280, 4
  %v1283 = vrot.slane %v1083, 5
  %v1284 = vsel %vm1169, %v1282, %v1283
  %v1285 = vrot.slane %v1283, 4
  %v1286 = vrot.slane %v1084, 5
  %v1287 = vsel %vm1169, %v1285, %v1286
  %v1288 = vrot.slane %v1286, 4
  %v1289 = vrot.slane %v1085, 5
  %v1290 = vsel %vm1169, %v1288, %v1289
  %v1291 = vrot.slane %v1289, 4
  %v1292 = vrot.slane %v1086, 5
  %v1293 = vsel %vm1169, %v1291, %v1292
  %v1294 = vrot.slane %v1292, 4
  %v1295 = vrot.slane %v1087, 5
  %v1296 = vsel %vm1169, %v1294, %v1295
  %v1297 = vrot.slane %v1295, 4
  %v1298 = vrot.slane %v1088, 5
  %v1299 = vsel %vm1169, %v1297, %v1298
  %v1300 = vrot.slane %v1298, 4
  %v1301 = vrot.slane %v1089, 5
  %v1302 = vsel %vm1169, %v1300, %v1301
  %v1303 = vrot.slane %v1301, 4
  %v1304 = vrot.slane %v1090, 5
  %v1305 = vsel %vm1169, %v1303, %v1304
  %v1306 = vrot.slane %v1304, 4
  %v1307 = vrot.slane %v1091, 5
  %v1308 = vsel %vm1169, %v1306, %v1307
  %v1309 = vrot.slane %v1307, 4
  %v1310 = vrot.slane %v1092, 5
  %v1311 = vsel %vm1169, %v1309, %v1310
  %v1312 = vrot.slane %v1310, 4
  %v1313 = vrot.slane %v1093, 5
  %v1314 = vsel %vm1169, %v1312, %v1313
  %v1315 = vrot.slane %v1313, 4
  %v1316 = vrot.slane %v1094, 5
  %v1317 = vsel %vm1169, %v1315, %v1316
  %v1318 = vrot.slane %v1316, 4
  %v1319 = vrot.slane %v1095, 5
  %v1320 = vsel %vm1169, %v1318, %v1319
  %v1321 = vrot.slane %v1319, 4
  %v1322 = vrot.slane %v1096, 5
  %v1323 = vsel %vm1169, %v1321, %v1322
  %v1324 = vrot.slane %v1322, 4
  %v1325 = vrot.slane %v1097, 5
  %v1326 = vsel %vm1169, %v1324, %v1325
  %v1327 = vrot.slane %v1325, 4
  %v1328 = vrot.slane %v1098, 5
  %v1329 = vsel %vm1169, %v1327, %v1328
  %v1330 = vrot.slane %v1328, 4
  %v1331 = vrot.slane %v1099, 5
  %v1332 = vsel %vm1169, %v1330, %v1331
  %v1333 = vrot.slane %v1331, 4
  %v1334 = vrot.slane %v1100, 5
  %v1335 = vsel %vm1169, %v1333, %v1334
  %v1336 = vrot.slane %v1334, 4
  %v1337 = vrot.slane %v1101, 5
  %v1338 = vsel %vm1169, %v1336, %v1337
  %v1339 = vrot.slane %v1337, 4
  %v1340 = vrot.slane %v1102, 5
  %v1341 = vsel %vm1169, %v1339, %v1340
  %v1342 = vrot.slane %v1340, 4
  %v1343 = vrot.slane %v1103, 5
  %v1344 = vsel %vm1169, %v1342, %v1343
  %v1345 = vrot.slane %v1343, 4
  %v1346 = vrot.slane %v1104, 5
  %v1347 = vsel %vm1169, %v1345, %v1346
  %v1348 = vrot.slane %v1346, 4
  %v1349 = vrot.slane %v1105, 5
  %v1350 = vsel %vm1169, %v1348, %v1349
  %1351 = vrot.lane.b32.xlu0 %v1173, 24
  %v1352 = vpop.permute.xlu0 %1351
  %1353 = vrot.lane.b32.xlu0 %v1176, 24
  %v1354 = vpop.permute.xlu0 %1353
  %1355 = vrot.lane.b32.xlu0 %v1179, 24
  %v1356 = vpop.permute.xlu0 %1355
  %1357 = vrot.lane.b32.xlu0 %v1182, 24
  %v1358 = vpop.permute.xlu0 %1357
  %1359 = vrot.lane.b32.xlu0 %v1185, 24
  %v1360 = vpop.permute.xlu0 %1359
  %1361 = vrot.lane.b32.xlu0 %v1188, 24
  %v1362 = vpop.permute.xlu0 %1361
  %1363 = vrot.lane.b32.xlu0 %v1191, 24
  %v1364 = vpop.permute.xlu0 %1363
  %1365 = vrot.lane.b32.xlu0 %v1194, 24
  %v1366 = vpop.permute.xlu0 %1365
  %1367 = vrot.lane.b32.xlu0 %v1197, 24
  %v1368 = vpop.permute.xlu0 %1367
  %1369 = vrot.lane.b32.xlu0 %v1200, 24
  %v1370 = vpop.permute.xlu0 %1369
  %1371 = vrot.lane.b32.xlu0 %v1203, 24
  %v1372 = vpop.permute.xlu0 %1371
  %1373 = vrot.lane.b32.xlu0 %v1206, 24
  %v1374 = vpop.permute.xlu0 %1373
  %1375 = vrot.lane.b32.xlu0 %v1209, 24
  %v1376 = vpop.permute.xlu0 %1375
  %1377 = vrot.lane.b32.xlu0 %v1212, 24
  %v1378 = vpop.permute.xlu0 %1377
  %1379 = vrot.lane.b32.xlu0 %v1215, 24
  %v1380 = vpop.permute.xlu0 %1379
  %1381 = vrot.lane.b32.xlu0 %v1218, 24
  %v1382 = vpop.permute.xlu0 %1381
  %1383 = vrot.lane.b32.xlu0 %v1221, 24
  %v1384 = vpop.permute.xlu0 %1383
  %1385 = vrot.lane.b32.xlu0 %v1224, 24
  %v1386 = vpop.permute.xlu0 %1385
  %1387 = vrot.lane.b32.xlu0 %v1227, 24
  %v1388 = vpop.permute.xlu0 %1387
  %1389 = vrot.lane.b32.xlu0 %v1230, 24
  %v1390 = vpop.permute.xlu0 %1389
  %1391 = vrot.lane.b32.xlu0 %v1233, 24
  %v1392 = vpop.permute.xlu0 %1391
  %1393 = vrot.lane.b32.xlu0 %v1236, 24
  %v1394 = vpop.permute.xlu0 %1393
  %1395 = vrot.lane.b32.xlu0 %v1239, 24
  %v1396 = vpop.permute.xlu0 %1395
  %1397 = vrot.lane.b32.xlu0 %v1242, 24
  %v1398 = vpop.permute.xlu0 %1397
  %1399 = vrot.lane.b32.xlu0 %v1245, 24
  %v1400 = vpop.permute.xlu0 %1399
  %1401 = vrot.lane.b32.xlu0 %v1248, 24
  %v1402 = vpop.permute.xlu0 %1401
  %1403 = vrot.lane.b32.xlu0 %v1251, 24
  %v1404 = vpop.permute.xlu0 %1403
  %1405 = vrot.lane.b32.xlu0 %v1254, 24
  %v1406 = vpop.permute.xlu0 %1405
  %1407 = vrot.lane.b32.xlu0 %v1257, 24
  %v1408 = vpop.permute.xlu0 %1407
  %1409 = vrot.lane.b32.xlu0 %v1260, 24
  %v1410 = vpop.permute.xlu0 %1409
  %1411 = vrot.lane.b32.xlu0 %v1263, 24
  %v1412 = vpop.permute.xlu0 %1411
  %1413 = vrot.lane.b32.xlu0 %v1266, 24
  %v1414 = vpop.permute.xlu0 %1413
  %1415 = vrot.lane.b32.xlu0 %v1269, 24
  %v1416 = vpop.permute.xlu0 %1415
  %1417 = vrot.lane.b32.xlu0 %v1272, 24
  %v1418 = vpop.permute.xlu0 %1417
  %1419 = vrot.lane.b32.xlu0 %v1275, 24
  %v1420 = vpop.permute.xlu0 %1419
  %1421 = vrot.lane.b32.xlu0 %v1278, 24
  %v1422 = vpop.permute.xlu0 %1421
  %1423 = vrot.lane.b32.xlu0 %v1281, 24
  %v1424 = vpop.permute.xlu0 %1423
  %1425 = vrot.lane.b32.xlu0 %v1284, 24
  %v1426 = vpop.permute.xlu0 %1425
  %1427 = vrot.lane.b32.xlu0 %v1287, 24
  %v1428 = vpop.permute.xlu0 %1427
  %1429 = vrot.lane.b32.xlu0 %v1290, 24
  %v1430 = vpop.permute.xlu0 %1429
  %1431 = vrot.lane.b32.xlu0 %v1293, 24
  %v1432 = vpop.permute.xlu0 %1431
  %1433 = vrot.lane.b32.xlu0 %v1296, 24
  %v1434 = vpop.permute.xlu0 %1433
  %1435 = vrot.lane.b32.xlu0 %v1299, 24
  %v1436 = vpop.permute.xlu0 %1435
  %1437 = vrot.lane.b32.xlu0 %v1302, 24
  %v1438 = vpop.permute.xlu0 %1437
  %1439 = vrot.lane.b32.xlu0 %v1305, 24
  %v1440 = vpop.permute.xlu0 %1439
  %1441 = vrot.lane.b32.xlu0 %v1308, 24
  %v1442 = vpop.permute.xlu0 %1441
  %1443 = vrot.lane.b32.xlu0 %v1311, 24
  %v1444 = vpop.permute.xlu0 %1443
  %1445 = vrot.lane.b32.xlu0 %v1314, 24
  %v1446 = vpop.permute.xlu0 %1445
  %1447 = vrot.lane.b32.xlu0 %v1317, 24
  %v1448 = vpop.permute.xlu0 %1447
  %1449 = vrot.lane.b32.xlu0 %v1320, 24
  %v1450 = vpop.permute.xlu0 %1449
  %1451 = vrot.lane.b32.xlu0 %v1323, 24
  %v1452 = vpop.permute.xlu0 %1451
  %1453 = vrot.lane.b32.xlu0 %v1326, 24
  %v1454 = vpop.permute.xlu0 %1453
  %1455 = vrot.lane.b32.xlu0 %v1329, 24
  %v1456 = vpop.permute.xlu0 %1455
  %1457 = vrot.lane.b32.xlu0 %v1332, 24
  %v1458 = vpop.permute.xlu0 %1457
  %1459 = vrot.lane.b32.xlu0 %v1335, 24
  %v1460 = vpop.permute.xlu0 %1459
  %1461 = vrot.lane.b32.xlu0 %v1338, 24
  %v1462 = vpop.permute.xlu0 %1461
  %1463 = vrot.lane.b32.xlu0 %v1341, 24
  %v1464 = vpop.permute.xlu0 %1463
  %1465 = vrot.lane.b32.xlu0 %v1344, 24
  %v1466 = vpop.permute.xlu0 %1465
  %1467 = vrot.lane.b32.xlu0 %v1347, 24
  %v1468 = vpop.permute.xlu0 %1467
  %1469 = vrot.lane.b32.xlu0 %v1350, 24
  %v1470 = vpop.permute.xlu0 %1469
  %vm1531 = vcmask 289984
  %1532 = vst.msk [vmem:[#allocation2] sm:$0xf] %vm1531, %v1352
  %1533 = vst.msk [vmem:[#allocation2 + $0x4] sm:$0xf] %vm1531, %v1354
  %1534 = vst.msk [vmem:[#allocation2 + $0x8] sm:$0xf] %vm1531, %v1356
  %1535 = vst.msk [vmem:[#allocation2 + $0xc] sm:$0xf] %vm1531, %v1358
  %1536 = vst.msk [vmem:[#allocation2 + $0x10] sm:$0xf] %vm1531, %v1360
  %1537 = vst.msk [vmem:[#allocation2 + $0x14] sm:$0xf] %vm1531, %v1362
  %1538 = vst.msk [vmem:[#allocation2 + $0x18] sm:$0xf] %vm1531, %v1364
  %1539 = vst.msk [vmem:[#allocation2 + $0x1c] sm:$0xf] %vm1531, %v1366
  %1540 = vst.msk [vmem:[#allocation2 + $0x20] sm:$0xf] %vm1531, %v1368
  %1541 = vst.msk [vmem:[#allocation2 + $0x24] sm:$0xf] %vm1531, %v1370
  %1542 = vst.msk [vmem:[#allocation2 + $0x28] sm:$0xf] %vm1531, %v1372
  %1543 = vst.msk [vmem:[#allocation2 + $0x2c] sm:$0xf] %vm1531, %v1374
  %1544 = vst.msk [vmem:[#allocation2 + $0x30] sm:$0xf] %vm1531, %v1376
  %1545 = vst.msk [vmem:[#allocation2 + $0x34] sm:$0xf] %vm1531, %v1378
  %1546 = vst.msk [vmem:[#allocation2 + $0x38] sm:$0xf] %vm1531, %v1380
  %1547 = vst.msk [vmem:[#allocation2 + $0x3c] sm:$0xf] %vm1531, %v1382
  %1548 = vst.msk [vmem:[#allocation2 + $0x40] sm:$0xf] %vm1531, %v1384
  %1549 = vst.msk [vmem:[#allocation2 + $0x44] sm:$0xf] %vm1531, %v1386
  %1550 = vst.msk [vmem:[#allocation2 + $0x48] sm:$0xf] %vm1531, %v1388
  %1551 = vst.msk [vmem:[#allocation2 + $0x4c] sm:$0xf] %vm1531, %v1390
  %1552 = vst.msk [vmem:[#allocation2 + $0x50] sm:$0xf] %vm1531, %v1392
  %1553 = vst.msk [vmem:[#allocation2 + $0x54] sm:$0xf] %vm1531, %v1394
  %1554 = vst.msk [vmem:[#allocation2 + $0x58] sm:$0xf] %vm1531, %v1396
  %1555 = vst.msk [vmem:[#allocation2 + $0x5c] sm:$0xf] %vm1531, %v1398
  %1556 = vst.msk [vmem:[#allocation2 + $0x60] sm:$0xf] %vm1531, %v1400
  %1557 = vst.msk [vmem:[#allocation2 + $0x64] sm:$0xf] %vm1531, %v1402
  %1558 = vst.msk [vmem:[#allocation2 + $0x68] sm:$0xf] %vm1531, %v1404
  %1559 = vst.msk [vmem:[#allocation2 + $0x6c] sm:$0xf] %vm1531, %v1406
  %1560 = vst.msk [vmem:[#allocation2 + $0x70] sm:$0xf] %vm1531, %v1408
  %1561 = vst.msk [vmem:[#allocation2 + $0x74] sm:$0xf] %vm1531, %v1410
  %1562 = vst.msk [vmem:[#allocation2 + $0x78] sm:$0xf] %vm1531, %v1412
  %1563 = vst.msk [vmem:[#allocation2 + $0x7c] sm:$0xf] %vm1531, %v1414
  %1564 = vst.msk [vmem:[#allocation2 + $0x80] sm:$0xf] %vm1531, %v1416
  %1565 = vst.msk [vmem:[#allocation2 + $0x84] sm:$0xf] %vm1531, %v1418
  %1566 = vst.msk [vmem:[#allocation2 + $0x88] sm:$0xf] %vm1531, %v1420
  %1567 = vst.msk [vmem:[#allocation2 + $0x8c] sm:$0xf] %vm1531, %v1422
  %1568 = vst.msk [vmem:[#allocation2 + $0x90] sm:$0xf] %vm1531, %v1424
  %1569 = vst.msk [vmem:[#allocation2 + $0x94] sm:$0xf] %vm1531, %v1426
  %1570 = vst.msk [vmem:[#allocation2 + $0x98] sm:$0xf] %vm1531, %v1428
  %1571 = vst.msk [vmem:[#allocation2 + $0x9c] sm:$0xf] %vm1531, %v1430
  %1572 = vst.msk [vmem:[#allocation2 + $0xa0] sm:$0xf] %vm1531, %v1432
  %1573 = vst.msk [vmem:[#allocation2 + $0xa4] sm:$0xf] %vm1531, %v1434
  %1574 = vst.msk [vmem:[#allocation2 + $0xa8] sm:$0xf] %vm1531, %v1436
  %1575 = vst.msk [vmem:[#allocation2 + $0xac] sm:$0xf] %vm1531, %v1438
  %1576 = vst.msk [vmem:[#allocation2 + $0xb0] sm:$0xf] %vm1531, %v1440
  %1577 = vst.msk [vmem:[#allocation2 + $0xb4] sm:$0xf] %vm1531, %v1442
  %1578 = vst.msk [vmem:[#allocation2 + $0xb8] sm:$0xf] %vm1531, %v1444
  %1579 = vst.msk [vmem:[#allocation2 + $0xbc] sm:$0xf] %vm1531, %v1446
  %1580 = vst.msk [vmem:[#allocation2 + $0xc0] sm:$0xf] %vm1531, %v1448
  %1581 = vst.msk [vmem:[#allocation2 + $0xc4] sm:$0xf] %vm1531, %v1450
  %1582 = vst.msk [vmem:[#allocation2 + $0xc8] sm:$0xf] %vm1531, %v1452
  %1583 = vst.msk [vmem:[#allocation2 + $0xcc] sm:$0xf] %vm1531, %v1454
  %1584 = vst.msk [vmem:[#allocation2 + $0xd0] sm:$0xf] %vm1531, %v1456
  %1585 = vst.msk [vmem:[#allocation2 + $0xd4] sm:$0xf] %vm1531, %v1458
  %1586 = vst.msk [vmem:[#allocation2 + $0xd8] sm:$0xf] %vm1531, %v1460
  %1587 = vst.msk [vmem:[#allocation2 + $0xdc] sm:$0xf] %vm1531, %v1462
  %1588 = vst.msk [vmem:[#allocation2 + $0xe0] sm:$0xf] %vm1531, %v1464
  %1589 = vst.msk [vmem:[#allocation2 + $0xe4] sm:$0xf] %vm1531, %v1466
  %1590 = vst.msk [vmem:[#allocation2 + $0xe8] sm:$0xf] %vm1531, %v1468
  %1591 = vst.msk [vmem:[#allocation2 + $0xec] sm:$0xf] %vm1531, %v1470
  %v1592 = vld [vmem:[%s0] sm:$0xe]
  %v1593 = vld [vmem:[%s0 + $0x4] sm:$0xf]
  %v1594 = vld [vmem:[%s0 + $0x8] sm:$0xf]
  %v1595 = vld [vmem:[%s0 + $0xc] sm:$0xf]
  %v1596 = vld [vmem:[%s0 + $0x10] sm:$0xf]
  %v1597 = vld [vmem:[%s0 + $0x14] sm:$0xf]
  %v1598 = vld [vmem:[%s0 + $0x18] sm:$0xf]
  %v1599 = vld [vmem:[%s0 + $0x1c] sm:$0xf]
  %v1600 = vld [vmem:[%s0 + $0x20] sm:$0xf]
  %v1601 = vld [vmem:[%s0 + $0x24] sm:$0xf]
  %v1602 = vld [vmem:[%s0 + $0x28] sm:$0xf]
  %v1603 = vld [vmem:[%s0 + $0x2c] sm:$0xf]
  %v1604 = vld [vmem:[%s0 + $0x30] sm:$0xf]
  %v1605 = vld [vmem:[%s0 + $0x34] sm:$0xf]
  %v1606 = vld [vmem:[%s0 + $0x38] sm:$0xf]
  %v1607 = vld [vmem:[%s0 + $0x3c] sm:$0xf]
  %v1608 = vld [vmem:[%s0 + $0x40] sm:$0xf]
  %v1609 = vld [vmem:[%s0 + $0x44] sm:$0xf]
  %v1610 = vld [vmem:[%s0 + $0x48] sm:$0xf]
  %v1611 = vld [vmem:[%s0 + $0x4c] sm:$0xf]
  %v1612 = vld [vmem:[%s0 + $0x50] sm:$0xf]
  %v1613 = vld [vmem:[%s0 + $0x54] sm:$0xf]
  %v1614 = vld [vmem:[%s0 + $0x58] sm:$0xf]
  %v1615 = vld [vmem:[%s0 + $0x5c] sm:$0xf]
  %v1616 = vld [vmem:[%s0 + $0x60] sm:$0xf]
  %v1617 = vld [vmem:[%s0 + $0x64] sm:$0xf]
  %v1618 = vld [vmem:[%s0 + $0x68] sm:$0xf]
  %v1619 = vld [vmem:[%s0 + $0x6c] sm:$0xf]
  %v1620 = vld [vmem:[%s0 + $0x70] sm:$0xf]
  %v1621 = vld [vmem:[%s0 + $0x74] sm:$0xf]
  %v1622 = vld [vmem:[%s0 + $0x78] sm:$0xf]
  %v1623 = vld [vmem:[%s0 + $0x7c] sm:$0xf]
  %v1624 = vld [vmem:[%s0 + $0x80] sm:$0xf]
  %v1625 = vld [vmem:[%s0 + $0x84] sm:$0xf]
  %v1626 = vld [vmem:[%s0 + $0x88] sm:$0xf]
  %v1627 = vld [vmem:[%s0 + $0x8c] sm:$0xf]
  %v1628 = vld [vmem:[%s0 + $0x90] sm:$0xf]
  %v1629 = vld [vmem:[%s0 + $0x94] sm:$0xf]
  %v1630 = vld [vmem:[%s0 + $0x98] sm:$0xf]
  %v1631 = vld [vmem:[%s0 + $0x9c] sm:$0xf]
  %v1632 = vld [vmem:[%s0 + $0xa0] sm:$0xf]
  %v1633 = vld [vmem:[%s0 + $0xa4] sm:$0xf]
  %v1634 = vld [vmem:[%s0 + $0xa8] sm:$0xf]
  %v1635 = vld [vmem:[%s0 + $0xac] sm:$0xf]
  %v1636 = vld [vmem:[%s0 + $0xb0] sm:$0xf]
  %v1637 = vld [vmem:[%s0 + $0xb4] sm:$0xf]
  %v1638 = vld [vmem:[%s0 + $0xb8] sm:$0xf]
  %v1639 = vld [vmem:[%s0 + $0xbc] sm:$0xf]
  %v1640 = vld [vmem:[%s0 + $0xc0] sm:$0xf]
  %v1641 = vld [vmem:[%s0 + $0xc4] sm:$0xf]
  %v1642 = vld [vmem:[%s0 + $0xc8] sm:$0xf]
  %v1643 = vld [vmem:[%s0 + $0xcc] sm:$0xf]
  %v1644 = vld [vmem:[%s0 + $0xd0] sm:$0xf]
  %v1645 = vld [vmem:[%s0 + $0xd4] sm:$0xf]
  %v1646 = vld [vmem:[%s0 + $0xd8] sm:$0xf]
  %v1647 = vld [vmem:[%s0 + $0xdc] sm:$0xf]
  %v1648 = vld [vmem:[%s0 + $0xe0] sm:$0xf]
  %v1649 = vld [vmem:[%s0 + $0xe4] sm:$0xf]
  %v1650 = vld [vmem:[%s0 + $0xe8] sm:$0xf]
  %v1651 = vld [vmem:[%s0 + $0xec] sm:$0xf]
  %v1652 = vld [vmem:[%s0 + $0xf0] sm:$0x3]
  %vm1653 = vsmask.f32 2304
  %vm1654 = vsmask.f32 6416
  %vm1655 = vmor %vm1653, %vm1654
  %v1657 = vshrl.u32 %v1592, 16
  %v1659 = vrot.slane %v1657, 5
  %v1660 = vshll.u32 %v1592, 16
  %v1662 = vrot.slane %v1660, 6
  %v1663 = vor.u32 %v1659, %v1662
  %v1664 = vrot.slane %v1663, 4
  %v1666 = vshrl.u32 %v1593, 16
  %v1668 = vrot.slane %v1666, 5
  %v1669 = vshll.u32 %v1593, 16
  %v1671 = vrot.slane %v1669, 6
  %v1672 = vor.u32 %v1668, %v1671
  %v1673 = vsel %vm1655, %v1664, %v1672
  %v1674 = vrot.slane %v1672, 4
  %v1676 = vshrl.u32 %v1594, 16
  %v1678 = vrot.slane %v1676, 5
  %v1679 = vshll.u32 %v1594, 16
  %v1681 = vrot.slane %v1679, 6
  %v1682 = vor.u32 %v1678, %v1681
  %v1683 = vsel %vm1655, %v1674, %v1682
  %v1684 = vrot.slane %v1682, 4
  %v1686 = vshrl.u32 %v1595, 16
  %v1688 = vrot.slane %v1686, 5
  %v1689 = vshll.u32 %v1595, 16
  %v1691 = vrot.slane %v1689, 6
  %v1692 = vor.u32 %v1688, %v1691
  %v1693 = vsel %vm1655, %v1684, %v1692
  %v1694 = vrot.slane %v1692, 4
  %v1696 = vshrl.u32 %v1596, 16
  %v1698 = vrot.slane %v1696, 5
  %v1699 = vshll.u32 %v1596, 16
  %v1701 = vrot.slane %v1699, 6
  %v1702 = vor.u32 %v1698, %v1701
  %v1703 = vsel %vm1655, %v1694, %v1702
  %v1704 = vrot.slane %v1702, 4
  %v1706 = vshrl.u32 %v1597, 16
  %v1708 = vrot.slane %v1706, 5
  %v1709 = vshll.u32 %v1597, 16
  %v1711 = vrot.slane %v1709, 6
  %v1712 = vor.u32 %v1708, %v1711
  %v1713 = vsel %vm1655, %v1704, %v1712
  %v1714 = vrot.slane %v1712, 4
  %v1716 = vshrl.u32 %v1598, 16
  %v1718 = vrot.slane %v1716, 5
  %v1719 = vshll.u32 %v1598, 16
  %v1721 = vrot.slane %v1719, 6
  %v1722 = vor.u32 %v1718, %v1721
  %v1723 = vsel %vm1655, %v1714, %v1722
  %v1724 = vrot.slane %v1722, 4
  %v1726 = vshrl.u32 %v1599, 16
  %v1728 = vrot.slane %v1726, 5
  %v1729 = vshll.u32 %v1599, 16
  %v1731 = vrot.slane %v1729, 6
  %v1732 = vor.u32 %v1728, %v1731
  %v1733 = vsel %vm1655, %v1724, %v1732
  %v1734 = vrot.slane %v1732, 4
  %v1736 = vshrl.u32 %v1600, 16
  %v1738 = vrot.slane %v1736, 5
  %v1739 = vshll.u32 %v1600, 16
  %v1741 = vrot.slane %v1739, 6
  %v1742 = vor.u32 %v1738, %v1741
  %v1743 = vsel %vm1655, %v1734, %v1742
  %v1744 = vrot.slane %v1742, 4
  %v1746 = vshrl.u32 %v1601, 16
  %v1748 = vrot.slane %v1746, 5
  %v1749 = vshll.u32 %v1601, 16
  %v1751 = vrot.slane %v1749, 6
  %v1752 = vor.u32 %v1748, %v1751
  %v1753 = vsel %vm1655, %v1744, %v1752
  %v1754 = vrot.slane %v1752, 4
  %v1756 = vshrl.u32 %v1602, 16
  %v1758 = vrot.slane %v1756, 5
  %v1759 = vshll.u32 %v1602, 16
  %v1761 = vrot.slane %v1759, 6
  %v1762 = vor.u32 %v1758, %v1761
  %v1763 = vsel %vm1655, %v1754, %v1762
  %v1764 = vrot.slane %v1762, 4
  %v1766 = vshrl.u32 %v1603, 16
  %v1768 = vrot.slane %v1766, 5
  %v1769 = vshll.u32 %v1603, 16
  %v1771 = vrot.slane %v1769, 6
  %v1772 = vor.u32 %v1768, %v1771
  %v1773 = vsel %vm1655, %v1764, %v1772
  %v1774 = vrot.slane %v1772, 4
  %v1776 = vshrl.u32 %v1604, 16
  %v1778 = vrot.slane %v1776, 5
  %v1779 = vshll.u32 %v1604, 16
  %v1781 = vrot.slane %v1779, 6
  %v1782 = vor.u32 %v1778, %v1781
  %v1783 = vsel %vm1655, %v1774, %v1782
  %v1784 = vrot.slane %v1782, 4
  %v1786 = vshrl.u32 %v1605, 16
  %v1788 = vrot.slane %v1786, 5
  %v1789 = vshll.u32 %v1605, 16
  %v1791 = vrot.slane %v1789, 6
  %v1792 = vor.u32 %v1788, %v1791
  %v1793 = vsel %vm1655, %v1784, %v1792
  %v1794 = vrot.slane %v1792, 4
  %v1796 = vshrl.u32 %v1606, 16
  %v1798 = vrot.slane %v1796, 5
  %v1799 = vshll.u32 %v1606, 16
  %v1801 = vrot.slane %v1799, 6
  %v1802 = vor.u32 %v1798, %v1801
  %v1803 = vsel %vm1655, %v1794, %v1802
  %v1804 = vrot.slane %v1802, 4
  %v1806 = vshrl.u32 %v1607, 16
  %v1808 = vrot.slane %v1806, 5
  %v1809 = vshll.u32 %v1607, 16
  %v1811 = vrot.slane %v1809, 6
  %v1812 = vor.u32 %v1808, %v1811
  %v1813 = vsel %vm1655, %v1804, %v1812
  %v1814 = vrot.slane %v1812, 4
  %v1816 = vshrl.u32 %v1608, 16
  %v1818 = vrot.slane %v1816, 5
  %v1819 = vshll.u32 %v1608, 16
  %v1821 = vrot.slane %v1819, 6
  %v1822 = vor.u32 %v1818, %v1821
  %v1823 = vsel %vm1655, %v1814, %v1822
  %v1824 = vrot.slane %v1822, 4
  %v1826 = vshrl.u32 %v1609, 16
  %v1828 = vrot.slane %v1826, 5
  %v1829 = vshll.u32 %v1609, 16
  %v1831 = vrot.slane %v1829, 6
  %v1832 = vor.u32 %v1828, %v1831
  %v1833 = vsel %vm1655, %v1824, %v1832
  %v1834 = vrot.slane %v1832, 4
  %v1836 = vshrl.u32 %v1610, 16
  %v1838 = vrot.slane %v1836, 5
  %v1839 = vshll.u32 %v1610, 16
  %v1841 = vrot.slane %v1839, 6
  %v1842 = vor.u32 %v1838, %v1841
  %v1843 = vsel %vm1655, %v1834, %v1842
  %v1844 = vrot.slane %v1842, 4
  %v1846 = vshrl.u32 %v1611, 16
  %v1848 = vrot.slane %v1846, 5
  %v1849 = vshll.u32 %v1611, 16
  %v1851 = vrot.slane %v1849, 6
  %v1852 = vor.u32 %v1848, %v1851
  %v1853 = vsel %vm1655, %v1844, %v1852
  %v1854 = vrot.slane %v1852, 4
  %v1856 = vshrl.u32 %v1612, 16
  %v1858 = vrot.slane %v1856, 5
  %v1859 = vshll.u32 %v1612, 16
  %v1861 = vrot.slane %v1859, 6
  %v1862 = vor.u32 %v1858, %v1861
  %v1863 = vsel %vm1655, %v1854, %v1862
  %v1864 = vrot.slane %v1862, 4
  %v1866 = vshrl.u32 %v1613, 16
  %v1868 = vrot.slane %v1866, 5
  %v1869 = vshll.u32 %v1613, 16
  %v1871 = vrot.slane %v1869, 6
  %v1872 = vor.u32 %v1868, %v1871
  %v1873 = vsel %vm1655, %v1864, %v1872
  %v1874 = vrot.slane %v1872, 4
  %v1876 = vshrl.u32 %v1614, 16
  %v1878 = vrot.slane %v1876, 5
  %v1879 = vshll.u32 %v1614, 16
  %v1881 = vrot.slane %v1879, 6
  %v1882 = vor.u32 %v1878, %v1881
  %v1883 = vsel %vm1655, %v1874, %v1882
  %v1884 = vrot.slane %v1882, 4
  %v1886 = vshrl.u32 %v1615, 16
  %v1888 = vrot.slane %v1886, 5
  %v1889 = vshll.u32 %v1615, 16
  %v1891 = vrot.slane %v1889, 6
  %v1892 = vor.u32 %v1888, %v1891
  %v1893 = vsel %vm1655, %v1884, %v1892
  %v1894 = vrot.slane %v1892, 4
  %v1896 = vshrl.u32 %v1616, 16
  %v1898 = vrot.slane %v1896, 5
  %v1899 = vshll.u32 %v1616, 16
  %v1901 = vrot.slane %v1899, 6
  %v1902 = vor.u32 %v1898, %v1901
  %v1903 = vsel %vm1655, %v1894, %v1902
  %v1904 = vrot.slane %v1902, 4
  %v1906 = vshrl.u32 %v1617, 16
  %v1908 = vrot.slane %v1906, 5
  %v1909 = vshll.u32 %v1617, 16
  %v1911 = vrot.slane %v1909, 6
  %v1912 = vor.u32 %v1908, %v1911
  %v1913 = vsel %vm1655, %v1904, %v1912
  %v1914 = vrot.slane %v1912, 4
  %v1916 = vshrl.u32 %v1618, 16
  %v1918 = vrot.slane %v1916, 5
  %v1919 = vshll.u32 %v1618, 16
  %v1921 = vrot.slane %v1919, 6
  %v1922 = vor.u32 %v1918, %v1921
  %v1923 = vsel %vm1655, %v1914, %v1922
  %v1924 = vrot.slane %v1922, 4
  %v1926 = vshrl.u32 %v1619, 16
  %v1928 = vrot.slane %v1926, 5
  %v1929 = vshll.u32 %v1619, 16
  %v1931 = vrot.slane %v1929, 6
  %v1932 = vor.u32 %v1928, %v1931
  %v1933 = vsel %vm1655, %v1924, %v1932
  %v1934 = vrot.slane %v1932, 4
  %v1936 = vshrl.u32 %v1620, 16
  %v1938 = vrot.slane %v1936, 5
  %v1939 = vshll.u32 %v1620, 16
  %v1941 = vrot.slane %v1939, 6
  %v1942 = vor.u32 %v1938, %v1941
  %v1943 = vsel %vm1655, %v1934, %v1942
  %v1944 = vrot.slane %v1942, 4
  %v1946 = vshrl.u32 %v1621, 16
  %v1948 = vrot.slane %v1946, 5
  %v1949 = vshll.u32 %v1621, 16
  %v1951 = vrot.slane %v1949, 6
  %v1952 = vor.u32 %v1948, %v1951
  %v1953 = vsel %vm1655, %v1944, %v1952
  %v1954 = vrot.slane %v1952, 4
  %v1956 = vshrl.u32 %v1622, 16
  %v1958 = vrot.slane %v1956, 5
  %v1959 = vshll.u32 %v1622, 16
  %v1961 = vrot.slane %v1959, 6
  %v1962 = vor.u32 %v1958, %v1961
  %v1963 = vsel %vm1655, %v1954, %v1962
  %v1964 = vrot.slane %v1962, 4
  %v1966 = vshrl.u32 %v1623, 16
  %v1968 = vrot.slane %v1966, 5
  %v1969 = vshll.u32 %v1623, 16
  %v1971 = vrot.slane %v1969, 6
  %v1972 = vor.u32 %v1968, %v1971
  %v1973 = vsel %vm1655, %v1964, %v1972
  %v1974 = vrot.slane %v1972, 4
  %v1976 = vshrl.u32 %v1624, 16
  %v1978 = vrot.slane %v1976, 5
  %v1979 = vshll.u32 %v1624, 16
  %v1981 = vrot.slane %v1979, 6
  %v1982 = vor.u32 %v1978, %v1981
  %v1983 = vsel %vm1655, %v1974, %v1982
  %v1984 = vrot.slane %v1982, 4
  %v1986 = vshrl.u32 %v1625, 16
  %v1988 = vrot.slane %v1986, 5
  %v1989 = vshll.u32 %v1625, 16
  %v1991 = vrot.slane %v1989, 6
  %v1992 = vor.u32 %v1988, %v1991
  %v1993 = vsel %vm1655, %v1984, %v1992
  %v1994 = vrot.slane %v1992, 4
  %v1996 = vshrl.u32 %v1626, 16
  %v1998 = vrot.slane %v1996, 5
  %v1999 = vshll.u32 %v1626, 16
  %v2001 = vrot.slane %v1999, 6
  %v2002 = vor.u32 %v1998, %v2001
  %v2003 = vsel %vm1655, %v1994, %v2002
  %v2004 = vrot.slane %v2002, 4
  %v2006 = vshrl.u32 %v1627, 16
  %v2008 = vrot.slane %v2006, 5
  %v2009 = vshll.u32 %v1627, 16
  %v2011 = vrot.slane %v2009, 6
  %v2012 = vor.u32 %v2008, %v2011
  %v2013 = vsel %vm1655, %v2004, %v2012
  %v2014 = vrot.slane %v2012, 4
  %v2016 = vshrl.u32 %v1628, 16
  %v2018 = vrot.slane %v2016, 5
  %v2019 = vshll.u32 %v1628, 16
  %v2021 = vrot.slane %v2019, 6
  %v2022 = vor.u32 %v2018, %v2021
  %v2023 = vsel %vm1655, %v2014, %v2022
  %v2024 = vrot.slane %v2022, 4
  %v2026 = vshrl.u32 %v1629, 16
  %v2028 = vrot.slane %v2026, 5
  %v2029 = vshll.u32 %v1629, 16
  %v2031 = vrot.slane %v2029, 6
  %v2032 = vor.u32 %v2028, %v2031
  %v2033 = vsel %vm1655, %v2024, %v2032
  %v2034 = vrot.slane %v2032, 4
  %v2036 = vshrl.u32 %v1630, 16
  %v2038 = vrot.slane %v2036, 5
  %v2039 = vshll.u32 %v1630, 16
  %v2041 = vrot.slane %v2039, 6
  %v2042 = vor.u32 %v2038, %v2041
  %v2043 = vsel %vm1655, %v2034, %v2042
  %v2044 = vrot.slane %v2042, 4
  %v2046 = vshrl.u32 %v1631, 16
  %v2048 = vrot.slane %v2046, 5
  %v2049 = vshll.u32 %v1631, 16
  %v2051 = vrot.slane %v2049, 6
  %v2052 = vor.u32 %v2048, %v2051
  %v2053 = vsel %vm1655, %v2044, %v2052
  %v2054 = vrot.slane %v2052, 4
  %v2056 = vshrl.u32 %v1632, 16
  %v2058 = vrot.slane %v2056, 5
  %v2059 = vshll.u32 %v1632, 16
  %v2061 = vrot.slane %v2059, 6
  %v2062 = vor.u32 %v2058, %v2061
  %v2063 = vsel %vm1655, %v2054, %v2062
  %v2064 = vrot.slane %v2062, 4
  %v2066 = vshrl.u32 %v1633, 16
  %v2068 = vrot.slane %v2066, 5
  %v2069 = vshll.u32 %v1633, 16
  %v2071 = vrot.slane %v2069, 6
  %v2072 = vor.u32 %v2068, %v2071
  %v2073 = vsel %vm1655, %v2064, %v2072
  %v2074 = vrot.slane %v2072, 4
  %v2076 = vshrl.u32 %v1634, 16
  %v2078 = vrot.slane %v2076, 5
  %v2079 = vshll.u32 %v1634, 16
  %v2081 = vrot.slane %v2079, 6
  %v2082 = vor.u32 %v2078, %v2081
  %v2083 = vsel %vm1655, %v2074, %v2082
  %v2084 = vrot.slane %v2082, 4
  %v2086 = vshrl.u32 %v1635, 16
  %v2088 = vrot.slane %v2086, 5
  %v2089 = vshll.u32 %v1635, 16
  %v2091 = vrot.slane %v2089, 6
  %v2092 = vor.u32 %v2088, %v2091
  %v2093 = vsel %vm1655, %v2084, %v2092
  %v2094 = vrot.slane %v2092, 4
  %v2096 = vshrl.u32 %v1636, 16
  %v2098 = vrot.slane %v2096, 5
  %v2099 = vshll.u32 %v1636, 16
  %v2101 = vrot.slane %v2099, 6
  %v2102 = vor.u32 %v2098, %v2101
  %v2103 = vsel %vm1655, %v2094, %v2102
  %v2104 = vrot.slane %v2102, 4
  %v2106 = vshrl.u32 %v1637, 16
  %v2108 = vrot.slane %v2106, 5
  %v2109 = vshll.u32 %v1637, 16
  %v2111 = vrot.slane %v2109, 6
  %v2112 = vor.u32 %v2108, %v2111
  %v2113 = vsel %vm1655, %v2104, %v2112
  %v2114 = vrot.slane %v2112, 4
  %v2116 = vshrl.u32 %v1638, 16
  %v2118 = vrot.slane %v2116, 5
  %v2119 = vshll.u32 %v1638, 16
  %v2121 = vrot.slane %v2119, 6
  %v2122 = vor.u32 %v2118, %v2121
  %v2123 = vsel %vm1655, %v2114, %v2122
  %v2124 = vrot.slane %v2122, 4
  %v2126 = vshrl.u32 %v1639, 16
  %v2128 = vrot.slane %v2126, 5
  %v2129 = vshll.u32 %v1639, 16
  %v2131 = vrot.slane %v2129, 6
  %v2132 = vor.u32 %v2128, %v2131
  %v2133 = vsel %vm1655, %v2124, %v2132
  %v2134 = vrot.slane %v2132, 4
  %v2136 = vshrl.u32 %v1640, 16
  %v2138 = vrot.slane %v2136, 5
  %v2139 = vshll.u32 %v1640, 16
  %v2141 = vrot.slane %v2139, 6
  %v2142 = vor.u32 %v2138, %v2141
  %v2143 = vsel %vm1655, %v2134, %v2142
  %v2144 = vrot.slane %v2142, 4
  %v2146 = vshrl.u32 %v1641, 16
  %v2148 = vrot.slane %v2146, 5
  %v2149 = vshll.u32 %v1641, 16
  %v2151 = vrot.slane %v2149, 6
  %v2152 = vor.u32 %v2148, %v2151
  %v2153 = vsel %vm1655, %v2144, %v2152
  %v2154 = vrot.slane %v2152, 4
  %v2156 = vshrl.u32 %v1642, 16
  %v2158 = vrot.slane %v2156, 5
  %v2159 = vshll.u32 %v1642, 16
  %v2161 = vrot.slane %v2159, 6
  %v2162 = vor.u32 %v2158, %v2161
  %v2163 = vsel %vm1655, %v2154, %v2162
  %v2164 = vrot.slane %v2162, 4
  %v2166 = vshrl.u32 %v1643, 16
  %v2168 = vrot.slane %v2166, 5
  %v2169 = vshll.u32 %v1643, 16
  %v2171 = vrot.slane %v2169, 6
  %v2172 = vor.u32 %v2168, %v2171
  %v2173 = vsel %vm1655, %v2164, %v2172
  %v2174 = vrot.slane %v2172, 4
  %v2176 = vshrl.u32 %v1644, 16
  %v2178 = vrot.slane %v2176, 5
  %v2179 = vshll.u32 %v1644, 16
  %v2181 = vrot.slane %v2179, 6
  %v2182 = vor.u32 %v2178, %v2181
  %v2183 = vsel %vm1655, %v2174, %v2182
  %v2184 = vrot.slane %v2182, 4
  %v2186 = vshrl.u32 %v1645, 16
  %v2188 = vrot.slane %v2186, 5
  %v2189 = vshll.u32 %v1645, 16
  %v2191 = vrot.slane %v2189, 6
  %v2192 = vor.u32 %v2188, %v2191
  %v2193 = vsel %vm1655, %v2184, %v2192
  %v2194 = vrot.slane %v2192, 4
  %v2196 = vshrl.u32 %v1646, 16
  %v2198 = vrot.slane %v2196, 5
  %v2199 = vshll.u32 %v1646, 16
  %v2201 = vrot.slane %v2199, 6
  %v2202 = vor.u32 %v2198, %v2201
  %v2203 = vsel %vm1655, %v2194, %v2202
  %v2204 = vrot.slane %v2202, 4
  %v2206 = vshrl.u32 %v1647, 16
  %v2208 = vrot.slane %v2206, 5
  %v2209 = vshll.u32 %v1647, 16
  %v2211 = vrot.slane %v2209, 6
  %v2212 = vor.u32 %v2208, %v2211
  %v2213 = vsel %vm1655, %v2204, %v2212
  %v2214 = vrot.slane %v2212, 4
  %v2216 = vshrl.u32 %v1648, 16
  %v2218 = vrot.slane %v2216, 5
  %v2219 = vshll.u32 %v1648, 16
  %v2221 = vrot.slane %v2219, 6
  %v2222 = vor.u32 %v2218, %v2221
  %v2223 = vsel %vm1655, %v2214, %v2222
  %v2224 = vrot.slane %v2222, 4
  %v2226 = vshrl.u32 %v1649, 16
  %v2228 = vrot.slane %v2226, 5
  %v2229 = vshll.u32 %v1649, 16
  %v2231 = vrot.slane %v2229, 6
  %v2232 = vor.u32 %v2228, %v2231
  %v2233 = vsel %vm1655, %v2224, %v2232
  %v2234 = vrot.slane %v2232, 4
  %v2236 = vshrl.u32 %v1650, 16
  %v2238 = vrot.slane %v2236, 5
  %v2239 = vshll.u32 %v1650, 16
  %v2241 = vrot.slane %v2239, 6
  %v2242 = vor.u32 %v2238, %v2241
  %v2243 = vsel %vm1655, %v2234, %v2242
  %v2244 = vrot.slane %v2242, 4
  %v2246 = vshrl.u32 %v1651, 16
  %v2248 = vrot.slane %v2246, 5
  %v2249 = vshll.u32 %v1651, 16
  %v2251 = vrot.slane %v2249, 6
  %v2252 = vor.u32 %v2248, %v2251
  %v2253 = vsel %vm1655, %v2244, %v2252
  %v2254 = vrot.slane %v2252, 4
  %v2256 = vshrl.u32 %v1652, 16
  %v2258 = vrot.slane %v2256, 5
  %v2259 = vshll.u32 %v1652, 16
  %v2261 = vrot.slane %v2259, 6
  %v2262 = vor.u32 %v2258, %v2261
  %v2263 = vsel %vm1655, %v2254, %v2262
  %2264 = vrot.lane.b32.xlu0 %v1673, 36
  %v2265 = vpop.permute.xlu0 %2264
  %2266 = vrot.lane.b32.xlu0 %v1683, 36
  %v2267 = vpop.permute.xlu0 %2266
  %2268 = vrot.lane.b32.xlu0 %v1693, 36
  %v2269 = vpop.permute.xlu0 %2268
  %2270 = vrot.lane.b32.xlu0 %v1703, 36
  %v2271 = vpop.permute.xlu0 %2270
  %2272 = vrot.lane.b32.xlu0 %v1713, 36
  %v2273 = vpop.permute.xlu0 %2272
  %2274 = vrot.lane.b32.xlu0 %v1723, 36
  %v2275 = vpop.permute.xlu0 %2274
  %2276 = vrot.lane.b32.xlu0 %v1733, 36
  %v2277 = vpop.permute.xlu0 %2276
  %2278 = vrot.lane.b32.xlu0 %v1743, 36
  %v2279 = vpop.permute.xlu0 %2278
  %2280 = vrot.lane.b32.xlu0 %v1753, 36
  %v2281 = vpop.permute.xlu0 %2280
  %2282 = vrot.lane.b32.xlu0 %v1763, 36
  %v2283 = vpop.permute.xlu0 %2282
  %2284 = vrot.lane.b32.xlu0 %v1773, 36
  %v2285 = vpop.permute.xlu0 %2284
  %2286 = vrot.lane.b32.xlu0 %v1783, 36
  %v2287 = vpop.permute.xlu0 %2286
  %2288 = vrot.lane.b32.xlu0 %v1793, 36
  %v2289 = vpop.permute.xlu0 %2288
  %2290 = vrot.lane.b32.xlu0 %v1803, 36
  %v2291 = vpop.permute.xlu0 %2290
  %2292 = vrot.lane.b32.xlu0 %v1813, 36
  %v2293 = vpop.permute.xlu0 %2292
  %2294 = vrot.lane.b32.xlu0 %v1823, 36
  %v2295 = vpop.permute.xlu0 %2294
  %2296 = vrot.lane.b32.xlu0 %v1833, 36
  %v2297 = vpop.permute.xlu0 %2296
  %2298 = vrot.lane.b32.xlu0 %v1843, 36
  %v2299 = vpop.permute.xlu0 %2298
  %2300 = vrot.lane.b32.xlu0 %v1853, 36
  %v2301 = vpop.permute.xlu0 %2300
  %2302 = vrot.lane.b32.xlu0 %v1863, 36
  %v2303 = vpop.permute.xlu0 %2302
  %2304 = vrot.lane.b32.xlu0 %v1873, 36
  %v2305 = vpop.permute.xlu0 %2304
  %2306 = vrot.lane.b32.xlu0 %v1883, 36
  %v2307 = vpop.permute.xlu0 %2306
  %2308 = vrot.lane.b32.xlu0 %v1893, 36
  %v2309 = vpop.permute.xlu0 %2308
  %2310 = vrot.lane.b32.xlu0 %v1903, 36
  %v2311 = vpop.permute.xlu0 %2310
  %2312 = vrot.lane.b32.xlu0 %v1913, 36
  %v2313 = vpop.permute.xlu0 %2312
  %2314 = vrot.lane.b32.xlu0 %v1923, 36
  %v2315 = vpop.permute.xlu0 %2314
  %2316 = vrot.lane.b32.xlu0 %v1933, 36
  %v2317 = vpop.permute.xlu0 %2316
  %2318 = vrot.lane.b32.xlu0 %v1943, 36
  %v2319 = vpop.permute.xlu0 %2318
  %2320 = vrot.lane.b32.xlu0 %v1953, 36
  %v2321 = vpop.permute.xlu0 %2320
  %2322 = vrot.lane.b32.xlu0 %v1963, 36
  %v2323 = vpop.permute.xlu0 %2322
  %2324 = vrot.lane.b32.xlu0 %v1973, 36
  %v2325 = vpop.permute.xlu0 %2324
  %2326 = vrot.lane.b32.xlu0 %v1983, 36
  %v2327 = vpop.permute.xlu0 %2326
  %2328 = vrot.lane.b32.xlu0 %v1993, 36
  %v2329 = vpop.permute.xlu0 %2328
  %2330 = vrot.lane.b32.xlu0 %v2003, 36
  %v2331 = vpop.permute.xlu0 %2330
  %2332 = vrot.lane.b32.xlu0 %v2013, 36
  %v2333 = vpop.permute.xlu0 %2332
  %2334 = vrot.lane.b32.xlu0 %v2023, 36
  %v2335 = vpop.permute.xlu0 %2334
  %2336 = vrot.lane.b32.xlu0 %v2033, 36
  %v2337 = vpop.permute.xlu0 %2336
  %2338 = vrot.lane.b32.xlu0 %v2043, 36
  %v2339 = vpop.permute.xlu0 %2338
  %2340 = vrot.lane.b32.xlu0 %v2053, 36
  %v2341 = vpop.permute.xlu0 %2340
  %2342 = vrot.lane.b32.xlu0 %v2063, 36
  %v2343 = vpop.permute.xlu0 %2342
  %2344 = vrot.lane.b32.xlu0 %v2073, 36
  %v2345 = vpop.permute.xlu0 %2344
  %2346 = vrot.lane.b32.xlu0 %v2083, 36
  %v2347 = vpop.permute.xlu0 %2346
  %2348 = vrot.lane.b32.xlu0 %v2093, 36
  %v2349 = vpop.permute.xlu0 %2348
  %2350 = vrot.lane.b32.xlu0 %v2103, 36
  %v2351 = vpop.permute.xlu0 %2350
  %2352 = vrot.lane.b32.xlu0 %v2113, 36
  %v2353 = vpop.permute.xlu0 %2352
  %2354 = vrot.lane.b32.xlu0 %v2123, 36
  %v2355 = vpop.permute.xlu0 %2354
  %2356 = vrot.lane.b32.xlu0 %v2133, 36
  %v2357 = vpop.permute.xlu0 %2356
  %2358 = vrot.lane.b32.xlu0 %v2143, 36
  %v2359 = vpop.permute.xlu0 %2358
  %2360 = vrot.lane.b32.xlu0 %v2153, 36
  %v2361 = vpop.permute.xlu0 %2360
  %2362 = vrot.lane.b32.xlu0 %v2163, 36
  %v2363 = vpop.permute.xlu0 %2362
  %2364 = vrot.lane.b32.xlu0 %v2173, 36
  %v2365 = vpop.permute.xlu0 %2364
  %2366 = vrot.lane.b32.xlu0 %v2183, 36
  %v2367 = vpop.permute.xlu0 %2366
  %2368 = vrot.lane.b32.xlu0 %v2193, 36
  %v2369 = vpop.permute.xlu0 %2368
  %2370 = vrot.lane.b32.xlu0 %v2203, 36
  %v2371 = vpop.permute.xlu0 %2370
  %2372 = vrot.lane.b32.xlu0 %v2213, 36
  %v2373 = vpop.permute.xlu0 %2372
  %2374 = vrot.lane.b32.xlu0 %v2223, 36
  %v2375 = vpop.permute.xlu0 %2374
  %2376 = vrot.lane.b32.xlu0 %v2233, 36
  %v2377 = vpop.permute.xlu0 %2376
  %2378 = vrot.lane.b32.xlu0 %v2243, 36
  %v2379 = vpop.permute.xlu0 %2378
  %2380 = vrot.lane.b32.xlu0 %v2253, 36
  %v2381 = vpop.permute.xlu0 %2380
  %2382 = vrot.lane.b32.xlu0 %v2263, 36
  %v2383 = vpop.permute.xlu0 %2382
  %vm2444 = vcmask 388384
  %2445 = vst.msk [vmem:[#allocation2] sm:$0xf] %vm2444, %v2265
  %2446 = vst.msk [vmem:[#allocation2 + $0x4] sm:$0xf] %vm2444, %v2267
  %2447 = vst.msk [vmem:[#allocation2 + $0x8] sm:$0xf] %vm2444, %v2269
  %2448 = vst.msk [vmem:[#allocation2 + $0xc] sm:$0xf] %vm2444, %v2271
  %2449 = vst.msk [vmem:[#allocation2 + $0x10] sm:$0xf] %vm2444, %v2273
  %2450 = vst.msk [vmem:[#allocation2 + $0x14] sm:$0xf] %vm2444, %v2275
  %2451 = vst.msk [vmem:[#allocation2 + $0x18] sm:$0xf] %vm2444, %v2277
  %2452 = vst.msk [vmem:[#allocation2 + $0x1c] sm:$0xf] %vm2444, %v2279
  %2453 = vst.msk [vmem:[#allocation2 + $0x20] sm:$0xf] %vm2444, %v2281
  %2454 = vst.msk [vmem:[#allocation2 + $0x24] sm:$0xf] %vm2444, %v2283
  %2455 = vst.msk [vmem:[#allocation2 + $0x28] sm:$0xf] %vm2444, %v2285
  %2456 = vst.msk [vmem:[#allocation2 + $0x2c] sm:$0xf] %vm2444, %v2287
  %2457 = vst.msk [vmem:[#allocation2 + $0x30] sm:$0xf] %vm2444, %v2289
  %2458 = vst.msk [vmem:[#allocation2 + $0x34] sm:$0xf] %vm2444, %v2291
  %2459 = vst.msk [vmem:[#allocation2 + $0x38] sm:$0xf] %vm2444, %v2293
  %2460 = vst.msk [vmem:[#allocation2 + $0x3c] sm:$0xf] %vm2444, %v2295
  %2461 = vst.msk [vmem:[#allocation2 + $0x40] sm:$0xf] %vm2444, %v2297
  %2462 = vst.msk [vmem:[#allocation2 + $0x44] sm:$0xf] %vm2444, %v2299
  %2463 = vst.msk [vmem:[#allocation2 + $0x48] sm:$0xf] %vm2444, %v2301
  %2464 = vst.msk [vmem:[#allocation2 + $0x4c] sm:$0xf] %vm2444, %v2303
  %2465 = vst.msk [vmem:[#allocation2 + $0x50] sm:$0xf] %vm2444, %v2305
  %2466 = vst.msk [vmem:[#allocation2 + $0x54] sm:$0xf] %vm2444, %v2307
  %2467 = vst.msk [vmem:[#allocation2 + $0x58] sm:$0xf] %vm2444, %v2309
  %2468 = vst.msk [vmem:[#allocation2 + $0x5c] sm:$0xf] %vm2444, %v2311
  %2469 = vst.msk [vmem:[#allocation2 + $0x60] sm:$0xf] %vm2444, %v2313
  %2470 = vst.msk [vmem:[#allocation2 + $0x64] sm:$0xf] %vm2444, %v2315
  %2471 = vst.msk [vmem:[#allocation2 + $0x68] sm:$0xf] %vm2444, %v2317
  %2472 = vst.msk [vmem:[#allocation2 + $0x6c] sm:$0xf] %vm2444, %v2319
  %2473 = vst.msk [vmem:[#allocation2 + $0x70] sm:$0xf] %vm2444, %v2321
  %2474 = vst.msk [vmem:[#allocation2 + $0x74] sm:$0xf] %vm2444, %v2323
  %2475 = vst.msk [vmem:[#allocation2 + $0x78] sm:$0xf] %vm2444, %v2325
  %2476 = vst.msk [vmem:[#allocation2 + $0x7c] sm:$0xf] %vm2444, %v2327
  %2477 = vst.msk [vmem:[#allocation2 + $0x80] sm:$0xf] %vm2444, %v2329
  %2478 = vst.msk [vmem:[#allocation2 + $0x84] sm:$0xf] %vm2444, %v2331
  %2479 = vst.msk [vmem:[#allocation2 + $0x88] sm:$0xf] %vm2444, %v2333
  %2480 = vst.msk [vmem:[#allocation2 + $0x8c] sm:$0xf] %vm2444, %v2335
  %2481 = vst.msk [vmem:[#allocation2 + $0x90] sm:$0xf] %vm2444, %v2337
  %2482 = vst.msk [vmem:[#allocation2 + $0x94] sm:$0xf] %vm2444, %v2339
  %2483 = vst.msk [vmem:[#allocation2 + $0x98] sm:$0xf] %vm2444, %v2341
  %2484 = vst.msk [vmem:[#allocation2 + $0x9c] sm:$0xf] %vm2444, %v2343
  %2485 = vst.msk [vmem:[#allocation2 + $0xa0] sm:$0xf] %vm2444, %v2345
  %2486 = vst.msk [vmem:[#allocation2 + $0xa4] sm:$0xf] %vm2444, %v2347
  %2487 = vst.msk [vmem:[#allocation2 + $0xa8] sm:$0xf] %vm2444, %v2349
  %2488 = vst.msk [vmem:[#allocation2 + $0xac] sm:$0xf] %vm2444, %v2351
  %2489 = vst.msk [vmem:[#allocation2 + $0xb0] sm:$0xf] %vm2444, %v2353
  %2490 = vst.msk [vmem:[#allocation2 + $0xb4] sm:$0xf] %vm2444, %v2355
  %2491 = vst.msk [vmem:[#allocation2 + $0xb8] sm:$0xf] %vm2444, %v2357
  %2492 = vst.msk [vmem:[#allocation2 + $0xbc] sm:$0xf] %vm2444, %v2359
  %2493 = vst.msk [vmem:[#allocation2 + $0xc0] sm:$0xf] %vm2444, %v2361
  %2494 = vst.msk [vmem:[#allocation2 + $0xc4] sm:$0xf] %vm2444, %v2363
  %2495 = vst.msk [vmem:[#allocation2 + $0xc8] sm:$0xf] %vm2444, %v2365
  %2496 = vst.msk [vmem:[#allocation2 + $0xcc] sm:$0xf] %vm2444, %v2367
  %2497 = vst.msk [vmem:[#allocation2 + $0xd0] sm:$0xf] %vm2444, %v2369
  %2498 = vst.msk [vmem:[#allocation2 + $0xd4] sm:$0xf] %vm2444, %v2371
  %2499 = vst.msk [vmem:[#allocation2 + $0xd8] sm:$0xf] %vm2444, %v2373
  %2500 = vst.msk [vmem:[#allocation2 + $0xdc] sm:$0xf] %vm2444, %v2375
  %2501 = vst.msk [vmem:[#allocation2 + $0xe0] sm:$0xf] %vm2444, %v2377
  %2502 = vst.msk [vmem:[#allocation2 + $0xe4] sm:$0xf] %vm2444, %v2379
  %2503 = vst.msk [vmem:[#allocation2 + $0xe8] sm:$0xf] %vm2444, %v2381
  %2504 = vst.msk [vmem:[#allocation2 + $0xec] sm:$0xf] %vm2444, %v2383
  %v2505 = vld [vmem:[%s0] sm:$0xc]
  %v2506 = vld [vmem:[%s0 + $0x4] sm:$0xf]
  %v2507 = vld [vmem:[%s0 + $0x8] sm:$0xf]
  %v2508 = vld [vmem:[%s0 + $0xc] sm:$0xf]
  %v2509 = vld [vmem:[%s0 + $0x10] sm:$0xf]
  %v2510 = vld [vmem:[%s0 + $0x14] sm:$0xf]
  %v2511 = vld [vmem:[%s0 + $0x18] sm:$0xf]
  %v2512 = vld [vmem:[%s0 + $0x1c] sm:$0xf]
  %v2513 = vld [vmem:[%s0 + $0x20] sm:$0xf]
  %v2514 = vld [vmem:[%s0 + $0x24] sm:$0xf]
  %v2515 = vld [vmem:[%s0 + $0x28] sm:$0xf]
  %v2516 = vld [vmem:[%s0 + $0x2c] sm:$0xf]
  %v2517 = vld [vmem:[%s0 + $0x30] sm:$0xf]
  %v2518 = vld [vmem:[%s0 + $0x34] sm:$0xf]
  %v2519 = vld [vmem:[%s0 + $0x38] sm:$0xf]
  %v2520 = vld [vmem:[%s0 + $0x3c] sm:$0xf]
  %v2521 = vld [vmem:[%s0 + $0x40] sm:$0xf]
  %v2522 = vld [vmem:[%s0 + $0x44] sm:$0xf]
  %v2523 = vld [vmem:[%s0 + $0x48] sm:$0xf]
  %v2524 = vld [vmem:[%s0 + $0x4c] sm:$0xf]
  %v2525 = vld [vmem:[%s0 + $0x50] sm:$0xf]
  %v2526 = vld [vmem:[%s0 + $0x54] sm:$0xf]
  %v2527 = vld [vmem:[%s0 + $0x58] sm:$0xf]
  %v2528 = vld [vmem:[%s0 + $0x5c] sm:$0xf]
  %v2529 = vld [vmem:[%s0 + $0x60] sm:$0xf]
  %v2530 = vld [vmem:[%s0 + $0x64] sm:$0xf]
  %v2531 = vld [vmem:[%s0 + $0x68] sm:$0xf]
  %v2532 = vld [vmem:[%s0 + $0x6c] sm:$0xf]
  %v2533 = vld [vmem:[%s0 + $0x70] sm:$0xf]
  %v2534 = vld [vmem:[%s0 + $0x74] sm:$0xf]
  %v2535 = vld [vmem:[%s0 + $0x78] sm:$0xf]
  %v2536 = vld [vmem:[%s0 + $0x7c] sm:$0xf]
  %v2537 = vld [vmem:[%s0 + $0x80] sm:$0xf]
  %v2538 = vld [vmem:[%s0 + $0x84] sm:$0xf]
  %v2539 = vld [vmem:[%s0 + $0x88] sm:$0xf]
  %v2540 = vld [vmem:[%s0 + $0x8c] sm:$0xf]
  %v2541 = vld [vmem:[%s0 + $0x90] sm:$0xf]
  %v2542 = vld [vmem:[%s0 + $0x94] sm:$0xf]
  %v2543 = vld [vmem:[%s0 + $0x98] sm:$0xf]
  %v2544 = vld [vmem:[%s0 + $0x9c] sm:$0xf]
  %v2545 = vld [vmem:[%s0 + $0xa0] sm:$0xf]
  %v2546 = vld [vmem:[%s0 + $0xa4] sm:$0xf]
  %v2547 = vld [vmem:[%s0 + $0xa8] sm:$0xf]
  %v2548 = vld [vmem:[%s0 + $0xac] sm:$0xf]
  %v2549 = vld [vmem:[%s0 + $0xb0] sm:$0xf]
  %v2550 = vld [vmem:[%s0 + $0xb4] sm:$0xf]
  %v2551 = vld [vmem:[%s0 + $0xb8] sm:$0xf]
  %v2552 = vld [vmem:[%s0 + $0xbc] sm:$0xf]
  %v2553 = vld [vmem:[%s0 + $0xc0] sm:$0xf]
  %v2554 = vld [vmem:[%s0 + $0xc4] sm:$0xf]
  %v2555 = vld [vmem:[%s0 + $0xc8] sm:$0xf]
  %v2556 = vld [vmem:[%s0 + $0xcc] sm:$0xf]
  %v2557 = vld [vmem:[%s0 + $0xd0] sm:$0xf]
  %v2558 = vld [vmem:[%s0 + $0xd4] sm:$0xf]
  %v2559 = vld [vmem:[%s0 + $0xd8] sm:$0xf]
  %v2560 = vld [vmem:[%s0 + $0xdc] sm:$0xf]
  %v2561 = vld [vmem:[%s0 + $0xe0] sm:$0xf]
  %v2562 = vld [vmem:[%s0 + $0xe4] sm:$0xf]
  %v2563 = vld [vmem:[%s0 + $0xe8] sm:$0xf]
  %v2564 = vld [vmem:[%s0 + $0xec] sm:$0xf]
  %v2565 = vld [vmem:[%s0 + $0xf0] sm:$0x3]
  %vm2627 = vcmask 1041408
  %vm2628 = vcmask 1045508
  %vm2629 = vmor %vm2627, %vm2628
  %v2630 = vrot.slane %v2505, 6
  %v2631 = vrot.slane %v2630, 4
  %v2632 = vrot.slane %v2506, 6
  %v2633 = vsel %vm2629, %v2631, %v2632
  %v2634 = vrot.slane %v2632, 4
  %v2635 = vrot.slane %v2507, 6
  %v2636 = vsel %vm2629, %v2634, %v2635
  %v2637 = vrot.slane %v2635, 4
  %v2638 = vrot.slane %v2508, 6
  %v2639 = vsel %vm2629, %v2637, %v2638
  %v2640 = vrot.slane %v2638, 4
  %v2641 = vrot.slane %v2509, 6
  %v2642 = vsel %vm2629, %v2640, %v2641
  %v2643 = vrot.slane %v2641, 4
  %v2644 = vrot.slane %v2510, 6
  %v2645 = vsel %vm2629, %v2643, %v2644
  %v2646 = vrot.slane %v2644, 4
  %v2647 = vrot.slane %v2511, 6
  %v2648 = vsel %vm2629, %v2646, %v2647
  %v2649 = vrot.slane %v2647, 4
  %v2650 = vrot.slane %v2512, 6
  %v2651 = vsel %vm2629, %v2649, %v2650
  %v2652 = vrot.slane %v2650, 4
  %v2653 = vrot.slane %v2513, 6
  %v2654 = vsel %vm2629, %v2652, %v2653
  %v2655 = vrot.slane %v2653, 4
  %v2656 = vrot.slane %v2514, 6
  %v2657 = vsel %vm2629, %v2655, %v2656
  %v2658 = vrot.slane %v2656, 4
  %v2659 = vrot.slane %v2515, 6
  %v2660 = vsel %vm2629, %v2658, %v2659
  %v2661 = vrot.slane %v2659, 4
  %v2662 = vrot.slane %v2516, 6
  %v2663 = vsel %vm2629, %v2661, %v2662
  %v2664 = vrot.slane %v2662, 4
  %v2665 = vrot.slane %v2517, 6
  %v2666 = vsel %vm2629, %v2664, %v2665
  %v2667 = vrot.slane %v2665, 4
  %v2668 = vrot.slane %v2518, 6
  %v2669 = vsel %vm2629, %v2667, %v2668
  %v2670 = vrot.slane %v2668, 4
  %v2671 = vrot.slane %v2519, 6
  %v2672 = vsel %vm2629, %v2670, %v2671
  %v2673 = vrot.slane %v2671, 4
  %v2674 = vrot.slane %v2520, 6
  %v2675 = vsel %vm2629, %v2673, %v2674
  %v2676 = vrot.slane %v2674, 4
  %v2677 = vrot.slane %v2521, 6
  %v2678 = vsel %vm2629, %v2676, %v2677
  %v2679 = vrot.slane %v2677, 4
  %v2680 = vrot.slane %v2522, 6
  %v2681 = vsel %vm2629, %v2679, %v2680
  %v2682 = vrot.slane %v2680, 4
  %v2683 = vrot.slane %v2523, 6
  %v2684 = vsel %vm2629, %v2682, %v2683
  %v2685 = vrot.slane %v2683, 4
  %v2686 = vrot.slane %v2524, 6
  %v2687 = vsel %vm2629, %v2685, %v2686
  %v2688 = vrot.slane %v2686, 4
  %v2689 = vrot.slane %v2525, 6
  %v2690 = vsel %vm2629, %v2688, %v2689
  %v2691 = vrot.slane %v2689, 4
  %v2692 = vrot.slane %v2526, 6
  %v2693 = vsel %vm2629, %v2691, %v2692
  %v2694 = vrot.slane %v2692, 4
  %v2695 = vrot.slane %v2527, 6
  %v2696 = vsel %vm2629, %v2694, %v2695
  %v2697 = vrot.slane %v2695, 4
  %v2698 = vrot.slane %v2528, 6
  %v2699 = vsel %vm2629, %v2697, %v2698
  %v2700 = vrot.slane %v2698, 4
  %v2701 = vrot.slane %v2529, 6
  %v2702 = vsel %vm2629, %v2700, %v2701
  %v2703 = vrot.slane %v2701, 4
  %v2704 = vrot.slane %v2530, 6
  %v2705 = vsel %vm2629, %v2703, %v2704
  %v2706 = vrot.slane %v2704, 4
  %v2707 = vrot.slane %v2531, 6
  %v2708 = vsel %vm2629, %v2706, %v2707
  %v2709 = vrot.slane %v2707, 4
  %v2710 = vrot.slane %v2532, 6
  %v2711 = vsel %vm2629, %v2709, %v2710
  %v2712 = vrot.slane %v2710, 4
  %v2713 = vrot.slane %v2533, 6
  %v2714 = vsel %vm2629, %v2712, %v2713
  %v2715 = vrot.slane %v2713, 4
  %v2716 = vrot.slane %v2534, 6
  %v2717 = vsel %vm2629, %v2715, %v2716
  %v2718 = vrot.slane %v2716, 4
  %v2719 = vrot.slane %v2535, 6
  %v2720 = vsel %vm2629, %v2718, %v2719
  %v2721 = vrot.slane %v2719, 4
  %v2722 = vrot.slane %v2536, 6
  %v2723 = vsel %vm2629, %v2721, %v2722
  %v2724 = vrot.slane %v2722, 4
  %v2725 = vrot.slane %v2537, 6
  %v2726 = vsel %vm2629, %v2724, %v2725
  %v2727 = vrot.slane %v2725, 4
  %v2728 = vrot.slane %v2538, 6
  %v2729 = vsel %vm2629, %v2727, %v2728
  %v2730 = vrot.slane %v2728, 4
  %v2731 = vrot.slane %v2539, 6
  %v2732 = vsel %vm2629, %v2730, %v2731
  %v2733 = vrot.slane %v2731, 4
  %v2734 = vrot.slane %v2540, 6
  %v2735 = vsel %vm2629, %v2733, %v2734
  %v2736 = vrot.slane %v2734, 4
  %v2737 = vrot.slane %v2541, 6
  %v2738 = vsel %vm2629, %v2736, %v2737
  %v2739 = vrot.slane %v2737, 4
  %v2740 = vrot.slane %v2542, 6
  %v2741 = vsel %vm2629, %v2739, %v2740
  %v2742 = vrot.slane %v2740, 4
  %v2743 = vrot.slane %v2543, 6
  %v2744 = vsel %vm2629, %v2742, %v2743
  %v2745 = vrot.slane %v2743, 4
  %v2746 = vrot.slane %v2544, 6
  %v2747 = vsel %vm2629, %v2745, %v2746
  %v2748 = vrot.slane %v2746, 4
  %v2749 = vrot.slane %v2545, 6
  %v2750 = vsel %vm2629, %v2748, %v2749
  %v2751 = vrot.slane %v2749, 4
  %v2752 = vrot.slane %v2546, 6
  %v2753 = vsel %vm2629, %v2751, %v2752
  %v2754 = vrot.slane %v2752, 4
  %v2755 = vrot.slane %v2547, 6
  %v2756 = vsel %vm2629, %v2754, %v2755
  %v2757 = vrot.slane %v2755, 4
  %v2758 = vrot.slane %v2548, 6
  %v2759 = vsel %vm2629, %v2757, %v2758
  %v2760 = vrot.slane %v2758, 4
  %v2761 = vrot.slane %v2549, 6
  %v2762 = vsel %vm2629, %v2760, %v2761
  %v2763 = vrot.slane %v2761, 4
  %v2764 = vrot.slane %v2550, 6
  %v2765 = vsel %vm2629, %v2763, %v2764
  %v2766 = vrot.slane %v2764, 4
  %v2767 = vrot.slane %v2551, 6
  %v2768 = vsel %vm2629, %v2766, %v2767
  %v2769 = vrot.slane %v2767, 4
  %v2770 = vrot.slane %v2552, 6
  %v2771 = vsel %vm2629, %v2769, %v2770
  %v2772 = vrot.slane %v2770, 4
  %v2773 = vrot.slane %v2553, 6
  %v2774 = vsel %vm2629, %v2772, %v2773
  %v2775 = vrot.slane %v2773, 4
  %v2776 = vrot.slane %v2554, 6
  %v2777 = vsel %vm2629, %v2775, %v2776
  %v2778 = vrot.slane %v2776, 4
  %v2779 = vrot.slane %v2555, 6
  %v2780 = vsel %vm2629, %v2778, %v2779
  %v2781 = vrot.slane %v2779, 4
  %v2782 = vrot.slane %v2556, 6
  %v2783 = vsel %vm2629, %v2781, %v2782
  %v2784 = vrot.slane %v2782, 4
  %v2785 = vrot.slane %v2557, 6
  %v2786 = vsel %vm2629, %v2784, %v2785
  %v2787 = vrot.slane %v2785, 4
  %v2788 = vrot.slane %v2558, 6
  %v2789 = vsel %vm2629, %v2787, %v2788
  %v2790 = vrot.slane %v2788, 4
  %v2791 = vrot.slane %v2559, 6
  %v2792 = vsel %vm2629, %v2790, %v2791
  %v2793 = vrot.slane %v2791, 4
  %v2794 = vrot.slane %v2560, 6
  %v2795 = vsel %vm2629, %v2793, %v2794
  %v2796 = vrot.slane %v2794, 4
  %v2797 = vrot.slane %v2561, 6
  %v2798 = vsel %vm2629, %v2796, %v2797
  %v2799 = vrot.slane %v2797, 4
  %v2800 = vrot.slane %v2562, 6
  %v2801 = vsel %vm2629, %v2799, %v2800
  %v2802 = vrot.slane %v2800, 4
  %v2803 = vrot.slane %v2563, 6
  %v2804 = vsel %vm2629, %v2802, %v2803
  %v2805 = vrot.slane %v2803, 4
  %v2806 = vrot.slane %v2564, 6
  %v2807 = vsel %vm2629, %v2805, %v2806
  %v2808 = vrot.slane %v2806, 4
  %v2809 = vrot.slane %v2565, 6
  %v2810 = vsel %vm2629, %v2808, %v2809
  %2811 = vrot.lane.b32.xlu0 %v2633, 48
  %v2812 = vpop.permute.xlu0 %2811
  %2813 = vrot.lane.b32.xlu0 %v2636, 48
  %v2814 = vpop.permute.xlu0 %2813
  %2815 = vrot.lane.b32.xlu0 %v2639, 48
  %v2816 = vpop.permute.xlu0 %2815
  %2817 = vrot.lane.b32.xlu0 %v2642, 48
  %v2818 = vpop.permute.xlu0 %2817
  %2819 = vrot.lane.b32.xlu0 %v2645, 48
  %v2820 = vpop.permute.xlu0 %2819
  %2821 = vrot.lane.b32.xlu0 %v2648, 48
  %v2822 = vpop.permute.xlu0 %2821
  %2823 = vrot.lane.b32.xlu0 %v2651, 48
  %v2824 = vpop.permute.xlu0 %2823
  %2825 = vrot.lane.b32.xlu0 %v2654, 48
  %v2826 = vpop.permute.xlu0 %2825
  %2827 = vrot.lane.b32.xlu0 %v2657, 48
  %v2828 = vpop.permute.xlu0 %2827
  %2829 = vrot.lane.b32.xlu0 %v2660, 48
  %v2830 = vpop.permute.xlu0 %2829
  %2831 = vrot.lane.b32.xlu0 %v2663, 48
  %v2832 = vpop.permute.xlu0 %2831
  %2833 = vrot.lane.b32.xlu0 %v2666, 48
  %v2834 = vpop.permute.xlu0 %2833
  %2835 = vrot.lane.b32.xlu0 %v2669, 48
  %v2836 = vpop.permute.xlu0 %2835
  %2837 = vrot.lane.b32.xlu0 %v2672, 48
  %v2838 = vpop.permute.xlu0 %2837
  %2839 = vrot.lane.b32.xlu0 %v2675, 48
  %v2840 = vpop.permute.xlu0 %2839
  %2841 = vrot.lane.b32.xlu0 %v2678, 48
  %v2842 = vpop.permute.xlu0 %2841
  %2843 = vrot.lane.b32.xlu0 %v2681, 48
  %v2844 = vpop.permute.xlu0 %2843
  %2845 = vrot.lane.b32.xlu0 %v2684, 48
  %v2846 = vpop.permute.xlu0 %2845
  %2847 = vrot.lane.b32.xlu0 %v2687, 48
  %v2848 = vpop.permute.xlu0 %2847
  %2849 = vrot.lane.b32.xlu0 %v2690, 48
  %v2850 = vpop.permute.xlu0 %2849
  %2851 = vrot.lane.b32.xlu0 %v2693, 48
  %v2852 = vpop.permute.xlu0 %2851
  %2853 = vrot.lane.b32.xlu0 %v2696, 48
  %v2854 = vpop.permute.xlu0 %2853
  %2855 = vrot.lane.b32.xlu0 %v2699, 48
  %v2856 = vpop.permute.xlu0 %2855
  %2857 = vrot.lane.b32.xlu0 %v2702, 48
  %v2858 = vpop.permute.xlu0 %2857
  %2859 = vrot.lane.b32.xlu0 %v2705, 48
  %v2860 = vpop.permute.xlu0 %2859
  %2861 = vrot.lane.b32.xlu0 %v2708, 48
  %v2862 = vpop.permute.xlu0 %2861
  %2863 = vrot.lane.b32.xlu0 %v2711, 48
  %v2864 = vpop.permute.xlu0 %2863
  %2865 = vrot.lane.b32.xlu0 %v2714, 48
  %v2866 = vpop.permute.xlu0 %2865
  %2867 = vrot.lane.b32.xlu0 %v2717, 48
  %v2868 = vpop.permute.xlu0 %2867
  %2869 = vrot.lane.b32.xlu0 %v2720, 48
  %v2870 = vpop.permute.xlu0 %2869
  %2871 = vrot.lane.b32.xlu0 %v2723, 48
  %v2872 = vpop.permute.xlu0 %2871
  %2873 = vrot.lane.b32.xlu0 %v2726, 48
  %v2874 = vpop.permute.xlu0 %2873
  %2875 = vrot.lane.b32.xlu0 %v2729, 48
  %v2876 = vpop.permute.xlu0 %2875
  %2877 = vrot.lane.b32.xlu0 %v2732, 48
  %v2878 = vpop.permute.xlu0 %2877
  %2879 = vrot.lane.b32.xlu0 %v2735, 48
  %v2880 = vpop.permute.xlu0 %2879
  %2881 = vrot.lane.b32.xlu0 %v2738, 48
  %v2882 = vpop.permute.xlu0 %2881
  %2883 = vrot.lane.b32.xlu0 %v2741, 48
  %v2884 = vpop.permute.xlu0 %2883
  %2885 = vrot.lane.b32.xlu0 %v2744, 48
  %v2886 = vpop.permute.xlu0 %2885
  %2887 = vrot.lane.b32.xlu0 %v2747, 48
  %v2888 = vpop.permute.xlu0 %2887
  %2889 = vrot.lane.b32.xlu0 %v2750, 48
  %v2890 = vpop.permute.xlu0 %2889
  %2891 = vrot.lane.b32.xlu0 %v2753, 48
  %v2892 = vpop.permute.xlu0 %2891
  %2893 = vrot.lane.b32.xlu0 %v2756, 48
  %v2894 = vpop.permute.xlu0 %2893
  %2895 = vrot.lane.b32.xlu0 %v2759, 48
  %v2896 = vpop.permute.xlu0 %2895
  %2897 = vrot.lane.b32.xlu0 %v2762, 48
  %v2898 = vpop.permute.xlu0 %2897
  %2899 = vrot.lane.b32.xlu0 %v2765, 48
  %v2900 = vpop.permute.xlu0 %2899
  %2901 = vrot.lane.b32.xlu0 %v2768, 48
  %v2902 = vpop.permute.xlu0 %2901
  %2903 = vrot.lane.b32.xlu0 %v2771, 48
  %v2904 = vpop.permute.xlu0 %2903
  %2905 = vrot.lane.b32.xlu0 %v2774, 48
  %v2906 = vpop.permute.xlu0 %2905
  %2907 = vrot.lane.b32.xlu0 %v2777, 48
  %v2908 = vpop.permute.xlu0 %2907
  %2909 = vrot.lane.b32.xlu0 %v2780, 48
  %v2910 = vpop.permute.xlu0 %2909
  %2911 = vrot.lane.b32.xlu0 %v2783, 48
  %v2912 = vpop.permute.xlu0 %2911
  %2913 = vrot.lane.b32.xlu0 %v2786, 48
  %v2914 = vpop.permute.xlu0 %2913
  %2915 = vrot.lane.b32.xlu0 %v2789, 48
  %v2916 = vpop.permute.xlu0 %2915
  %2917 = vrot.lane.b32.xlu0 %v2792, 48
  %v2918 = vpop.permute.xlu0 %2917
  %2919 = vrot.lane.b32.xlu0 %v2795, 48
  %v2920 = vpop.permute.xlu0 %2919
  %2921 = vrot.lane.b32.xlu0 %v2798, 48
  %v2922 = vpop.permute.xlu0 %2921
  %2923 = vrot.lane.b32.xlu0 %v2801, 48
  %v2924 = vpop.permute.xlu0 %2923
  %2925 = vrot.lane.b32.xlu0 %v2804, 48
  %v2926 = vpop.permute.xlu0 %2925
  %2927 = vrot.lane.b32.xlu0 %v2807, 48
  %v2928 = vpop.permute.xlu0 %2927
  %2929 = vrot.lane.b32.xlu0 %v2810, 48
  %v2930 = vpop.permute.xlu0 %2929
  %vm2991 = vcmask 486784
  %2992 = vst.msk [vmem:[#allocation2] sm:$0xf] %vm2991, %v2812
  %2993 = vst.msk [vmem:[#allocation2 + $0x4] sm:$0xf] %vm2991, %v2814
  %2994 = vst.msk [vmem:[#allocation2 + $0x8] sm:$0xf] %vm2991, %v2816
  %2995 = vst.msk [vmem:[#allocation2 + $0xc] sm:$0xf] %vm2991, %v2818
  %2996 = vst.msk [vmem:[#allocation2 + $0x10] sm:$0xf] %vm2991, %v2820
  %2997 = vst.msk [vmem:[#allocation2 + $0x14] sm:$0xf] %vm2991, %v2822
  %2998 = vst.msk [vmem:[#allocation2 + $0x18] sm:$0xf] %vm2991, %v2824
  %2999 = vst.msk [vmem:[#allocation2 + $0x1c] sm:$0xf] %vm2991, %v2826
  %3000 = vst.msk [vmem:[#allocation2 + $0x20] sm:$0xf] %vm2991, %v2828
  %3001 = vst.msk [vmem:[#allocation2 + $0x24] sm:$0xf] %vm2991, %v2830
  %3002 = vst.msk [vmem:[#allocation2 + $0x28] sm:$0xf] %vm2991, %v2832
  %3003 = vst.msk [vmem:[#allocation2 + $0x2c] sm:$0xf] %vm2991, %v2834
  %3004 = vst.msk [vmem:[#allocation2 + $0x30] sm:$0xf] %vm2991, %v2836
  %3005 = vst.msk [vmem:[#allocation2 + $0x34] sm:$0xf] %vm2991, %v2838
  %3006 = vst.msk [vmem:[#allocation2 + $0x38] sm:$0xf] %vm2991, %v2840
  %3007 = vst.msk [vmem:[#allocation2 + $0x3c] sm:$0xf] %vm2991, %v2842
  %3008 = vst.msk [vmem:[#allocation2 + $0x40] sm:$0xf] %vm2991, %v2844
  %3009 = vst.msk [vmem:[#allocation2 + $0x44] sm:$0xf] %vm2991, %v2846
  %3010 = vst.msk [vmem:[#allocation2 + $0x48] sm:$0xf] %vm2991, %v2848
  %3011 = vst.msk [vmem:[#allocation2 + $0x4c] sm:$0xf] %vm2991, %v2850
  %3012 = vst.msk [vmem:[#allocation2 + $0x50] sm:$0xf] %vm2991, %v2852
  %3013 = vst.msk [vmem:[#allocation2 + $0x54] sm:$0xf] %vm2991, %v2854
  %3014 = vst.msk [vmem:[#allocation2 + $0x58] sm:$0xf] %vm2991, %v2856
  %3015 = vst.msk [vmem:[#allocation2 + $0x5c] sm:$0xf] %vm2991, %v2858
  %3016 = vst.msk [vmem:[#allocation2 + $0x60] sm:$0xf] %vm2991, %v2860
  %3017 = vst.msk [vmem:[#allocation2 + $0x64] sm:$0xf] %vm2991, %v2862
  %3018 = vst.msk [vmem:[#allocation2 + $0x68] sm:$0xf] %vm2991, %v2864
  %3019 = vst.msk [vmem:[#allocation2 + $0x6c] sm:$0xf] %vm2991, %v2866
  %3020 = vst.msk [vmem:[#allocation2 + $0x70] sm:$0xf] %vm2991, %v2868
  %3021 = vst.msk [vmem:[#allocation2 + $0x74] sm:$0xf] %vm2991, %v2870
  %3022 = vst.msk [vmem:[#allocation2 + $0x78] sm:$0xf] %vm2991, %v2872
  %3023 = vst.msk [vmem:[#allocation2 + $0x7c] sm:$0xf] %vm2991, %v2874
  %3024 = vst.msk [vmem:[#allocation2 + $0x80] sm:$0xf] %vm2991, %v2876
  %3025 = vst.msk [vmem:[#allocation2 + $0x84] sm:$0xf] %vm2991, %v2878
  %3026 = vst.msk [vmem:[#allocation2 + $0x88] sm:$0xf] %vm2991, %v2880
  %3027 = vst.msk [vmem:[#allocation2 + $0x8c] sm:$0xf] %vm2991, %v2882
  %3028 = vst.msk [vmem:[#allocation2 + $0x90] sm:$0xf] %vm2991, %v2884
  %3029 = vst.msk [vmem:[#allocation2 + $0x94] sm:$0xf] %vm2991, %v2886
  %3030 = vst.msk [vmem:[#allocation2 + $0x98] sm:$0xf] %vm2991, %v2888
  %3031 = vst.msk [vmem:[#allocation2 + $0x9c] sm:$0xf] %vm2991, %v2890
  %3032 = vst.msk [vmem:[#allocation2 + $0xa0] sm:$0xf] %vm2991, %v2892
  %3033 = vst.msk [vmem:[#allocation2 + $0xa4] sm:$0xf] %vm2991, %v2894
  %3034 = vst.msk [vmem:[#allocation2 + $0xa8] sm:$0xf] %vm2991, %v2896
  %3035 = vst.msk [vmem:[#allocation2 + $0xac] sm:$0xf] %vm2991, %v2898
  %3036 = vst.msk [vmem:[#allocation2 + $0xb0] sm:$0xf] %vm2991, %v2900
  %3037 = vst.msk [vmem:[#allocation2 + $0xb4] sm:$0xf] %vm2991, %v2902
  %3038 = vst.msk [vmem:[#allocation2 + $0xb8] sm:$0xf] %vm2991, %v2904
  %3039 = vst.msk [vmem:[#allocation2 + $0xbc] sm:$0xf] %vm2991, %v2906
  %3040 = vst.msk [vmem:[#allocation2 + $0xc0] sm:$0xf] %vm2991, %v2908
  %3041 = vst.msk [vmem:[#allocation2 + $0xc4] sm:$0xf] %vm2991, %v2910
  %3042 = vst.msk [vmem:[#allocation2 + $0xc8] sm:$0xf] %vm2991, %v2912
  %3043 = vst.msk [vmem:[#allocation2 + $0xcc] sm:$0xf] %vm2991, %v2914
  %3044 = vst.msk [vmem:[#allocation2 + $0xd0] sm:$0xf] %vm2991, %v2916
  %3045 = vst.msk [vmem:[#allocation2 + $0xd4] sm:$0xf] %vm2991, %v2918
  %3046 = vst.msk [vmem:[#allocation2 + $0xd8] sm:$0xf] %vm2991, %v2920
  %3047 = vst.msk [vmem:[#allocation2 + $0xdc] sm:$0xf] %vm2991, %v2922
  %3048 = vst.msk [vmem:[#allocation2 + $0xe0] sm:$0xf] %vm2991, %v2924
  %3049 = vst.msk [vmem:[#allocation2 + $0xe4] sm:$0xf] %vm2991, %v2926
  %3050 = vst.msk [vmem:[#allocation2 + $0xe8] sm:$0xf] %vm2991, %v2928
  %3051 = vst.msk [vmem:[#allocation2 + $0xec] sm:$0xf] %vm2991, %v2930
  %v3052 = vld [vmem:[#allocation2] sm:$0xf]
  %v3053 = vld [vmem:[#allocation2 + $0x4] sm:$0xf]
  %v3054 = vld [vmem:[#allocation2 + $0x8] sm:$0xf]
  %v3055 = vld [vmem:[#allocation2 + $0xc] sm:$0xf]
  %v3056 = vld [vmem:[#allocation2 + $0x10] sm:$0xf]
  %v3057 = vld [vmem:[#allocation2 + $0x14] sm:$0xf]
  %v3058 = vld [vmem:[#allocation2 + $0x18] sm:$0xf]
  %v3059 = vld [vmem:[#allocation2 + $0x1c] sm:$0xf]
  %v3060 = vld [vmem:[#allocation2 + $0x20] sm:$0xf]
  %v3061 = vld [vmem:[#allocation2 + $0x24] sm:$0xf]
  %v3062 = vld [vmem:[#allocation2 + $0x28] sm:$0xf]
  %v3063 = vld [vmem:[#allocation2 + $0x2c] sm:$0xf]
  %v3064 = vld [vmem:[#allocation2 + $0x30] sm:$0xf]
  %v3065 = vld [vmem:[#allocation2 + $0x34] sm:$0xf]
  %v3066 = vld [vmem:[#allocation2 + $0x38] sm:$0xf]
  %v3067 = vld [vmem:[#allocation2 + $0x3c] sm:$0xf]
  %v3068 = vld [vmem:[#allocation2 + $0x40] sm:$0xf]
  %v3069 = vld [vmem:[#allocation2 + $0x44] sm:$0xf]
  %v3070 = vld [vmem:[#allocation2 + $0x48] sm:$0xf]
  %v3071 = vld [vmem:[#allocation2 + $0x4c] sm:$0xf]
  %v3072 = vld [vmem:[#allocation2 + $0x50] sm:$0xf]
  %v3073 = vld [vmem:[#allocation2 + $0x54] sm:$0xf]
  %v3074 = vld [vmem:[#allocation2 + $0x58] sm:$0xf]
  %v3075 = vld [vmem:[#allocation2 + $0x5c] sm:$0xf]
  %v3076 = vld [vmem:[#allocation2 + $0x60] sm:$0xf]
  %v3077 = vld [vmem:[#allocation2 + $0x64] sm:$0xf]
  %v3078 = vld [vmem:[#allocation2 + $0x68] sm:$0xf]
  %v3079 = vld [vmem:[#allocation2 + $0x6c] sm:$0xf]
  %v3080 = vld [vmem:[#allocation2 + $0x70] sm:$0xf]
  %v3081 = vld [vmem:[#allocation2 + $0x74] sm:$0xf]
  %v3082 = vld [vmem:[#allocation2 + $0x78] sm:$0xf]
  %v3083 = vld [vmem:[#allocation2 + $0x7c] sm:$0xf]
  %v3084 = vld [vmem:[#allocation2 + $0x80] sm:$0xf]
  %v3085 = vld [vmem:[#allocation2 + $0x84] sm:$0xf]
  %v3086 = vld [vmem:[#allocation2 + $0x88] sm:$0xf]
  %v3087 = vld [vmem:[#allocation2 + $0x8c] sm:$0xf]
  %v3088 = vld [vmem:[#allocation2 + $0x90] sm:$0xf]
  %v3089 = vld [vmem:[#allocation2 + $0x94] sm:$0xf]
  %v3090 = vld [vmem:[#allocation2 + $0x98] sm:$0xf]
  %v3091 = vld [vmem:[#allocation2 + $0x9c] sm:$0xf]
  %v3092 = vld [vmem:[#allocation2 + $0xa0] sm:$0xf]
  %v3093 = vld [vmem:[#allocation2 + $0xa4] sm:$0xf]
  %v3094 = vld [vmem:[#allocation2 + $0xa8] sm:$0xf]
  %v3095 = vld [vmem:[#allocation2 + $0xac] sm:$0xf]
  %v3096 = vld [vmem:[#allocation2 + $0xb0] sm:$0xf]
  %v3097 = vld [vmem:[#allocation2 + $0xb4] sm:$0xf]
  %v3098 = vld [vmem:[#allocation2 + $0xb8] sm:$0xf]
  %v3099 = vld [vmem:[#allocation2 + $0xbc] sm:$0xf]
  %v3100 = vld [vmem:[%s1] sm:$0xf]
  %v3101 = vld [vmem:[%s1 + $0x4] sm:$0xf]
  %v3102 = vld [vmem:[%s1 + $0x8] sm:$0xf]
  %v3103 = vld [vmem:[%s1 + $0xc] sm:$0xf]
  %v3104 = vld [vmem:[%s1 + $0x10] sm:$0xf]
  %v3105 = vld [vmem:[%s1 + $0x14] sm:$0xf]
  %v3106 = vld [vmem:[%s1 + $0x18] sm:$0xf]
  %v3107 = vld [vmem:[%s1 + $0x1c] sm:$0x3]
  %v3108 = vld [vmem:[#allocation2 + $0xc0] sm:$0xf]
  %v3109 = vld [vmem:[#allocation2 + $0xc4] sm:$0xf]
  %v3110 = vld [vmem:[#allocation2 + $0xc8] sm:$0xf]
  %s3111 = scalar_lea.vmem %s1, 32
  %v3112 = vld [vmem:[%s3111] sm:$0xf]
  %v3113 = vld [vmem:[%s3111 + $0x4] sm:$0xf]
  %v3114 = vld [vmem:[%s3111 + $0x8] sm:$0xf]
  %v3115 = vld [vmem:[%s3111 + $0xc] sm:$0xf]
  %v3116 = vld [vmem:[%s3111 + $0x10] sm:$0xf]
  %v3117 = vld [vmem:[%s3111 + $0x14] sm:$0xf]
  %v3118 = vld [vmem:[%s3111 + $0x18] sm:$0xf]
  %v3119 = vld [vmem:[%s3111 + $0x1c] sm:$0x3]
  %v3168 = vunpack.c.l.b16 %v3055
  %v3169 = vunpack.c.l.b16 %v3056
  %v3170 = vunpack.c.l.b16 %v3057
  %v3171 = vunpack.c.l.b16 %v3058
  %v3172 = vunpack.c.l.b16 %v3059
  %v3173 = vunpack.c.l.b16 %v3060
  %v3174 = vunpack.c.l.b16 %v3061
  %v3175 = vunpack.c.l.b16 %v3062
  %v3176 = vunpack.c.l.b16 %v3063
  %v3177 = vunpack.c.l.b16 %v3064
  %v3178 = vunpack.c.l.b16 %v3065
  %v3179 = vunpack.c.l.b16 %v3066
  %v3180 = vunpack.c.l.b16 %v3067
  %v3181 = vunpack.c.l.b16 %v3068
  %v3182 = vunpack.c.l.b16 %v3069
  %v3183 = vunpack.c.l.b16 %v3070
  %v3184 = vunpack.c.l.b16 %v3071
  %v3185 = vunpack.c.l.b16 %v3072
  %v3186 = vunpack.c.l.b16 %v3073
  %v3187 = vunpack.c.l.b16 %v3074
  %v3188 = vunpack.c.l.b16 %v3075
  %v3189 = vunpack.c.l.b16 %v3076
  %v3190 = vunpack.c.l.b16 %v3077
  %v3191 = vunpack.c.l.b16 %v3078
  %v3192 = vunpack.c.l.b16 %v3079
  %v3193 = vunpack.c.l.b16 %v3080
  %v3194 = vunpack.c.l.b16 %v3081
  %v3195 = vunpack.c.l.b16 %v3082
  %v3196 = vunpack.c.l.b16 %v3083
  %v3197 = vunpack.c.l.b16 %v3084
  %v3198 = vunpack.c.l.b16 %v3085
  %v3199 = vunpack.c.l.b16 %v3086
  %v3200 = vunpack.c.l.b16 %v3087
  %v3201 = vunpack.c.l.b16 %v3088
  %v3202 = vunpack.c.l.b16 %v3089
  %v3203 = vunpack.c.l.b16 %v3090
  %v3204 = vunpack.c.l.b16 %v3091
  %v3205 = vunpack.c.l.b16 %v3092
  %v3206 = vunpack.c.l.b16 %v3093
  %v3207 = vunpack.c.l.b16 %v3094
  %v3208 = vunpack.c.l.b16 %v3095
  %v3209 = vunpack.c.l.b16 %v3096
  %v3210 = vunpack.c.l.b16 %v3097
  %v3211 = vunpack.c.l.b16 %v3098
  %v3212 = vunpack.c.l.b16 %v3099
  %v3213 = vunpack.c.l.b16 %v3108
  %v3214 = vunpack.c.l.b16 %v3109
  %v3215 = vunpack.c.l.b16 %v3110
  %v3216 = vpack.c.b16 %v3169, %v3168
  %v3217 = vpack.c.b16 %v3171, %v3170
  %v3218 = vpack.c.b16 %v3173, %v3172
  %v3219 = vpack.c.b16 %v3175, %v3174
  %v3220 = vpack.c.b16 %v3177, %v3176
  %v3221 = vpack.c.b16 %v3179, %v3178
  %v3222 = vpack.c.b16 %v3181, %v3180
  %v3223 = vpack.c.b16 %v3183, %v3182
  %v3224 = vpack.c.b16 %v3185, %v3184
  %v3225 = vpack.c.b16 %v3187, %v3186
  %v3226 = vpack.c.b16 %v3189, %v3188
  %v3227 = vpack.c.b16 %v3191, %v3190
  %v3228 = vpack.c.b16 %v3193, %v3192
  %v3229 = vpack.c.b16 %v3195, %v3194
  %v3230 = vpack.c.b16 %v3197, %v3196
  %v3231 = vpack.c.b16 %v3199, %v3198
  %v3232 = vpack.c.b16 %v3201, %v3200
  %v3233 = vpack.c.b16 %v3203, %v3202
  %v3234 = vpack.c.b16 %v3205, %v3204
  %v3235 = vpack.c.b16 %v3207, %v3206
  %v3236 = vpack.c.b16 %v3209, %v3208
  %v3237 = vpack.c.b16 %v3211, %v3210
  %v3238 = vpack.c.b16 %v3213, %v3212
  %v3239 = vpack.c.b16 %v3215, %v3214
  %v3248 = vunpack.c.l.b16 %v3112
  %v3249 = vunpack.c.l.b16 %v3113
  %v3250 = vunpack.c.l.b16 %v3114
  %v3251 = vunpack.c.l.b16 %v3115
  %v3252 = vunpack.c.l.b16 %v3116
  %v3253 = vunpack.c.l.b16 %v3117
  %v3254 = vunpack.c.l.b16 %v3118
  %v3255 = vunpack.c.l.b16 %v3119
  %v3256 = vpack.c.b16 %v3249, %v3248
  %v3257 = vpack.c.b16 %v3251, %v3250
  %v3258 = vpack.c.b16 %v3253, %v3252
  %v3259 = vpack.c.b16 %v3255, %v3254
  %vm3263 = vcmask 490496
  %v3265 = vsel %vm3263, %v3216, 0
  %v3268 = vsel %vm3263, %v3217, 0
  %v3271 = vsel %vm3263, %v3218, 0
  %v3274 = vsel %vm3263, %v3219, 0
  %v3277 = vsel %vm3263, %v3220, 0
  %v3280 = vsel %vm3263, %v3221, 0
  %v3283 = vsel %vm3263, %v3222, 0
  %v3286 = vsel %vm3263, %v3223, 0
  %v3289 = vsel %vm3263, %v3224, 0
  %v3292 = vsel %vm3263, %v3225, 0
  %v3295 = vsel %vm3263, %v3226, 0
  %v3298 = vsel %vm3263, %v3227, 0
  %v3301 = vsel %vm3263, %v3228, 0
  %v3304 = vsel %vm3263, %v3229, 0
  %v3307 = vsel %vm3263, %v3230, 0
  %v3310 = vsel %vm3263, %v3231, 0
  %v3313 = vsel %vm3263, %v3232, 0
  %v3316 = vsel %vm3263, %v3233, 0
  %v3319 = vsel %vm3263, %v3234, 0
  %v3322 = vsel %vm3263, %v3235, 0
  %v3325 = vsel %vm3263, %v3236, 0
  %v3328 = vsel %vm3263, %v3237, 0
  %v3331 = vsel %vm3263, %v3238, 0
  %v3334 = vsel %vm3263, %v3239, 0
  %vm3336 = vcmask 1045504
  %v3338 = vsel %vm3336, %v3259, 0
  %3340 = vmatprep.subr.bf16.mxu0 0
  %3341 = vmatpush1.bf16.msra.mxu0 0
  %3342 = vmatprep.subr.bf16.mxu0 0
  %3343 = vmatpush1.bf16.msra.mxu0 0
  %3344 = vmatprep.subr.bf16.mxu0 0
  %3345 = vmatpush1.bf16.msra.mxu0 0
  %3346 = vmatprep.subr.bf16.mxu0 0
  %3347 = vmatpush1.bf16.msra.mxu0 0
  %3348 = vmatprep.subr.bf16.mxu0 0
  %3349 = vmatpush1.bf16.msra.mxu0 %v3338
  %3350 = vmatprep.subr.bf16.mxu0 0
  %3351 = vmatpush1.bf16.msra.mxu0 %v3258
  %3352 = vmatprep.subr.bf16.mxu0 0
  %3353 = vmatpush1.bf16.msra.mxu0 %v3257
  %3354 = vmatprep.subr.bf16.mxu0 0
  %3355 = vmatpush1.bf16.msra.mxu0 %v3256
  %3356 = vmatprep.subr.bf16.mxu0 0
  %3357 = vmatpush2.bf16.msra.mxu0 0
  %3358 = vmatprep.subr.bf16.mxu0 0
  %3359 = vmatpush2.bf16.msra.mxu0 0
  %3360 = vmatprep.subr.bf16.mxu0 0
  %3361 = vmatpush2.bf16.msra.mxu0 0
  %3362 = vmatprep.subr.bf16.mxu0 0
  %3363 = vmatpush2.bf16.msra.mxu0 0
  %3364 = vmatprep.subr.bf16.mxu0 0
  %3365 = vmatpush2.bf16.msra.mxu0 0
  %3366 = vmatprep.subr.bf16.mxu0 0
  %3367 = vmatpush2.bf16.msra.mxu0 0
  %3368 = vmatprep.subr.bf16.mxu0 0
  %3369 = vmatpush2.bf16.msra.mxu0 0
  %3370 = vmatprep.subr.bf16.mxu0 0
  %3371 = vmatpush2.bf16.msra.mxu0 0
  %3372 = vmatprep.mubr.bf16.mxu0 0
  %3373 = vmatmul.mubr.bf16.gmra.mxu0 %v3265
  %v3374 = vpop.f32.mrf.mxu0
  %v3375 = vadd.f32 0.0, %v3374
  %v3376 = vpop.f32.mrf.mxu0
  %v3377 = vpop.f32.mrf.mxu0
  %v3378 = vadd.f32 0.0, %v3377
  %v3379 = vpop.f32.mrf.mxu0
  %3380 = vmatprep.mubr.bf16.mxu0 0
  %3381 = vmatmul.mubr.bf16.gmra.mxu0 %v3268
  %v3382 = vpop.f32.mrf.mxu0
  %v3383 = vpop.f32.mrf.mxu0
  %v3384 = vpop.f32.mrf.mxu0
  %v3385 = vadd.f32 0.0, %v3384
  %v3386 = vpop.f32.mrf.mxu0
  %3387 = vmatprep.mubr.bf16.mxu0 0
  %3388 = vmatmul.mubr.bf16.gmra.mxu0 %v3271
  %v3389 = vpop.f32.mrf.mxu0
  %v3390 = vadd.f32 0.0, %v3389
  %v3391 = vpop.f32.mrf.mxu0
  %v3392 = vpop.f32.mrf.mxu0
  %v3393 = vpop.f32.mrf.mxu0
  %3394 = vmatprep.mubr.bf16.mxu0 0
  %3395 = vmatmul.mubr.bf16.gmra.mxu0 %v3274
  %v3396 = vpop.f32.mrf.mxu0
  %v3397 = vadd.f32 0.0, %v3396
  %v3398 = vpop.f32.mrf.mxu0
  %v3399 = vpop.f32.mrf.mxu0
  %v3400 = vadd.f32 0.0, %v3399
  %v3401 = vpop.f32.mrf.mxu0
  %3402 = vmatprep.mubr.bf16.mxu0 0
  %3403 = vmatmul.mubr.bf16.gmra.mxu0 %v3277
  %v3404 = vpop.f32.mrf.mxu0
  %v3405 = vpop.f32.mrf.mxu0
  %v3406 = vpop.f32.mrf.mxu0
  %v3407 = vadd.f32 0.0, %v3406
  %v3408 = vpop.f32.mrf.mxu0
  %3409 = vmatprep.mubr.bf16.mxu0 0
  %3410 = vmatmul.mubr.bf16.gmra.mxu0 %v3280
  %v3411 = vpop.f32.mrf.mxu0
  %v3412 = vadd.f32 0.0, %v3411
  %v3413 = vpop.f32.mrf.mxu0
  %v3414 = vpop.f32.mrf.mxu0
  %v3415 = vpop.f32.mrf.mxu0
  %3416 = vmatprep.mubr.bf16.mxu0 0
  %3417 = vmatmul.mubr.bf16.gmra.mxu0 %v3283
  %v3418 = vpop.f32.mrf.mxu0
  %v3419 = vadd.f32 0.0, %v3418
  %v3420 = vpop.f32.mrf.mxu0
  %v3421 = vpop.f32.mrf.mxu0
  %v3422 = vadd.f32 0.0, %v3421
  %v3423 = vpop.f32.mrf.mxu0
  %3424 = vmatprep.mubr.bf16.mxu0 0
  %3425 = vmatmul.mubr.bf16.gmra.mxu0 %v3286
  %v3426 = vpop.f32.mrf.mxu0
  %v3427 = vpop.f32.mrf.mxu0
  %v3428 = vpop.f32.mrf.mxu0
  %v3429 = vadd.f32 0.0, %v3428
  %v3430 = vpop.f32.mrf.mxu0
  %3431 = vmatprep.mubr.bf16.mxu0 0
  %3432 = vmatmul.mubr.bf16.gmra.mxu0 %v3289
  %v3433 = vpop.f32.mrf.mxu0
  %v3434 = vadd.f32 0.0, %v3433
  %v3435 = vpop.f32.mrf.mxu0
  %v3436 = vpop.f32.mrf.mxu0
  %v3437 = vpop.f32.mrf.mxu0
  %3438 = vmatprep.mubr.bf16.mxu0 0
  %3439 = vmatmul.mubr.bf16.gmra.mxu0 %v3292
  %v3440 = vpop.f32.mrf.mxu0
  %v3441 = vadd.f32 0.0, %v3440
  %v3442 = vpop.f32.mrf.mxu0
  %v3443 = vpop.f32.mrf.mxu0
  %v3444 = vadd.f32 0.0, %v3443
  %v3445 = vpop.f32.mrf.mxu0
  %3446 = vmatprep.mubr.bf16.mxu0 0
  %3447 = vmatmul.mubr.bf16.gmra.mxu0 %v3295
  %v3448 = vpop.f32.mrf.mxu0
  %v3449 = vpop.f32.mrf.mxu0
  %v3450 = vpop.f32.mrf.mxu0
  %v3451 = vadd.f32 0.0, %v3450
  %v3452 = vpop.f32.mrf.mxu0
  %3453 = vmatprep.mubr.bf16.mxu0 0
  %3454 = vmatmul.mubr.bf16.gmra.mxu0 %v3298
  %v3455 = vpop.f32.mrf.mxu0
  %v3456 = vadd.f32 0.0, %v3455
  %v3457 = vpop.f32.mrf.mxu0
  %v3458 = vpop.f32.mrf.mxu0
  %v3459 = vpop.f32.mrf.mxu0
  %3460 = vmatprep.mubr.bf16.mxu0 0
  %3461 = vmatmul.mubr.bf16.gmra.mxu0 %v3301
  %v3462 = vpop.f32.mrf.mxu0
  %v3463 = vadd.f32 0.0, %v3462
  %v3464 = vpop.f32.mrf.mxu0
  %v3465 = vpop.f32.mrf.mxu0
  %v3466 = vadd.f32 0.0, %v3465
  %v3467 = vpop.f32.mrf.mxu0
  %3468 = vmatprep.mubr.bf16.mxu0 0
  %3469 = vmatmul.mubr.bf16.gmra.mxu0 %v3304
  %v3470 = vpop.f32.mrf.mxu0
  %v3471 = vpop.f32.mrf.mxu0
  %v3472 = vpop.f32.mrf.mxu0
  %v3473 = vadd.f32 0.0, %v3472
  %v3474 = vpop.f32.mrf.mxu0
  %3475 = vmatprep.mubr.bf16.mxu0 0
  %3476 = vmatmul.mubr.bf16.gmra.mxu0 %v3307
  %v3477 = vpop.f32.mrf.mxu0
  %v3478 = vadd.f32 0.0, %v3477
  %v3479 = vpop.f32.mrf.mxu0
  %v3480 = vpop.f32.mrf.mxu0
  %v3481 = vpop.f32.mrf.mxu0
  %3482 = vmatprep.mubr.bf16.mxu0 0
  %3483 = vmatmul.mubr.bf16.gmra.mxu0 %v3310
  %v3484 = vpop.f32.mrf.mxu0
  %v3485 = vadd.f32 0.0, %v3484
  %v3486 = vpop.f32.mrf.mxu0
  %v3487 = vpop.f32.mrf.mxu0
  %v3488 = vadd.f32 0.0, %v3487
  %v3489 = vpop.f32.mrf.mxu0
  %3490 = vmatprep.mubr.bf16.mxu0 0
  %3491 = vmatmul.mubr.bf16.gmra.mxu0 %v3313
  %v3492 = vpop.f32.mrf.mxu0
  %v3493 = vpop.f32.mrf.mxu0
  %v3494 = vpop.f32.mrf.mxu0
  %v3495 = vadd.f32 0.0, %v3494
  %v3496 = vpop.f32.mrf.mxu0
  %3497 = vmatprep.mubr.bf16.mxu0 0
  %3498 = vmatmul.mubr.bf16.gmra.mxu0 %v3316
  %v3499 = vpop.f32.mrf.mxu0
  %v3500 = vadd.f32 0.0, %v3499
  %v3501 = vpop.f32.mrf.mxu0
  %v3502 = vpop.f32.mrf.mxu0
  %v3503 = vpop.f32.mrf.mxu0
  %3504 = vmatprep.mubr.bf16.mxu0 0
  %3505 = vmatmul.mubr.bf16.gmra.mxu0 %v3319
  %v3506 = vpop.f32.mrf.mxu0
  %v3507 = vadd.f32 0.0, %v3506
  %v3508 = vpop.f32.mrf.mxu0
  %v3509 = vpop.f32.mrf.mxu0
  %v3510 = vadd.f32 0.0, %v3509
  %v3511 = vpop.f32.mrf.mxu0
  %3512 = vmatprep.mubr.bf16.mxu0 0
  %3513 = vmatmul.mubr.bf16.gmra.mxu0 %v3322
  %v3514 = vpop.f32.mrf.mxu0
  %v3515 = vpop.f32.mrf.mxu0
  %v3516 = vpop.f32.mrf.mxu0
  %v3517 = vadd.f32 0.0, %v3516
  %v3518 = vpop.f32.mrf.mxu0
  %3519 = vmatprep.mubr.bf16.mxu0 0
  %3520 = vmatmul.mubr.bf16.gmra.mxu0 %v3325
  %v3521 = vpop.f32.mrf.mxu0
  %v3522 = vadd.f32 0.0, %v3521
  %v3523 = vpop.f32.mrf.mxu0
  %v3524 = vpop.f32.mrf.mxu0
  %v3525 = vpop.f32.mrf.mxu0
  %3526 = vmatprep.mubr.bf16.mxu0 0
  %3527 = vmatmul.mubr.bf16.gmra.mxu0 %v3328
  %v3528 = vpop.f32.mrf.mxu0
  %v3529 = vadd.f32 0.0, %v3528
  %v3530 = vpop.f32.mrf.mxu0
  %v3531 = vpop.f32.mrf.mxu0
  %v3532 = vadd.f32 0.0, %v3531
  %v3533 = vpop.f32.mrf.mxu0
  %3534 = vmatprep.mubr.bf16.mxu0 0
  %3535 = vmatmul.mubr.bf16.gmra.mxu0 %v3331
  %v3536 = vpop.f32.mrf.mxu0
  %v3537 = vpop.f32.mrf.mxu0
  %v3538 = vpop.f32.mrf.mxu0
  %v3539 = vadd.f32 0.0, %v3538
  %v3540 = vpop.f32.mrf.mxu0
  %3541 = vmatprep.mubr.bf16.mxu0 0
  %3542 = vmatmul.mubr.bf16.gmra.mxu0 %v3334
  %v3543 = vpop.f32.mrf.mxu0
  %v3544 = vadd.f32 0.0, %v3543
  %v3545 = vpop.f32.mrf.mxu0
  %v3546 = vpop.f32.mrf.mxu0
  %v3547 = vpop.f32.mrf.mxu0
  %3548 = vdwg.mxu0
  %v3552 = vunpack.c.l.b16 %v3052
  %v3553 = vunpack.c.l.b16 %v3053
  %v3554 = vunpack.c.l.b16 %v3054
  %v3555 = vpack.c.b16 %v3553, %v3552
  %v3556 = vpack.c.b16 %v3168, %v3554
  %v3557 = vpack.c.b16 %v3170, %v3169
  %v3558 = vpack.c.b16 %v3172, %v3171
  %v3559 = vpack.c.b16 %v3174, %v3173
  %v3560 = vpack.c.b16 %v3176, %v3175
  %v3561 = vpack.c.b16 %v3178, %v3177
  %v3562 = vpack.c.b16 %v3180, %v3179
  %v3563 = vpack.c.b16 %v3182, %v3181
  %v3564 = vpack.c.b16 %v3184, %v3183
  %v3565 = vpack.c.b16 %v3186, %v3185
  %v3566 = vpack.c.b16 %v3188, %v3187
  %v3567 = vpack.c.b16 %v3190, %v3189
  %v3568 = vpack.c.b16 %v3192, %v3191
  %v3569 = vpack.c.b16 %v3194, %v3193
  %v3570 = vpack.c.b16 %v3196, %v3195
  %v3571 = vpack.c.b16 %v3198, %v3197
  %v3572 = vpack.c.b16 %v3200, %v3199
  %v3573 = vpack.c.b16 %v3202, %v3201
  %v3574 = vpack.c.b16 %v3204, %v3203
  %v3575 = vpack.c.b16 %v3206, %v3205
  %v3576 = vpack.c.b16 %v3208, %v3207
  %v3577 = vpack.c.b16 %v3210, %v3209
  %v3578 = vpack.c.b16 %v3212, %v3211
  %v3587 = vunpack.c.l.b16 %v3100
  %v3588 = vunpack.c.l.b16 %v3101
  %v3589 = vunpack.c.l.b16 %v3102
  %v3590 = vunpack.c.l.b16 %v3103
  %v3591 = vunpack.c.l.b16 %v3104
  %v3592 = vunpack.c.l.b16 %v3105
  %v3593 = vunpack.c.l.b16 %v3106
  %v3594 = vunpack.c.l.b16 %v3107
  %v3595 = vpack.c.b16 %v3588, %v3587
  %v3596 = vpack.c.b16 %v3590, %v3589
  %v3597 = vpack.c.b16 %v3592, %v3591
  %v3598 = vpack.c.b16 %v3594, %v3593
  %v3603 = vsel %vm3263, %v3555, 0
  %v3606 = vsel %vm3263, %v3556, 0
  %v3609 = vsel %vm3263, %v3557, 0
  %v3612 = vsel %vm3263, %v3558, 0
  %v3615 = vsel %vm3263, %v3559, 0
  %v3618 = vsel %vm3263, %v3560, 0
  %v3621 = vsel %vm3263, %v3561, 0
  %v3624 = vsel %vm3263, %v3562, 0
  %v3627 = vsel %vm3263, %v3563, 0
  %v3630 = vsel %vm3263, %v3564, 0
  %v3633 = vsel %vm3263, %v3565, 0
  %v3636 = vsel %vm3263, %v3566, 0
  %v3639 = vsel %vm3263, %v3567, 0
  %v3642 = vsel %vm3263, %v3568, 0
  %v3645 = vsel %vm3263, %v3569, 0
  %v3648 = vsel %vm3263, %v3570, 0
  %v3651 = vsel %vm3263, %v3571, 0
  %v3654 = vsel %vm3263, %v3572, 0
  %v3657 = vsel %vm3263, %v3573, 0
  %v3660 = vsel %vm3263, %v3574, 0
  %v3663 = vsel %vm3263, %v3575, 0
  %v3666 = vsel %vm3263, %v3576, 0
  %v3669 = vsel %vm3263, %v3577, 0
  %v3672 = vsel %vm3263, %v3578, 0
  %v3675 = vsel %vm3336, %v3598, 0
  %3677 = vmatprep.subr.bf16.mxu0 0
  %3678 = vmatpush1.bf16.msra.mxu0 0
  %3679 = vmatprep.subr.bf16.mxu0 0
  %3680 = vmatpush1.bf16.msra.mxu0 0
  %3681 = vmatprep.subr.bf16.mxu0 0
  %3682 = vmatpush1.bf16.msra.mxu0 0
  %3683 = vmatprep.subr.bf16.mxu0 0
  %3684 = vmatpush1.bf16.msra.mxu0 0
  %3685 = vmatprep.subr.bf16.mxu0 0
  %3686 = vmatpush1.bf16.msra.mxu0 %v3675
  %3687 = vmatprep.subr.bf16.mxu0 0
  %3688 = vmatpush1.bf16.msra.mxu0 %v3597
  %3689 = vmatprep.subr.bf16.mxu0 0
  %3690 = vmatpush1.bf16.msra.mxu0 %v3596
  %3691 = vmatprep.subr.bf16.mxu0 0
  %3692 = vmatpush1.bf16.msra.mxu0 %v3595
  %3693 = vmatprep.subr.bf16.mxu0 0
  %3694 = vmatpush2.bf16.msra.mxu0 0
  %3695 = vmatprep.subr.bf16.mxu0 0
  %3696 = vmatpush2.bf16.msra.mxu0 0
  %3697 = vmatprep.subr.bf16.mxu0 0
  %3698 = vmatpush2.bf16.msra.mxu0 0
  %3699 = vmatprep.subr.bf16.mxu0 0
  %3700 = vmatpush2.bf16.msra.mxu0 0
  %3701 = vmatprep.subr.bf16.mxu0 0
  %3702 = vmatpush2.bf16.msra.mxu0 0
  %3703 = vmatprep.subr.bf16.mxu0 0
  %3704 = vmatpush2.bf16.msra.mxu0 0
  %3705 = vmatprep.subr.bf16.mxu0 0
  %3706 = vmatpush2.bf16.msra.mxu0 0
  %3707 = vmatprep.subr.bf16.mxu0 0
  %3708 = vmatpush2.bf16.msra.mxu0 0
  %3709 = vmatprep.mubr.bf16.mxu0 0
  %3710 = vmatmul.mubr.bf16.gmra.mxu0 %v3603
  %v3711 = vpop.f32.mrf.mxu0
  %v3712 = vadd.f32 %v3375, %v3711
  %v3713 = vpop.f32.mrf.mxu0
  %v3714 = vpop.f32.mrf.mxu0
  %v3715 = vadd.f32 %v3378, %v3714
  %v3716 = vpop.f32.mrf.mxu0
  %3717 = vmatprep.mubr.bf16.mxu0 0
  %3718 = vmatmul.mubr.bf16.gmra.mxu0 %v3606
  %v3719 = vpop.f32.mrf.mxu0
  %v3720 = vpop.f32.mrf.mxu0
  %v3721 = vpop.f32.mrf.mxu0
  %v3722 = vadd.f32 %v3385, %v3721
  %v3723 = vpop.f32.mrf.mxu0
  %3724 = vmatprep.mubr.bf16.mxu0 0
  %3725 = vmatmul.mubr.bf16.gmra.mxu0 %v3609
  %v3726 = vpop.f32.mrf.mxu0
  %v3727 = vadd.f32 %v3390, %v3726
  %v3728 = vpop.f32.mrf.mxu0
  %v3729 = vpop.f32.mrf.mxu0
  %v3730 = vpop.f32.mrf.mxu0
  %3731 = vmatprep.mubr.bf16.mxu0 0
  %3732 = vmatmul.mubr.bf16.gmra.mxu0 %v3612
  %v3733 = vpop.f32.mrf.mxu0
  %v3734 = vadd.f32 %v3397, %v3733
  %v3735 = vpop.f32.mrf.mxu0
  %v3736 = vpop.f32.mrf.mxu0
  %v3737 = vadd.f32 %v3400, %v3736
  %v3738 = vpop.f32.mrf.mxu0
  %3739 = vmatprep.mubr.bf16.mxu0 0
  %3740 = vmatmul.mubr.bf16.gmra.mxu0 %v3615
  %v3741 = vpop.f32.mrf.mxu0
  %v3742 = vpop.f32.mrf.mxu0
  %v3743 = vpop.f32.mrf.mxu0
  %v3744 = vadd.f32 %v3407, %v3743
  %v3745 = vpop.f32.mrf.mxu0
  %3746 = vmatprep.mubr.bf16.mxu0 0
  %3747 = vmatmul.mubr.bf16.gmra.mxu0 %v3618
  %v3748 = vpop.f32.mrf.mxu0
  %v3749 = vadd.f32 %v3412, %v3748
  %v3750 = vpop.f32.mrf.mxu0
  %v3751 = vpop.f32.mrf.mxu0
  %v3752 = vpop.f32.mrf.mxu0
  %3753 = vmatprep.mubr.bf16.mxu0 0
  %3754 = vmatmul.mubr.bf16.gmra.mxu0 %v3621
  %v3755 = vpop.f32.mrf.mxu0
  %v3756 = vadd.f32 %v3419, %v3755
  %v3757 = vpop.f32.mrf.mxu0
  %v3758 = vpop.f32.mrf.mxu0
  %v3759 = vadd.f32 %v3422, %v3758
  %v3760 = vpop.f32.mrf.mxu0
  %3761 = vmatprep.mubr.bf16.mxu0 0
  %3762 = vmatmul.mubr.bf16.gmra.mxu0 %v3624
  %v3763 = vpop.f32.mrf.mxu0
  %v3764 = vpop.f32.mrf.mxu0
  %v3765 = vpop.f32.mrf.mxu0
  %v3766 = vadd.f32 %v3429, %v3765
  %v3767 = vpop.f32.mrf.mxu0
  %3768 = vmatprep.mubr.bf16.mxu0 0
  %3769 = vmatmul.mubr.bf16.gmra.mxu0 %v3627
  %v3770 = vpop.f32.mrf.mxu0
  %v3771 = vadd.f32 %v3434, %v3770
  %v3772 = vpop.f32.mrf.mxu0
  %v3773 = vpop.f32.mrf.mxu0
  %v3774 = vpop.f32.mrf.mxu0
  %3775 = vmatprep.mubr.bf16.mxu0 0
  %3776 = vmatmul.mubr.bf16.gmra.mxu0 %v3630
  %v3777 = vpop.f32.mrf.mxu0
  %v3778 = vadd.f32 %v3441, %v3777
  %v3779 = vpop.f32.mrf.mxu0
  %v3780 = vpop.f32.mrf.mxu0
  %v3781 = vadd.f32 %v3444, %v3780
  %v3782 = vpop.f32.mrf.mxu0
  %3783 = vmatprep.mubr.bf16.mxu0 0
  %3784 = vmatmul.mubr.bf16.gmra.mxu0 %v3633
  %v3785 = vpop.f32.mrf.mxu0
  %v3786 = vpop.f32.mrf.mxu0
  %v3787 = vpop.f32.mrf.mxu0
  %v3788 = vadd.f32 %v3451, %v3787
  %v3789 = vpop.f32.mrf.mxu0
  %3790 = vmatprep.mubr.bf16.mxu0 0
  %3791 = vmatmul.mubr.bf16.gmra.mxu0 %v3636
  %v3792 = vpop.f32.mrf.mxu0
  %v3793 = vadd.f32 %v3456, %v3792
  %v3794 = vpop.f32.mrf.mxu0
  %v3795 = vpop.f32.mrf.mxu0
  %v3796 = vpop.f32.mrf.mxu0
  %3797 = vmatprep.mubr.bf16.mxu0 0
  %3798 = vmatmul.mubr.bf16.gmra.mxu0 %v3639
  %v3799 = vpop.f32.mrf.mxu0
  %v3800 = vadd.f32 %v3463, %v3799
  %v3801 = vpop.f32.mrf.mxu0
  %v3802 = vpop.f32.mrf.mxu0
  %v3803 = vadd.f32 %v3466, %v3802
  %v3804 = vpop.f32.mrf.mxu0
  %3805 = vmatprep.mubr.bf16.mxu0 0
  %3806 = vmatmul.mubr.bf16.gmra.mxu0 %v3642
  %v3807 = vpop.f32.mrf.mxu0
  %v3808 = vpop.f32.mrf.mxu0
  %v3809 = vpop.f32.mrf.mxu0
  %v3810 = vadd.f32 %v3473, %v3809
  %v3811 = vpop.f32.mrf.mxu0
  %3812 = vmatprep.mubr.bf16.mxu0 0
  %3813 = vmatmul.mubr.bf16.gmra.mxu0 %v3645
  %v3814 = vpop.f32.mrf.mxu0
  %v3815 = vadd.f32 %v3478, %v3814
  %v3816 = vpop.f32.mrf.mxu0
  %v3817 = vpop.f32.mrf.mxu0
  %v3818 = vpop.f32.mrf.mxu0
  %3819 = vmatprep.mubr.bf16.mxu0 0
  %3820 = vmatmul.mubr.bf16.gmra.mxu0 %v3648
  %v3821 = vpop.f32.mrf.mxu0
  %v3822 = vadd.f32 %v3485, %v3821
  %v3823 = vpop.f32.mrf.mxu0
  %v3824 = vpop.f32.mrf.mxu0
  %v3825 = vadd.f32 %v3488, %v3824
  %v3826 = vpop.f32.mrf.mxu0
  %3827 = vmatprep.mubr.bf16.mxu0 0
  %3828 = vmatmul.mubr.bf16.gmra.mxu0 %v3651
  %v3829 = vpop.f32.mrf.mxu0
  %v3830 = vpop.f32.mrf.mxu0
  %v3831 = vpop.f32.mrf.mxu0
  %v3832 = vadd.f32 %v3495, %v3831
  %v3833 = vpop.f32.mrf.mxu0
  %3834 = vmatprep.mubr.bf16.mxu0 0
  %3835 = vmatmul.mubr.bf16.gmra.mxu0 %v3654
  %v3836 = vpop.f32.mrf.mxu0
  %v3837 = vadd.f32 %v3500, %v3836
  %v3838 = vpop.f32.mrf.mxu0
  %v3839 = vpop.f32.mrf.mxu0
  %v3840 = vpop.f32.mrf.mxu0
  %3841 = vmatprep.mubr.bf16.mxu0 0
  %3842 = vmatmul.mubr.bf16.gmra.mxu0 %v3657
  %v3843 = vpop.f32.mrf.mxu0
  %v3844 = vadd.f32 %v3507, %v3843
  %v3845 = vpop.f32.mrf.mxu0
  %v3846 = vpop.f32.mrf.mxu0
  %v3847 = vadd.f32 %v3510, %v3846
  %v3848 = vpop.f32.mrf.mxu0
  %3849 = vmatprep.mubr.bf16.mxu0 0
  %3850 = vmatmul.mubr.bf16.gmra.mxu0 %v3660
  %v3851 = vpop.f32.mrf.mxu0
  %v3852 = vpop.f32.mrf.mxu0
  %v3853 = vpop.f32.mrf.mxu0
  %v3854 = vadd.f32 %v3517, %v3853
  %v3855 = vpop.f32.mrf.mxu0
  %3856 = vmatprep.mubr.bf16.mxu0 0
  %3857 = vmatmul.mubr.bf16.gmra.mxu0 %v3663
  %v3858 = vpop.f32.mrf.mxu0
  %v3859 = vadd.f32 %v3522, %v3858
  %v3860 = vpop.f32.mrf.mxu0
  %v3861 = vpop.f32.mrf.mxu0
  %v3862 = vpop.f32.mrf.mxu0
  %3863 = vmatprep.mubr.bf16.mxu0 0
  %3864 = vmatmul.mubr.bf16.gmra.mxu0 %v3666
  %v3865 = vpop.f32.mrf.mxu0
  %v3866 = vadd.f32 %v3529, %v3865
  %v3867 = vpop.f32.mrf.mxu0
  %v3868 = vpop.f32.mrf.mxu0
  %v3869 = vadd.f32 %v3532, %v3868
  %v3870 = vpop.f32.mrf.mxu0
  %3871 = vmatprep.mubr.bf16.mxu0 0
  %3872 = vmatmul.mubr.bf16.gmra.mxu0 %v3669
  %v3873 = vpop.f32.mrf.mxu0
  %v3874 = vpop.f32.mrf.mxu0
  %v3875 = vpop.f32.mrf.mxu0
  %v3876 = vadd.f32 %v3539, %v3875
  %v3877 = vpop.f32.mrf.mxu0
  %3878 = vmatprep.mubr.bf16.mxu0 0
  %3879 = vmatmul.mubr.bf16.gmra.mxu0 %v3672
  %v3880 = vpop.f32.mrf.mxu0
  %v3881 = vadd.f32 %v3544, %v3880
  %v3882 = vpop.f32.mrf.mxu0
  %v3883 = vpop.f32.mrf.mxu0
  %v3884 = vpop.f32.mrf.mxu0
  %3885 = vdwg.mxu0
  %v3886 = vld [vmem:[#allocation2 + $0x18] sm:$0xf]
  %v3887 = vld [vmem:[#allocation2 + $0x1c] sm:$0xf]
  %v3888 = vld [vmem:[#allocation2 + $0x20] sm:$0xf]
  %v3889 = vld [vmem:[#allocation2 + $0x24] sm:$0xf]
  %v3890 = vld [vmem:[#allocation2 + $0x28] sm:$0xf]
  %v3891 = vld [vmem:[#allocation2 + $0x2c] sm:$0xf]
  %v3892 = vld [vmem:[#allocation2 + $0x30] sm:$0xf]
  %v3893 = vld [vmem:[#allocation2 + $0x34] sm:$0xf]
  %v3894 = vld [vmem:[#allocation2 + $0x38] sm:$0xf]
  %v3895 = vld [vmem:[#allocation2 + $0x3c] sm:$0xf]
  %v3896 = vld [vmem:[#allocation2 + $0x40] sm:$0xf]
  %v3897 = vld [vmem:[#allocation2 + $0x44] sm:$0xf]
  %v3898 = vld [vmem:[#allocation2 + $0x48] sm:$0xf]
  %v3899 = vld [vmem:[#allocation2 + $0x4c] sm:$0xf]
  %v3900 = vld [vmem:[#allocation2 + $0x50] sm:$0xf]
  %v3901 = vld [vmem:[#allocation2 + $0x54] sm:$0xf]
  %v3902 = vld [vmem:[#allocation2 + $0x58] sm:$0xf]
  %v3903 = vld [vmem:[#allocation2 + $0x5c] sm:$0xf]
  %v3904 = vld [vmem:[#allocation2 + $0x60] sm:$0xf]
  %v3905 = vld [vmem:[#allocation2 + $0x64] sm:$0xf]
  %v3906 = vld [vmem:[#allocation2 + $0x68] sm:$0xf]
  %v3907 = vld [vmem:[#allocation2 + $0x6c] sm:$0xf]
  %v3908 = vld [vmem:[#allocation2 + $0x70] sm:$0xf]
  %v3909 = vld [vmem:[#allocation2 + $0x74] sm:$0xf]
  %v3910 = vld [vmem:[#allocation2 + $0x78] sm:$0xf]
  %v3911 = vld [vmem:[#allocation2 + $0x7c] sm:$0xf]
  %v3912 = vld [vmem:[#allocation2 + $0x80] sm:$0xf]
  %v3913 = vld [vmem:[#allocation2 + $0x84] sm:$0xf]
  %v3914 = vld [vmem:[#allocation2 + $0x88] sm:$0xf]
  %v3915 = vld [vmem:[#allocation2 + $0x8c] sm:$0xf]
  %v3916 = vld [vmem:[#allocation2 + $0x90] sm:$0xf]
  %v3917 = vld [vmem:[#allocation2 + $0x94] sm:$0xf]
  %v3918 = vld [vmem:[#allocation2 + $0x98] sm:$0xf]
  %v3919 = vld [vmem:[#allocation2 + $0x9c] sm:$0xf]
  %v3920 = vld [vmem:[#allocation2 + $0xa0] sm:$0xf]
  %v3921 = vld [vmem:[#allocation2 + $0xa4] sm:$0xf]
  %v3922 = vld [vmem:[#allocation2 + $0xa8] sm:$0xf]
  %v3923 = vld [vmem:[#allocation2 + $0xac] sm:$0xf]
  %v3924 = vld [vmem:[#allocation2 + $0xb0] sm:$0xf]
  %v3925 = vld [vmem:[#allocation2 + $0xb4] sm:$0xf]
  %v3926 = vld [vmem:[#allocation2 + $0xb8] sm:$0xf]
  %v3927 = vld [vmem:[#allocation2 + $0xbc] sm:$0xf]
  %v3928 = vld [vmem:[#allocation2 + $0xc0] sm:$0xf]
  %v3929 = vld [vmem:[#allocation2 + $0xc4] sm:$0xf]
  %v3930 = vld [vmem:[#allocation2 + $0xc8] sm:$0xf]
  %v3931 = vld [vmem:[#allocation2 + $0xcc] sm:$0xf]
  %v3932 = vld [vmem:[#allocation2 + $0xd0] sm:$0xf]
  %v3933 = vld [vmem:[#allocation2 + $0xd4] sm:$0xf]
  %s3934 = scalar_lea.vmem %s1, 64
  %v3935 = vld [vmem:[%s3934] sm:$0xf]
  %v3936 = vld [vmem:[%s3934 + $0x4] sm:$0xf]
  %v3937 = vld [vmem:[%s3934 + $0x8] sm:$0xf]
  %v3938 = vld [vmem:[%s3934 + $0xc] sm:$0xf]
  %v3939 = vld [vmem:[%s3934 + $0x10] sm:$0xf]
  %v3940 = vld [vmem:[%s3934 + $0x14] sm:$0xf]
  %v3941 = vld [vmem:[%s3934 + $0x18] sm:$0xf]
  %v3942 = vld [vmem:[%s3934 + $0x1c] sm:$0x3]
  %v3991 = vunpack.c.l.b16 %v3886
  %v3992 = vunpack.c.l.b16 %v3887
  %v3993 = vunpack.c.l.b16 %v3888
  %v3994 = vunpack.c.l.b16 %v3889
  %v3995 = vunpack.c.l.b16 %v3890
  %v3996 = vunpack.c.l.b16 %v3891
  %v3997 = vunpack.c.l.b16 %v3892
  %v3998 = vunpack.c.l.b16 %v3893
  %v3999 = vunpack.c.l.b16 %v3894
  %v4000 = vunpack.c.l.b16 %v3895
  %v4001 = vunpack.c.l.b16 %v3896
  %v4002 = vunpack.c.l.b16 %v3897
  %v4003 = vunpack.c.l.b16 %v3898
  %v4004 = vunpack.c.l.b16 %v3899
  %v4005 = vunpack.c.l.b16 %v3900
  %v4006 = vunpack.c.l.b16 %v3901
  %v4007 = vunpack.c.l.b16 %v3902
  %v4008 = vunpack.c.l.b16 %v3903
  %v4009 = vunpack.c.l.b16 %v3904
  %v4010 = vunpack.c.l.b16 %v3905
  %v4011 = vunpack.c.l.b16 %v3906
  %v4012 = vunpack.c.l.b16 %v3907
  %v4013 = vunpack.c.l.b16 %v3908
  %v4014 = vunpack.c.l.b16 %v3909
  %v4015 = vunpack.c.l.b16 %v3910
  %v4016 = vunpack.c.l.b16 %v3911
  %v4017 = vunpack.c.l.b16 %v3912
  %v4018 = vunpack.c.l.b16 %v3913
  %v4019 = vunpack.c.l.b16 %v3914
  %v4020 = vunpack.c.l.b16 %v3915
  %v4021 = vunpack.c.l.b16 %v3916
  %v4022 = vunpack.c.l.b16 %v3917
  %v4023 = vunpack.c.l.b16 %v3918
  %v4024 = vunpack.c.l.b16 %v3919
  %v4025 = vunpack.c.l.b16 %v3920
  %v4026 = vunpack.c.l.b16 %v3921
  %v4027 = vunpack.c.l.b16 %v3922
  %v4028 = vunpack.c.l.b16 %v3923
  %v4029 = vunpack.c.l.b16 %v3924
  %v4030 = vunpack.c.l.b16 %v3925
  %v4031 = vunpack.c.l.b16 %v3926
  %v4032 = vunpack.c.l.b16 %v3927
  %v4033 = vunpack.c.l.b16 %v3928
  %v4034 = vunpack.c.l.b16 %v3929
  %v4035 = vunpack.c.l.b16 %v3930
  %v4036 = vunpack.c.l.b16 %v3931
  %v4037 = vunpack.c.l.b16 %v3932
  %v4038 = vunpack.c.l.b16 %v3933
  %v4039 = vpack.c.b16 %v3992, %v3991
  %v4040 = vpack.c.b16 %v3994, %v3993
  %v4041 = vpack.c.b16 %v3996, %v3995
  %v4042 = vpack.c.b16 %v3998, %v3997
  %v4043 = vpack.c.b16 %v4000, %v3999
  %v4044 = vpack.c.b16 %v4002, %v4001
  %v4045 = vpack.c.b16 %v4004, %v4003
  %v4046 = vpack.c.b16 %v4006, %v4005
  %v4047 = vpack.c.b16 %v4008, %v4007
  %v4048 = vpack.c.b16 %v4010, %v4009
  %v4049 = vpack.c.b16 %v4012, %v4011
  %v4050 = vpack.c.b16 %v4014, %v4013
  %v4051 = vpack.c.b16 %v4016, %v4015
  %v4052 = vpack.c.b16 %v4018, %v4017
  %v4053 = vpack.c.b16 %v4020, %v4019
  %v4054 = vpack.c.b16 %v4022, %v4021
  %v4055 = vpack.c.b16 %v4024, %v4023
  %v4056 = vpack.c.b16 %v4026, %v4025
  %v4057 = vpack.c.b16 %v4028, %v4027
  %v4058 = vpack.c.b16 %v4030, %v4029
  %v4059 = vpack.c.b16 %v4032, %v4031
  %v4060 = vpack.c.b16 %v4034, %v4033
  %v4061 = vpack.c.b16 %v4036, %v4035
  %v4062 = vpack.c.b16 %v4038, %v4037
  %v4071 = vunpack.c.l.b16 %v3935
  %v4072 = vunpack.c.l.b16 %v3936
  %v4073 = vunpack.c.l.b16 %v3937
  %v4074 = vunpack.c.l.b16 %v3938
  %v4075 = vunpack.c.l.b16 %v3939
  %v4076 = vunpack.c.l.b16 %v3940
  %v4077 = vunpack.c.l.b16 %v3941
  %v4078 = vunpack.c.l.b16 %v3942
  %v4079 = vpack.c.b16 %v4072, %v4071
  %v4080 = vpack.c.b16 %v4074, %v4073
  %v4081 = vpack.c.b16 %v4076, %v4075
  %v4082 = vpack.c.b16 %v4078, %v4077
  %v4087 = vsel %vm3263, %v4039, 0
  %v4090 = vsel %vm3263, %v4040, 0
  %v4093 = vsel %vm3263, %v4041, 0
  %v4096 = vsel %vm3263, %v4042, 0
  %v4099 = vsel %vm3263, %v4043, 0
  %v4102 = vsel %vm3263, %v4044, 0
  %v4105 = vsel %vm3263, %v4045, 0
  %v4108 = vsel %vm3263, %v4046, 0
  %v4111 = vsel %vm3263, %v4047, 0
  %v4114 = vsel %vm3263, %v4048, 0
  %v4117 = vsel %vm3263, %v4049, 0
  %v4120 = vsel %vm3263, %v4050, 0
  %v4123 = vsel %vm3263, %v4051, 0
  %v4126 = vsel %vm3263, %v4052, 0
  %v4129 = vsel %vm3263, %v4053, 0
  %v4132 = vsel %vm3263, %v4054, 0
  %v4135 = vsel %vm3263, %v4055, 0
  %v4138 = vsel %vm3263, %v4056, 0
  %v4141 = vsel %vm3263, %v4057, 0
  %v4144 = vsel %vm3263, %v4058, 0
  %v4147 = vsel %vm3263, %v4059, 0
  %v4150 = vsel %vm3263, %v4060, 0
  %v4153 = vsel %vm3263, %v4061, 0
  %v4156 = vsel %vm3263, %v4062, 0
  %v4159 = vsel %vm3336, %v4082, 0
  %4161 = vmatprep.subr.bf16.mxu0 0
  %4162 = vmatpush1.bf16.msra.mxu0 0
  %4163 = vmatprep.subr.bf16.mxu0 0
  %4164 = vmatpush1.bf16.msra.mxu0 0
  %4165 = vmatprep.subr.bf16.mxu0 0
  %4166 = vmatpush1.bf16.msra.mxu0 0
  %4167 = vmatprep.subr.bf16.mxu0 0
  %4168 = vmatpush1.bf16.msra.mxu0 0
  %4169 = vmatprep.subr.bf16.mxu0 0
  %4170 = vmatpush1.bf16.msra.mxu0 %v4159
  %4171 = vmatprep.subr.bf16.mxu0 0
  %4172 = vmatpush1.bf16.msra.mxu0 %v4081
  %4173 = vmatprep.subr.bf16.mxu0 0
  %4174 = vmatpush1.bf16.msra.mxu0 %v4080
  %4175 = vmatprep.subr.bf16.mxu0 0
  %4176 = vmatpush1.bf16.msra.mxu0 %v4079
  %4177 = vmatprep.subr.bf16.mxu0 0
  %4178 = vmatpush2.bf16.msra.mxu0 0
  %4179 = vmatprep.subr.bf16.mxu0 0
  %4180 = vmatpush2.bf16.msra.mxu0 0
  %4181 = vmatprep.subr.bf16.mxu0 0
  %4182 = vmatpush2.bf16.msra.mxu0 0
  %4183 = vmatprep.subr.bf16.mxu0 0
  %4184 = vmatpush2.bf16.msra.mxu0 0
  %4185 = vmatprep.subr.bf16.mxu0 0
  %4186 = vmatpush2.bf16.msra.mxu0 0
  %4187 = vmatprep.subr.bf16.mxu0 0
  %4188 = vmatpush2.bf16.msra.mxu0 0
  %4189 = vmatprep.subr.bf16.mxu0 0
  %4190 = vmatpush2.bf16.msra.mxu0 0
  %4191 = vmatprep.subr.bf16.mxu0 0
  %4192 = vmatpush2.bf16.msra.mxu0 0
  %4193 = vmatprep.mubr.bf16.mxu0 0
  %4194 = vmatmul.mubr.bf16.gmra.mxu0 %v4087
  %v4195 = vpop.f32.mrf.mxu0
  %v4196 = vadd.f32 0.0, %v4195
  %v4197 = vpop.f32.mrf.mxu0
  %v4198 = vpop.f32.mrf.mxu0
  %v4199 = vadd.f32 0.0, %v4198
  %v4200 = vpop.f32.mrf.mxu0
  %4201 = vmatprep.mubr.bf16.mxu0 0
  %4202 = vmatmul.mubr.bf16.gmra.mxu0 %v4090
  %v4203 = vpop.f32.mrf.mxu0
  %v4204 = vpop.f32.mrf.mxu0
  %v4205 = vpop.f32.mrf.mxu0
  %v4206 = vadd.f32 0.0, %v4205
  %v4207 = vpop.f32.mrf.mxu0
  %4208 = vmatprep.mubr.bf16.mxu0 0
  %4209 = vmatmul.mubr.bf16.gmra.mxu0 %v4093
  %v4210 = vpop.f32.mrf.mxu0
  %v4211 = vadd.f32 0.0, %v4210
  %v4212 = vpop.f32.mrf.mxu0
  %v4213 = vpop.f32.mrf.mxu0
  %v4214 = vpop.f32.mrf.mxu0
  %4215 = vmatprep.mubr.bf16.mxu0 0
  %4216 = vmatmul.mubr.bf16.gmra.mxu0 %v4096
  %v4217 = vpop.f32.mrf.mxu0
  %v4218 = vadd.f32 0.0, %v4217
  %v4219 = vpop.f32.mrf.mxu0
  %v4220 = vpop.f32.mrf.mxu0
  %v4221 = vadd.f32 0.0, %v4220
  %v4222 = vpop.f32.mrf.mxu0
  %4223 = vmatprep.mubr.bf16.mxu0 0
  %4224 = vmatmul.mubr.bf16.gmra.mxu0 %v4099
  %v4225 = vpop.f32.mrf.mxu0
  %v4226 = vpop.f32.mrf.mxu0
  %v4227 = vpop.f32.mrf.mxu0
  %v4228 = vadd.f32 0.0, %v4227
  %v4229 = vpop.f32.mrf.mxu0
  %4230 = vmatprep.mubr.bf16.mxu0 0
  %4231 = vmatmul.mubr.bf16.gmra.mxu0 %v4102
  %v4232 = vpop.f32.mrf.mxu0
  %v4233 = vadd.f32 0.0, %v4232
  %v4234 = vpop.f32.mrf.mxu0
  %v4235 = vpop.f32.mrf.mxu0
  %v4236 = vpop.f32.mrf.mxu0
  %4237 = vmatprep.mubr.bf16.mxu0 0
  %4238 = vmatmul.mubr.bf16.gmra.mxu0 %v4105
  %v4239 = vpop.f32.mrf.mxu0
  %v4240 = vadd.f32 0.0, %v4239
  %v4241 = vpop.f32.mrf.mxu0
  %v4242 = vpop.f32.mrf.mxu0
  %v4243 = vadd.f32 0.0, %v4242
  %v4244 = vpop.f32.mrf.mxu0
  %4245 = vmatprep.mubr.bf16.mxu0 0
  %4246 = vmatmul.mubr.bf16.gmra.mxu0 %v4108
  %v4247 = vpop.f32.mrf.mxu0
  %v4248 = vpop.f32.mrf.mxu0
  %v4249 = vpop.f32.mrf.mxu0
  %v4250 = vadd.f32 0.0, %v4249
  %v4251 = vpop.f32.mrf.mxu0
  %4252 = vmatprep.mubr.bf16.mxu0 0
  %4253 = vmatmul.mubr.bf16.gmra.mxu0 %v4111
  %v4254 = vpop.f32.mrf.mxu0
  %v4255 = vadd.f32 0.0, %v4254
  %v4256 = vpop.f32.mrf.mxu0
  %v4257 = vpop.f32.mrf.mxu0
  %v4258 = vpop.f32.mrf.mxu0
  %4259 = vmatprep.mubr.bf16.mxu0 0
  %4260 = vmatmul.mubr.bf16.gmra.mxu0 %v4114
  %v4261 = vpop.f32.mrf.mxu0
  %v4262 = vadd.f32 0.0, %v4261
  %v4263 = vpop.f32.mrf.mxu0
  %v4264 = vpop.f32.mrf.mxu0
  %v4265 = vadd.f32 0.0, %v4264
  %v4266 = vpop.f32.mrf.mxu0
  %4267 = vmatprep.mubr.bf16.mxu0 0
  %4268 = vmatmul.mubr.bf16.gmra.mxu0 %v4117
  %v4269 = vpop.f32.mrf.mxu0
  %v4270 = vpop.f32.mrf.mxu0
  %v4271 = vpop.f32.mrf.mxu0
  %v4272 = vadd.f32 0.0, %v4271
  %v4273 = vpop.f32.mrf.mxu0
  %4274 = vmatprep.mubr.bf16.mxu0 0
  %4275 = vmatmul.mubr.bf16.gmra.mxu0 %v4120
  %v4276 = vpop.f32.mrf.mxu0
  %v4277 = vadd.f32 0.0, %v4276
  %v4278 = vpop.f32.mrf.mxu0
  %v4279 = vpop.f32.mrf.mxu0
  %v4280 = vpop.f32.mrf.mxu0
  %4281 = vmatprep.mubr.bf16.mxu0 0
  %4282 = vmatmul.mubr.bf16.gmra.mxu0 %v4123
  %v4283 = vpop.f32.mrf.mxu0
  %v4284 = vadd.f32 0.0, %v4283
  %v4285 = vpop.f32.mrf.mxu0
  %v4286 = vpop.f32.mrf.mxu0
  %v4287 = vadd.f32 0.0, %v4286
  %v4288 = vpop.f32.mrf.mxu0
  %4289 = vmatprep.mubr.bf16.mxu0 0
  %4290 = vmatmul.mubr.bf16.gmra.mxu0 %v4126
  %v4291 = vpop.f32.mrf.mxu0
  %v4292 = vpop.f32.mrf.mxu0
  %v4293 = vpop.f32.mrf.mxu0
  %v4294 = vadd.f32 0.0, %v4293
  %v4295 = vpop.f32.mrf.mxu0
  %4296 = vmatprep.mubr.bf16.mxu0 0
  %4297 = vmatmul.mubr.bf16.gmra.mxu0 %v4129
  %v4298 = vpop.f32.mrf.mxu0
  %v4299 = vadd.f32 0.0, %v4298
  %v4300 = vpop.f32.mrf.mxu0
  %v4301 = vpop.f32.mrf.mxu0
  %v4302 = vpop.f32.mrf.mxu0
  %4303 = vmatprep.mubr.bf16.mxu0 0
  %4304 = vmatmul.mubr.bf16.gmra.mxu0 %v4132
  %v4305 = vpop.f32.mrf.mxu0
  %v4306 = vadd.f32 0.0, %v4305
  %v4307 = vpop.f32.mrf.mxu0
  %v4308 = vpop.f32.mrf.mxu0
  %v4309 = vadd.f32 0.0, %v4308
  %v4310 = vpop.f32.mrf.mxu0
  %4311 = vmatprep.mubr.bf16.mxu0 0
  %4312 = vmatmul.mubr.bf16.gmra.mxu0 %v4135
  %v4313 = vpop.f32.mrf.mxu0
  %v4314 = vpop.f32.mrf.mxu0
  %v4315 = vpop.f32.mrf.mxu0
  %v4316 = vadd.f32 0.0, %v4315
  %v4317 = vpop.f32.mrf.mxu0
  %4318 = vmatprep.mubr.bf16.mxu0 0
  %4319 = vmatmul.mubr.bf16.gmra.mxu0 %v4138
  %v4320 = vpop.f32.mrf.mxu0
  %v4321 = vadd.f32 0.0, %v4320
  %v4322 = vpop.f32.mrf.mxu0
  %v4323 = vpop.f32.mrf.mxu0
  %v4324 = vpop.f32.mrf.mxu0
  %4325 = vmatprep.mubr.bf16.mxu0 0
  %4326 = vmatmul.mubr.bf16.gmra.mxu0 %v4141
  %v4327 = vpop.f32.mrf.mxu0
  %v4328 = vadd.f32 0.0, %v4327
  %v4329 = vpop.f32.mrf.mxu0
  %v4330 = vpop.f32.mrf.mxu0
  %v4331 = vadd.f32 0.0, %v4330
  %v4332 = vpop.f32.mrf.mxu0
  %4333 = vmatprep.mubr.bf16.mxu0 0
  %4334 = vmatmul.mubr.bf16.gmra.mxu0 %v4144
  %v4335 = vpop.f32.mrf.mxu0
  %v4336 = vpop.f32.mrf.mxu0
  %v4337 = vpop.f32.mrf.mxu0
  %v4338 = vadd.f32 0.0, %v4337
  %v4339 = vpop.f32.mrf.mxu0
  %4340 = vmatprep.mubr.bf16.mxu0 0
  %4341 = vmatmul.mubr.bf16.gmra.mxu0 %v4147
  %v4342 = vpop.f32.mrf.mxu0
  %v4343 = vadd.f32 0.0, %v4342
  %v4344 = vpop.f32.mrf.mxu0
  %v4345 = vpop.f32.mrf.mxu0
  %v4346 = vpop.f32.mrf.mxu0
  %4347 = vmatprep.mubr.bf16.mxu0 0
  %4348 = vmatmul.mubr.bf16.gmra.mxu0 %v4150
  %v4349 = vpop.f32.mrf.mxu0
  %v4350 = vadd.f32 0.0, %v4349
  %v4351 = vpop.f32.mrf.mxu0
  %v4352 = vpop.f32.mrf.mxu0
  %v4353 = vadd.f32 0.0, %v4352
  %v4354 = vpop.f32.mrf.mxu0
  %4355 = vmatprep.mubr.bf16.mxu0 0
  %4356 = vmatmul.mubr.bf16.gmra.mxu0 %v4153
  %v4357 = vpop.f32.mrf.mxu0
  %v4358 = vpop.f32.mrf.mxu0
  %v4359 = vpop.f32.mrf.mxu0
  %v4360 = vadd.f32 0.0, %v4359
  %v4361 = vpop.f32.mrf.mxu0
  %4362 = vmatprep.mubr.bf16.mxu0 0
  %4363 = vmatmul.mubr.bf16.gmra.mxu0 %v4156
  %v4364 = vpop.f32.mrf.mxu0
  %v4365 = vadd.f32 0.0, %v4364
  %v4366 = vpop.f32.mrf.mxu0
  %v4367 = vpop.f32.mrf.mxu0
  %v4368 = vpop.f32.mrf.mxu0
  %4369 = vdwg.mxu0
  %v4370 = vadd.f32 %v3712, %v4196
  %v4371 = vadd.f32 %v3715, %v4199
  %v4372 = vadd.f32 %v3722, %v4206
  %v4373 = vadd.f32 %v3727, %v4211
  %v4374 = vadd.f32 %v3734, %v4218
  %v4375 = vadd.f32 %v3737, %v4221
  %v4376 = vadd.f32 %v3744, %v4228
  %v4377 = vadd.f32 %v3749, %v4233
  %v4378 = vadd.f32 %v3756, %v4240
  %v4379 = vadd.f32 %v3759, %v4243
  %v4380 = vadd.f32 %v3766, %v4250
  %v4381 = vadd.f32 %v3771, %v4255
  %v4382 = vadd.f32 %v3778, %v4262
  %v4383 = vadd.f32 %v3781, %v4265
  %v4384 = vadd.f32 %v3788, %v4272
  %v4385 = vadd.f32 %v3793, %v4277
  %v4386 = vadd.f32 %v3800, %v4284
  %v4387 = vadd.f32 %v3803, %v4287
  %v4388 = vadd.f32 %v3810, %v4294
  %v4389 = vadd.f32 %v3815, %v4299
  %v4390 = vadd.f32 %v3822, %v4306
  %v4391 = vadd.f32 %v3825, %v4309
  %v4392 = vadd.f32 %v3832, %v4316
  %v4393 = vadd.f32 %v3837, %v4321
  %v4394 = vadd.f32 %v3844, %v4328
  %v4395 = vadd.f32 %v3847, %v4331
  %v4396 = vadd.f32 %v3854, %v4338
  %v4397 = vadd.f32 %v3859, %v4343
  %v4398 = vadd.f32 %v3866, %v4350
  %v4399 = vadd.f32 %v3869, %v4353
  %v4400 = vadd.f32 %v3876, %v4360
  %v4401 = vadd.f32 %v3881, %v4365
  %v4402 = vld [vmem:[#allocation2 + $0x24] sm:$0xf]
  %v4403 = vld [vmem:[#allocation2 + $0x28] sm:$0xf]
  %v4404 = vld [vmem:[#allocation2 + $0x2c] sm:$0xf]
  %v4405 = vld [vmem:[#allocation2 + $0x30] sm:$0xf]
  %v4406 = vld [vmem:[#allocation2 + $0x34] sm:$0xf]
  %v4407 = vld [vmem:[#allocation2 + $0x38] sm:$0xf]
  %v4408 = vld [vmem:[#allocation2 + $0x3c] sm:$0xf]
  %v4409 = vld [vmem:[#allocation2 + $0x40] sm:$0xf]
  %v4410 = vld [vmem:[#allocation2 + $0x44] sm:$0xf]
  %v4411 = vld [vmem:[#allocation2 + $0x48] sm:$0xf]
  %v4412 = vld [vmem:[#allocation2 + $0x4c] sm:$0xf]
  %v4413 = vld [vmem:[#allocation2 + $0x50] sm:$0xf]
  %v4414 = vld [vmem:[#allocation2 + $0x54] sm:$0xf]
  %v4415 = vld [vmem:[#allocation2 + $0x58] sm:$0xf]
  %v4416 = vld [vmem:[#allocation2 + $0x5c] sm:$0xf]
  %v4417 = vld [vmem:[#allocation2 + $0x60] sm:$0xf]
  %v4418 = vld [vmem:[#allocation2 + $0x64] sm:$0xf]
  %v4419 = vld [vmem:[#allocation2 + $0x68] sm:$0xf]
  %v4420 = vld [vmem:[#allocation2 + $0x6c] sm:$0xf]
  %v4421 = vld [vmem:[#allocation2 + $0x70] sm:$0xf]
  %v4422 = vld [vmem:[#allocation2 + $0x74] sm:$0xf]
  %v4423 = vld [vmem:[#allocation2 + $0x78] sm:$0xf]
  %v4424 = vld [vmem:[#allocation2 + $0x7c] sm:$0xf]
  %v4425 = vld [vmem:[#allocation2 + $0x80] sm:$0xf]
  %v4426 = vld [vmem:[#allocation2 + $0x84] sm:$0xf]
  %v4427 = vld [vmem:[#allocation2 + $0x88] sm:$0xf]
  %v4428 = vld [vmem:[#allocation2 + $0x8c] sm:$0xf]
  %v4429 = vld [vmem:[#allocation2 + $0x90] sm:$0xf]
  %v4430 = vld [vmem:[#allocation2 + $0x94] sm:$0xf]
  %v4431 = vld [vmem:[#allocation2 + $0x98] sm:$0xf]
  %v4432 = vld [vmem:[#allocation2 + $0x9c] sm:$0xf]
  %v4433 = vld [vmem:[#allocation2 + $0xa0] sm:$0xf]
  %v4434 = vld [vmem:[#allocation2 + $0xa4] sm:$0xf]
  %v4435 = vld [vmem:[#allocation2 + $0xa8] sm:$0xf]
  %v4436 = vld [vmem:[#allocation2 + $0xac] sm:$0xf]
  %v4437 = vld [vmem:[#allocation2 + $0xb0] sm:$0xf]
  %v4438 = vld [vmem:[#allocation2 + $0xb4] sm:$0xf]
  %v4439 = vld [vmem:[#allocation2 + $0xb8] sm:$0xf]
  %v4440 = vld [vmem:[#allocation2 + $0xbc] sm:$0xf]
  %v4441 = vld [vmem:[#allocation2 + $0xc0] sm:$0xf]
  %v4442 = vld [vmem:[#allocation2 + $0xc4] sm:$0xf]
  %v4443 = vld [vmem:[#allocation2 + $0xc8] sm:$0xf]
  %v4444 = vld [vmem:[#allocation2 + $0xcc] sm:$0xf]
  %v4445 = vld [vmem:[#allocation2 + $0xd0] sm:$0xf]
  %v4446 = vld [vmem:[#allocation2 + $0xd4] sm:$0xf]
  %v4447 = vld [vmem:[#allocation2 + $0xd8] sm:$0xf]
  %v4448 = vld [vmem:[#allocation2 + $0xdc] sm:$0xf]
  %v4449 = vld [vmem:[#allocation2 + $0xe0] sm:$0xf]
  %s4450 = scalar_lea.vmem %s1, 96
  %v4451 = vld [vmem:[%s4450] sm:$0xf]
  %v4452 = vld [vmem:[%s4450 + $0x4] sm:$0xf]
  %v4453 = vld [vmem:[%s4450 + $0x8] sm:$0xf]
  %v4454 = vld [vmem:[%s4450 + $0xc] sm:$0xf]
  %v4455 = vld [vmem:[%s4450 + $0x10] sm:$0xf]
  %v4456 = vld [vmem:[%s4450 + $0x14] sm:$0xf]
  %v4457 = vld [vmem:[%s4450 + $0x18] sm:$0xf]
  %v4458 = vld [vmem:[%s4450 + $0x1c] sm:$0x3]
  %v4507 = vunpack.c.l.b16 %v4402
  %v4508 = vunpack.c.l.b16 %v4403
  %v4509 = vunpack.c.l.b16 %v4404
  %v4510 = vunpack.c.l.b16 %v4405
  %v4511 = vunpack.c.l.b16 %v4406
  %v4512 = vunpack.c.l.b16 %v4407
  %v4513 = vunpack.c.l.b16 %v4408
  %v4514 = vunpack.c.l.b16 %v4409
  %v4515 = vunpack.c.l.b16 %v4410
  %v4516 = vunpack.c.l.b16 %v4411
  %v4517 = vunpack.c.l.b16 %v4412
  %v4518 = vunpack.c.l.b16 %v4413
  %v4519 = vunpack.c.l.b16 %v4414
  %v4520 = vunpack.c.l.b16 %v4415
  %v4521 = vunpack.c.l.b16 %v4416
  %v4522 = vunpack.c.l.b16 %v4417
  %v4523 = vunpack.c.l.b16 %v4418
  %v4524 = vunpack.c.l.b16 %v4419
  %v4525 = vunpack.c.l.b16 %v4420
  %v4526 = vunpack.c.l.b16 %v4421
  %v4527 = vunpack.c.l.b16 %v4422
  %v4528 = vunpack.c.l.b16 %v4423
  %v4529 = vunpack.c.l.b16 %v4424
  %v4530 = vunpack.c.l.b16 %v4425
  %v4531 = vunpack.c.l.b16 %v4426
  %v4532 = vunpack.c.l.b16 %v4427
  %v4533 = vunpack.c.l.b16 %v4428
  %v4534 = vunpack.c.l.b16 %v4429
  %v4535 = vunpack.c.l.b16 %v4430
  %v4536 = vunpack.c.l.b16 %v4431
  %v4537 = vunpack.c.l.b16 %v4432
  %v4538 = vunpack.c.l.b16 %v4433
  %v4539 = vunpack.c.l.b16 %v4434
  %v4540 = vunpack.c.l.b16 %v4435
  %v4541 = vunpack.c.l.b16 %v4436
  %v4542 = vunpack.c.l.b16 %v4437
  %v4543 = vunpack.c.l.b16 %v4438
  %v4544 = vunpack.c.l.b16 %v4439
  %v4545 = vunpack.c.l.b16 %v4440
  %v4546 = vunpack.c.l.b16 %v4441
  %v4547 = vunpack.c.l.b16 %v4442
  %v4548 = vunpack.c.l.b16 %v4443
  %v4549 = vunpack.c.l.b16 %v4444
  %v4550 = vunpack.c.l.b16 %v4445
  %v4551 = vunpack.c.l.b16 %v4446
  %v4552 = vunpack.c.l.b16 %v4447
  %v4553 = vunpack.c.l.b16 %v4448
  %v4554 = vunpack.c.l.b16 %v4449
  %v4555 = vpack.c.b16 %v4508, %v4507
  %v4556 = vpack.c.b16 %v4510, %v4509
  %v4557 = vpack.c.b16 %v4512, %v4511
  %v4558 = vpack.c.b16 %v4514, %v4513
  %v4559 = vpack.c.b16 %v4516, %v4515
  %v4560 = vpack.c.b16 %v4518, %v4517
  %v4561 = vpack.c.b16 %v4520, %v4519
  %v4562 = vpack.c.b16 %v4522, %v4521
  %v4563 = vpack.c.b16 %v4524, %v4523
  %v4564 = vpack.c.b16 %v4526, %v4525
  %v4565 = vpack.c.b16 %v4528, %v4527
  %v4566 = vpack.c.b16 %v4530, %v4529
  %v4567 = vpack.c.b16 %v4532, %v4531
  %v4568 = vpack.c.b16 %v4534, %v4533
  %v4569 = vpack.c.b16 %v4536, %v4535
  %v4570 = vpack.c.b16 %v4538, %v4537
  %v4571 = vpack.c.b16 %v4540, %v4539
  %v4572 = vpack.c.b16 %v4542, %v4541
  %v4573 = vpack.c.b16 %v4544, %v4543
  %v4574 = vpack.c.b16 %v4546, %v4545
  %v4575 = vpack.c.b16 %v4548, %v4547
  %v4576 = vpack.c.b16 %v4550, %v4549
  %v4577 = vpack.c.b16 %v4552, %v4551
  %v4578 = vpack.c.b16 %v4554, %v4553
  %v4587 = vunpack.c.l.b16 %v4451
  %v4588 = vunpack.c.l.b16 %v4452
  %v4589 = vunpack.c.l.b16 %v4453
  %v4590 = vunpack.c.l.b16 %v4454
  %v4591 = vunpack.c.l.b16 %v4455
  %v4592 = vunpack.c.l.b16 %v4456
  %v4593 = vunpack.c.l.b16 %v4457
  %v4594 = vunpack.c.l.b16 %v4458
  %v4595 = vpack.c.b16 %v4588, %v4587
  %v4596 = vpack.c.b16 %v4590, %v4589
  %v4597 = vpack.c.b16 %v4592, %v4591
  %v4598 = vpack.c.b16 %v4594, %v4593
  %v4603 = vsel %vm3263, %v4555, 0
  %v4606 = vsel %vm3263, %v4556, 0
  %v4609 = vsel %vm3263, %v4557, 0
  %v4612 = vsel %vm3263, %v4558, 0
  %v4615 = vsel %vm3263, %v4559, 0
  %v4618 = vsel %vm3263, %v4560, 0
  %v4621 = vsel %vm3263, %v4561, 0
  %v4624 = vsel %vm3263, %v4562, 0
  %v4627 = vsel %vm3263, %v4563, 0
  %v4630 = vsel %vm3263, %v4564, 0
  %v4633 = vsel %vm3263, %v4565, 0
  %v4636 = vsel %vm3263, %v4566, 0
  %v4639 = vsel %vm3263, %v4567, 0
  %v4642 = vsel %vm3263, %v4568, 0
  %v4645 = vsel %vm3263, %v4569, 0
  %v4648 = vsel %vm3263, %v4570, 0
  %v4651 = vsel %vm3263, %v4571, 0
  %v4654 = vsel %vm3263, %v4572, 0
  %v4657 = vsel %vm3263, %v4573, 0
  %v4660 = vsel %vm3263, %v4574, 0
  %v4663 = vsel %vm3263, %v4575, 0
  %v4666 = vsel %vm3263, %v4576, 0
  %v4669 = vsel %vm3263, %v4577, 0
  %v4672 = vsel %vm3263, %v4578, 0
  %v4675 = vsel %vm3336, %v4598, 0
  %4677 = vmatprep.subr.bf16.mxu0 0
  %4678 = vmatpush1.bf16.msra.mxu0 0
  %4679 = vmatprep.subr.bf16.mxu0 0
  %4680 = vmatpush1.bf16.msra.mxu0 0
  %4681 = vmatprep.subr.bf16.mxu0 0
  %4682 = vmatpush1.bf16.msra.mxu0 0
  %4683 = vmatprep.subr.bf16.mxu0 0
  %4684 = vmatpush1.bf16.msra.mxu0 0
  %4685 = vmatprep.subr.bf16.mxu0 0
  %4686 = vmatpush1.bf16.msra.mxu0 %v4675
  %4687 = vmatprep.subr.bf16.mxu0 0
  %4688 = vmatpush1.bf16.msra.mxu0 %v4597
  %4689 = vmatprep.subr.bf16.mxu0 0
  %4690 = vmatpush1.bf16.msra.mxu0 %v4596
  %4691 = vmatprep.subr.bf16.mxu0 0
  %4692 = vmatpush1.bf16.msra.mxu0 %v4595
  %4693 = vmatprep.subr.bf16.mxu0 0
  %4694 = vmatpush2.bf16.msra.mxu0 0
  %4695 = vmatprep.subr.bf16.mxu0 0
  %4696 = vmatpush2.bf16.msra.mxu0 0
  %4697 = vmatprep.subr.bf16.mxu0 0
  %4698 = vmatpush2.bf16.msra.mxu0 0
  %4699 = vmatprep.subr.bf16.mxu0 0
  %4700 = vmatpush2.bf16.msra.mxu0 0
  %4701 = vmatprep.subr.bf16.mxu0 0
  %4702 = vmatpush2.bf16.msra.mxu0 0
  %4703 = vmatprep.subr.bf16.mxu0 0
  %4704 = vmatpush2.bf16.msra.mxu0 0
  %4705 = vmatprep.subr.bf16.mxu0 0
  %4706 = vmatpush2.bf16.msra.mxu0 0
  %4707 = vmatprep.subr.bf16.mxu0 0
  %4708 = vmatpush2.bf16.msra.mxu0 0
  %4709 = vmatprep.mubr.bf16.mxu0 0
  %4710 = vmatmul.mubr.bf16.gmra.mxu0 %v4603
  %v4711 = vpop.f32.mrf.mxu0
  %v4712 = vadd.f32 0.0, %v4711
  %v4713 = vpop.f32.mrf.mxu0
  %v4714 = vpop.f32.mrf.mxu0
  %v4715 = vadd.f32 0.0, %v4714
  %v4716 = vpop.f32.mrf.mxu0
  %4717 = vmatprep.mubr.bf16.mxu0 0
  %4718 = vmatmul.mubr.bf16.gmra.mxu0 %v4606
  %v4719 = vpop.f32.mrf.mxu0
  %v4720 = vpop.f32.mrf.mxu0
  %v4721 = vpop.f32.mrf.mxu0
  %v4722 = vadd.f32 0.0, %v4721
  %v4723 = vpop.f32.mrf.mxu0
  %4724 = vmatprep.mubr.bf16.mxu0 0
  %4725 = vmatmul.mubr.bf16.gmra.mxu0 %v4609
  %v4726 = vpop.f32.mrf.mxu0
  %v4727 = vadd.f32 0.0, %v4726
  %v4728 = vpop.f32.mrf.mxu0
  %v4729 = vpop.f32.mrf.mxu0
  %v4730 = vpop.f32.mrf.mxu0
  %4731 = vmatprep.mubr.bf16.mxu0 0
  %4732 = vmatmul.mubr.bf16.gmra.mxu0 %v4612
  %v4733 = vpop.f32.mrf.mxu0
  %v4734 = vadd.f32 0.0, %v4733
  %v4735 = vpop.f32.mrf.mxu0
  %v4736 = vpop.f32.mrf.mxu0
  %v4737 = vadd.f32 0.0, %v4736
  %v4738 = vpop.f32.mrf.mxu0
  %4739 = vmatprep.mubr.bf16.mxu0 0
  %4740 = vmatmul.mubr.bf16.gmra.mxu0 %v4615
  %v4741 = vpop.f32.mrf.mxu0
  %v4742 = vpop.f32.mrf.mxu0
  %v4743 = vpop.f32.mrf.mxu0
  %v4744 = vadd.f32 0.0, %v4743
  %v4745 = vpop.f32.mrf.mxu0
  %4746 = vmatprep.mubr.bf16.mxu0 0
  %4747 = vmatmul.mubr.bf16.gmra.mxu0 %v4618
  %v4748 = vpop.f32.mrf.mxu0
  %v4749 = vadd.f32 0.0, %v4748
  %v4750 = vpop.f32.mrf.mxu0
  %v4751 = vpop.f32.mrf.mxu0
  %v4752 = vpop.f32.mrf.mxu0
  %4753 = vmatprep.mubr.bf16.mxu0 0
  %4754 = vmatmul.mubr.bf16.gmra.mxu0 %v4621
  %v4755 = vpop.f32.mrf.mxu0
  %v4756 = vadd.f32 0.0, %v4755
  %v4757 = vpop.f32.mrf.mxu0
  %v4758 = vpop.f32.mrf.mxu0
  %v4759 = vadd.f32 0.0, %v4758
  %v4760 = vpop.f32.mrf.mxu0
  %4761 = vmatprep.mubr.bf16.mxu0 0
  %4762 = vmatmul.mubr.bf16.gmra.mxu0 %v4624
  %v4763 = vpop.f32.mrf.mxu0
  %v4764 = vpop.f32.mrf.mxu0
  %v4765 = vpop.f32.mrf.mxu0
  %v4766 = vadd.f32 0.0, %v4765
  %v4767 = vpop.f32.mrf.mxu0
  %4768 = vmatprep.mubr.bf16.mxu0 0
  %4769 = vmatmul.mubr.bf16.gmra.mxu0 %v4627
  %v4770 = vpop.f32.mrf.mxu0
  %v4771 = vadd.f32 0.0, %v4770
  %v4772 = vpop.f32.mrf.mxu0
  %v4773 = vpop.f32.mrf.mxu0
  %v4774 = vpop.f32.mrf.mxu0
  %4775 = vmatprep.mubr.bf16.mxu0 0
  %4776 = vmatmul.mubr.bf16.gmra.mxu0 %v4630
  %v4777 = vpop.f32.mrf.mxu0
  %v4778 = vadd.f32 0.0, %v4777
  %v4779 = vpop.f32.mrf.mxu0
  %v4780 = vpop.f32.mrf.mxu0
  %v4781 = vadd.f32 0.0, %v4780
  %v4782 = vpop.f32.mrf.mxu0
  %4783 = vmatprep.mubr.bf16.mxu0 0
  %4784 = vmatmul.mubr.bf16.gmra.mxu0 %v4633
  %v4785 = vpop.f32.mrf.mxu0
  %v4786 = vpop.f32.mrf.mxu0
  %v4787 = vpop.f32.mrf.mxu0
  %v4788 = vadd.f32 0.0, %v4787
  %v4789 = vpop.f32.mrf.mxu0
  %4790 = vmatprep.mubr.bf16.mxu0 0
  %4791 = vmatmul.mubr.bf16.gmra.mxu0 %v4636
  %v4792 = vpop.f32.mrf.mxu0
  %v4793 = vadd.f32 0.0, %v4792
  %v4794 = vpop.f32.mrf.mxu0
  %v4795 = vpop.f32.mrf.mxu0
  %v4796 = vpop.f32.mrf.mxu0
  %4797 = vmatprep.mubr.bf16.mxu0 0
  %4798 = vmatmul.mubr.bf16.gmra.mxu0 %v4639
  %v4799 = vpop.f32.mrf.mxu0
  %v4800 = vadd.f32 0.0, %v4799
  %v4801 = vpop.f32.mrf.mxu0
  %v4802 = vpop.f32.mrf.mxu0
  %v4803 = vadd.f32 0.0, %v4802
  %v4804 = vpop.f32.mrf.mxu0
  %4805 = vmatprep.mubr.bf16.mxu0 0
  %4806 = vmatmul.mubr.bf16.gmra.mxu0 %v4642
  %v4807 = vpop.f32.mrf.mxu0
  %v4808 = vpop.f32.mrf.mxu0
  %v4809 = vpop.f32.mrf.mxu0
  %v4810 = vadd.f32 0.0, %v4809
  %v4811 = vpop.f32.mrf.mxu0
  %4812 = vmatprep.mubr.bf16.mxu0 0
  %4813 = vmatmul.mubr.bf16.gmra.mxu0 %v4645
  %v4814 = vpop.f32.mrf.mxu0
  %v4815 = vadd.f32 0.0, %v4814
  %v4816 = vpop.f32.mrf.mxu0
  %v4817 = vpop.f32.mrf.mxu0
  %v4818 = vpop.f32.mrf.mxu0
  %4819 = vmatprep.mubr.bf16.mxu0 0
  %4820 = vmatmul.mubr.bf16.gmra.mxu0 %v4648
  %v4821 = vpop.f32.mrf.mxu0
  %v4822 = vadd.f32 0.0, %v4821
  %v4823 = vpop.f32.mrf.mxu0
  %v4824 = vpop.f32.mrf.mxu0
  %v4825 = vadd.f32 0.0, %v4824
  %v4826 = vpop.f32.mrf.mxu0
  %4827 = vmatprep.mubr.bf16.mxu0 0
  %4828 = vmatmul.mubr.bf16.gmra.mxu0 %v4651
  %v4829 = vpop.f32.mrf.mxu0
  %v4830 = vpop.f32.mrf.mxu0
  %v4831 = vpop.f32.mrf.mxu0
  %v4832 = vadd.f32 0.0, %v4831
  %v4833 = vpop.f32.mrf.mxu0
  %4834 = vmatprep.mubr.bf16.mxu0 0
  %4835 = vmatmul.mubr.bf16.gmra.mxu0 %v4654
  %v4836 = vpop.f32.mrf.mxu0
  %v4837 = vadd.f32 0.0, %v4836
  %v4838 = vpop.f32.mrf.mxu0
  %v4839 = vpop.f32.mrf.mxu0
  %v4840 = vpop.f32.mrf.mxu0
  %4841 = vmatprep.mubr.bf16.mxu0 0
  %4842 = vmatmul.mubr.bf16.gmra.mxu0 %v4657
  %v4843 = vpop.f32.mrf.mxu0
  %v4844 = vadd.f32 0.0, %v4843
  %v4845 = vpop.f32.mrf.mxu0
  %v4846 = vpop.f32.mrf.mxu0
  %v4847 = vadd.f32 0.0, %v4846
  %v4848 = vpop.f32.mrf.mxu0
  %4849 = vmatprep.mubr.bf16.mxu0 0
  %4850 = vmatmul.mubr.bf16.gmra.mxu0 %v4660
  %v4851 = vpop.f32.mrf.mxu0
  %v4852 = vpop.f32.mrf.mxu0
  %v4853 = vpop.f32.mrf.mxu0
  %v4854 = vadd.f32 0.0, %v4853
  %v4855 = vpop.f32.mrf.mxu0
  %4856 = vmatprep.mubr.bf16.mxu0 0
  %4857 = vmatmul.mubr.bf16.gmra.mxu0 %v4663
  %v4858 = vpop.f32.mrf.mxu0
  %v4859 = vadd.f32 0.0, %v4858
  %v4860 = vpop.f32.mrf.mxu0
  %v4861 = vpop.f32.mrf.mxu0
  %v4862 = vpop.f32.mrf.mxu0
  %4863 = vmatprep.mubr.bf16.mxu0 0
  %4864 = vmatmul.mubr.bf16.gmra.mxu0 %v4666
  %v4865 = vpop.f32.mrf.mxu0
  %v4866 = vadd.f32 0.0, %v4865
  %v4867 = vpop.f32.mrf.mxu0
  %v4868 = vpop.f32.mrf.mxu0
  %v4869 = vadd.f32 0.0, %v4868
  %v4870 = vpop.f32.mrf.mxu0
  %4871 = vmatprep.mubr.bf16.mxu0 0
  %4872 = vmatmul.mubr.bf16.gmra.mxu0 %v4669
  %v4873 = vpop.f32.mrf.mxu0
  %v4874 = vpop.f32.mrf.mxu0
  %v4875 = vpop.f32.mrf.mxu0
  %v4876 = vadd.f32 0.0, %v4875
  %v4877 = vpop.f32.mrf.mxu0
  %4878 = vmatprep.mubr.bf16.mxu0 0
  %4879 = vmatmul.mubr.bf16.gmra.mxu0 %v4672
  %v4880 = vpop.f32.mrf.mxu0
  %v4881 = vadd.f32 0.0, %v4880
  %v4882 = vpop.f32.mrf.mxu0
  %v4883 = vpop.f32.mrf.mxu0
  %v4884 = vpop.f32.mrf.mxu0
  %4885 = vdwg.mxu0
  %v4886 = vadd.f32 %v4370, %v4712
  %v4887 = vadd.f32 %v4371, %v4715
  %v4888 = vadd.f32 %v4372, %v4722
  %v4889 = vadd.f32 %v4373, %v4727
  %v4890 = vadd.f32 %v4374, %v4734
  %v4891 = vadd.f32 %v4375, %v4737
  %v4892 = vadd.f32 %v4376, %v4744
  %v4893 = vadd.f32 %v4377, %v4749
  %v4894 = vadd.f32 %v4378, %v4756
  %v4895 = vadd.f32 %v4379, %v4759
  %v4896 = vadd.f32 %v4380, %v4766
  %v4897 = vadd.f32 %v4381, %v4771
  %v4898 = vadd.f32 %v4382, %v4778
  %v4899 = vadd.f32 %v4383, %v4781
  %v4900 = vadd.f32 %v4384, %v4788
  %v4901 = vadd.f32 %v4385, %v4793
  %v4902 = vadd.f32 %v4386, %v4800
  %v4903 = vadd.f32 %v4387, %v4803
  %v4904 = vadd.f32 %v4388, %v4810
  %v4905 = vadd.f32 %v4389, %v4815
  %v4906 = vadd.f32 %v4390, %v4822
  %v4907 = vadd.f32 %v4391, %v4825
  %v4908 = vadd.f32 %v4392, %v4832
  %v4909 = vadd.f32 %v4393, %v4837
  %v4910 = vadd.f32 %v4394, %v4844
  %v4911 = vadd.f32 %v4395, %v4847
  %v4912 = vadd.f32 %v4396, %v4854
  %v4913 = vadd.f32 %v4397, %v4859
  %v4914 = vadd.f32 %v4398, %v4866
  %v4915 = vadd.f32 %v4399, %v4869
  %v4916 = vadd.f32 %v4400, %v4876
  %v4917 = vadd.f32 %v4401, %v4881
  %v4918 = vld [vmem:[#allocation2 + $0x30] sm:$0xf]
  %v4919 = vld [vmem:[#allocation2 + $0x34] sm:$0xf]
  %v4920 = vld [vmem:[#allocation2 + $0x38] sm:$0xf]
  %v4921 = vld [vmem:[#allocation2 + $0x3c] sm:$0xf]
  %v4922 = vld [vmem:[#allocation2 + $0x40] sm:$0xf]
  %v4923 = vld [vmem:[#allocation2 + $0x44] sm:$0xf]
  %v4924 = vld [vmem:[#allocation2 + $0x48] sm:$0xf]
  %v4925 = vld [vmem:[#allocation2 + $0x4c] sm:$0xf]
  %v4926 = vld [vmem:[#allocation2 + $0x50] sm:$0xf]
  %v4927 = vld [vmem:[#allocation2 + $0x54] sm:$0xf]
  %v4928 = vld [vmem:[#allocation2 + $0x58] sm:$0xf]
  %v4929 = vld [vmem:[#allocation2 + $0x5c] sm:$0xf]
  %v4930 = vld [vmem:[#allocation2 + $0x60] sm:$0xf]
  %v4931 = vld [vmem:[#allocation2 + $0x64] sm:$0xf]
  %v4932 = vld [vmem:[#allocation2 + $0x68] sm:$0xf]
  %v4933 = vld [vmem:[#allocation2 + $0x6c] sm:$0xf]
  %v4934 = vld [vmem:[#allocation2 + $0x70] sm:$0xf]
  %v4935 = vld [vmem:[#allocation2 + $0x74] sm:$0xf]
  %v4936 = vld [vmem:[#allocation2 + $0x78] sm:$0xf]
  %v4937 = vld [vmem:[#allocation2 + $0x7c] sm:$0xf]
  %v4938 = vld [vmem:[#allocation2 + $0x80] sm:$0xf]
  %v4939 = vld [vmem:[#allocation2 + $0x84] sm:$0xf]
  %v4940 = vld [vmem:[#allocation2 + $0x88] sm:$0xf]
  %v4941 = vld [vmem:[#allocation2 + $0x8c] sm:$0xf]
  %v4942 = vld [vmem:[#allocation2 + $0x90] sm:$0xf]
  %v4943 = vld [vmem:[#allocation2 + $0x94] sm:$0xf]
  %v4944 = vld [vmem:[#allocation2 + $0x98] sm:$0xf]
  %v4945 = vld [vmem:[#allocation2 + $0x9c] sm:$0xf]
  %v4946 = vld [vmem:[#allocation2 + $0xa0] sm:$0xf]
  %v4947 = vld [vmem:[#allocation2 + $0xa4] sm:$0xf]
  %v4948 = vld [vmem:[#allocation2 + $0xa8] sm:$0xf]
  %v4949 = vld [vmem:[#allocation2 + $0xac] sm:$0xf]
  %v4950 = vld [vmem:[#allocation2 + $0xb0] sm:$0xf]
  %v4951 = vld [vmem:[#allocation2 + $0xb4] sm:$0xf]
  %v4952 = vld [vmem:[#allocation2 + $0xb8] sm:$0xf]
  %v4953 = vld [vmem:[#allocation2 + $0xbc] sm:$0xf]
  %v4954 = vld [vmem:[#allocation2 + $0xc0] sm:$0xf]
  %v4955 = vld [vmem:[#allocation2 + $0xc4] sm:$0xf]
  %v4956 = vld [vmem:[#allocation2 + $0xc8] sm:$0xf]
  %v4957 = vld [vmem:[#allocation2 + $0xcc] sm:$0xf]
  %v4958 = vld [vmem:[#allocation2 + $0xd0] sm:$0xf]
  %v4959 = vld [vmem:[#allocation2 + $0xd4] sm:$0xf]
  %v4960 = vld [vmem:[#allocation2 + $0xd8] sm:$0xf]
  %v4961 = vld [vmem:[#allocation2 + $0xdc] sm:$0xf]
  %v4962 = vld [vmem:[#allocation2 + $0xe0] sm:$0xf]
  %v4963 = vld [vmem:[#allocation2 + $0xe4] sm:$0xf]
  %v4964 = vld [vmem:[#allocation2 + $0xe8] sm:$0xf]
  %v4965 = vld [vmem:[#allocation2 + $0xec] sm:$0xf]
  %s4966 = scalar_lea.vmem %s1, 128
  %v4967 = vld [vmem:[%s4966] sm:$0xf]
  %v4968 = vld [vmem:[%s4966 + $0x4] sm:$0xf]
  %v4969 = vld [vmem:[%s4966 + $0x8] sm:$0xf]
  %v4970 = vld [vmem:[%s4966 + $0xc] sm:$0xf]
  %v4971 = vld [vmem:[%s4966 + $0x10] sm:$0xf]
  %v4972 = vld [vmem:[%s4966 + $0x14] sm:$0xf]
  %v4973 = vld [vmem:[%s4966 + $0x18] sm:$0xf]
  %v4974 = vld [vmem:[%s4966 + $0x1c] sm:$0x3]
  %v5023 = vunpack.c.l.b16 %v4918
  %v5024 = vunpack.c.l.b16 %v4919
  %v5025 = vunpack.c.l.b16 %v4920
  %v5026 = vunpack.c.l.b16 %v4921
  %v5027 = vunpack.c.l.b16 %v4922
  %v5028 = vunpack.c.l.b16 %v4923
  %v5029 = vunpack.c.l.b16 %v4924
  %v5030 = vunpack.c.l.b16 %v4925
  %v5031 = vunpack.c.l.b16 %v4926
  %v5032 = vunpack.c.l.b16 %v4927
  %v5033 = vunpack.c.l.b16 %v4928
  %v5034 = vunpack.c.l.b16 %v4929
  %v5035 = vunpack.c.l.b16 %v4930
  %v5036 = vunpack.c.l.b16 %v4931
  %v5037 = vunpack.c.l.b16 %v4932
  %v5038 = vunpack.c.l.b16 %v4933
  %v5039 = vunpack.c.l.b16 %v4934
  %v5040 = vunpack.c.l.b16 %v4935
  %v5041 = vunpack.c.l.b16 %v4936
  %v5042 = vunpack.c.l.b16 %v4937
  %v5043 = vunpack.c.l.b16 %v4938
  %v5044 = vunpack.c.l.b16 %v4939
  %v5045 = vunpack.c.l.b16 %v4940
  %v5046 = vunpack.c.l.b16 %v4941
  %v5047 = vunpack.c.l.b16 %v4942
  %v5048 = vunpack.c.l.b16 %v4943
  %v5049 = vunpack.c.l.b16 %v4944
  %v5050 = vunpack.c.l.b16 %v4945
  %v5051 = vunpack.c.l.b16 %v4946
  %v5052 = vunpack.c.l.b16 %v4947
  %v5053 = vunpack.c.l.b16 %v4948
  %v5054 = vunpack.c.l.b16 %v4949
  %v5055 = vunpack.c.l.b16 %v4950
  %v5056 = vunpack.c.l.b16 %v4951
  %v5057 = vunpack.c.l.b16 %v4952
  %v5058 = vunpack.c.l.b16 %v4953
  %v5059 = vunpack.c.l.b16 %v4954
  %v5060 = vunpack.c.l.b16 %v4955
  %v5061 = vunpack.c.l.b16 %v4956
  %v5062 = vunpack.c.l.b16 %v4957
  %v5063 = vunpack.c.l.b16 %v4958
  %v5064 = vunpack.c.l.b16 %v4959
  %v5065 = vunpack.c.l.b16 %v4960
  %v5066 = vunpack.c.l.b16 %v4961
  %v5067 = vunpack.c.l.b16 %v4962
  %v5068 = vunpack.c.l.b16 %v4963
  %v5069 = vunpack.c.l.b16 %v4964
  %v5070 = vunpack.c.l.b16 %v4965
  %v5071 = vpack.c.b16 %v5024, %v5023
  %v5072 = vpack.c.b16 %v5026, %v5025
  %v5073 = vpack.c.b16 %v5028, %v5027
  %v5074 = vpack.c.b16 %v5030, %v5029
  %v5075 = vpack.c.b16 %v5032, %v5031
  %v5076 = vpack.c.b16 %v5034, %v5033
  %v5077 = vpack.c.b16 %v5036, %v5035
  %v5078 = vpack.c.b16 %v5038, %v5037
  %v5079 = vpack.c.b16 %v5040, %v5039
  %v5080 = vpack.c.b16 %v5042, %v5041
  %v5081 = vpack.c.b16 %v5044, %v5043
  %v5082 = vpack.c.b16 %v5046, %v5045
  %v5083 = vpack.c.b16 %v5048, %v5047
  %v5084 = vpack.c.b16 %v5050, %v5049
  %v5085 = vpack.c.b16 %v5052, %v5051
  %v5086 = vpack.c.b16 %v5054, %v5053
  %v5087 = vpack.c.b16 %v5056, %v5055
  %v5088 = vpack.c.b16 %v5058, %v5057
  %v5089 = vpack.c.b16 %v5060, %v5059
  %v5090 = vpack.c.b16 %v5062, %v5061
  %v5091 = vpack.c.b16 %v5064, %v5063
  %v5092 = vpack.c.b16 %v5066, %v5065
  %v5093 = vpack.c.b16 %v5068, %v5067
  %v5094 = vpack.c.b16 %v5070, %v5069
  %v5103 = vunpack.c.l.b16 %v4967
  %v5104 = vunpack.c.l.b16 %v4968
  %v5105 = vunpack.c.l.b16 %v4969
  %v5106 = vunpack.c.l.b16 %v4970
  %v5107 = vunpack.c.l.b16 %v4971
  %v5108 = vunpack.c.l.b16 %v4972
  %v5109 = vunpack.c.l.b16 %v4973
  %v5110 = vunpack.c.l.b16 %v4974
  %v5111 = vpack.c.b16 %v5104, %v5103
  %v5112 = vpack.c.b16 %v5106, %v5105
  %v5113 = vpack.c.b16 %v5108, %v5107
  %v5114 = vpack.c.b16 %v5110, %v5109
  %v5119 = vsel %vm3263, %v5071, 0
  %v5122 = vsel %vm3263, %v5072, 0
  %v5125 = vsel %vm3263, %v5073, 0
  %v5128 = vsel %vm3263, %v5074, 0
  %v5131 = vsel %vm3263, %v5075, 0
  %v5134 = vsel %vm3263, %v5076, 0
  %v5137 = vsel %vm3263, %v5077, 0
  %v5140 = vsel %vm3263, %v5078, 0
  %v5143 = vsel %vm3263, %v5079, 0
  %v5146 = vsel %vm3263, %v5080, 0
  %v5149 = vsel %vm3263, %v5081, 0
  %v5152 = vsel %vm3263, %v5082, 0
  %v5155 = vsel %vm3263, %v5083, 0
  %v5158 = vsel %vm3263, %v5084, 0
  %v5161 = vsel %vm3263, %v5085, 0
  %v5164 = vsel %vm3263, %v5086, 0
  %v5167 = vsel %vm3263, %v5087, 0
  %v5170 = vsel %vm3263, %v5088, 0
  %v5173 = vsel %vm3263, %v5089, 0
  %v5176 = vsel %vm3263, %v5090, 0
  %v5179 = vsel %vm3263, %v5091, 0
  %v5182 = vsel %vm3263, %v5092, 0
  %v5185 = vsel %vm3263, %v5093, 0
  %v5188 = vsel %vm3263, %v5094, 0
  %v5191 = vsel %vm3336, %v5114, 0
  %5193 = vmatprep.subr.bf16.mxu0 0
  %5194 = vmatpush1.bf16.msra.mxu0 0
  %5195 = vmatprep.subr.bf16.mxu0 0
  %5196 = vmatpush1.bf16.msra.mxu0 0
  %5197 = vmatprep.subr.bf16.mxu0 0
  %5198 = vmatpush1.bf16.msra.mxu0 0
  %5199 = vmatprep.subr.bf16.mxu0 0
  %5200 = vmatpush1.bf16.msra.mxu0 0
  %5201 = vmatprep.subr.bf16.mxu0 0
  %5202 = vmatpush1.bf16.msra.mxu0 %v5191
  %5203 = vmatprep.subr.bf16.mxu0 0
  %5204 = vmatpush1.bf16.msra.mxu0 %v5113
  %5205 = vmatprep.subr.bf16.mxu0 0
  %5206 = vmatpush1.bf16.msra.mxu0 %v5112
  %5207 = vmatprep.subr.bf16.mxu0 0
  %5208 = vmatpush1.bf16.msra.mxu0 %v5111
  %5209 = vmatprep.subr.bf16.mxu0 0
  %5210 = vmatpush2.bf16.msra.mxu0 0
  %5211 = vmatprep.subr.bf16.mxu0 0
  %5212 = vmatpush2.bf16.msra.mxu0 0
  %5213 = vmatprep.subr.bf16.mxu0 0
  %5214 = vmatpush2.bf16.msra.mxu0 0
  %5215 = vmatprep.subr.bf16.mxu0 0
  %5216 = vmatpush2.bf16.msra.mxu0 0
  %5217 = vmatprep.subr.bf16.mxu0 0
  %5218 = vmatpush2.bf16.msra.mxu0 0
  %5219 = vmatprep.subr.bf16.mxu0 0
  %5220 = vmatpush2.bf16.msra.mxu0 0
  %5221 = vmatprep.subr.bf16.mxu0 0
  %5222 = vmatpush2.bf16.msra.mxu0 0
  %5223 = vmatprep.subr.bf16.mxu0 0
  %5224 = vmatpush2.bf16.msra.mxu0 0
  %5225 = vmatprep.mubr.bf16.mxu0 0
  %5226 = vmatmul.mubr.bf16.gmra.mxu0 %v5119
  %v5227 = vpop.f32.mrf.mxu0
  %v5228 = vadd.f32 0.0, %v5227
  %v5229 = vpop.f32.mrf.mxu0
  %v5230 = vpop.f32.mrf.mxu0
  %v5231 = vadd.f32 0.0, %v5230
  %v5232 = vpop.f32.mrf.mxu0
  %5233 = vmatprep.mubr.bf16.mxu0 0
  %5234 = vmatmul.mubr.bf16.gmra.mxu0 %v5122
  %v5235 = vpop.f32.mrf.mxu0
  %v5236 = vpop.f32.mrf.mxu0
  %v5237 = vpop.f32.mrf.mxu0
  %v5238 = vadd.f32 0.0, %v5237
  %v5239 = vpop.f32.mrf.mxu0
  %5240 = vmatprep.mubr.bf16.mxu0 0
  %5241 = vmatmul.mubr.bf16.gmra.mxu0 %v5125
  %v5242 = vpop.f32.mrf.mxu0
  %v5243 = vadd.f32 0.0, %v5242
  %v5244 = vpop.f32.mrf.mxu0
  %v5245 = vpop.f32.mrf.mxu0
  %v5246 = vpop.f32.mrf.mxu0
  %5247 = vmatprep.mubr.bf16.mxu0 0
  %5248 = vmatmul.mubr.bf16.gmra.mxu0 %v5128
  %v5249 = vpop.f32.mrf.mxu0
  %v5250 = vadd.f32 0.0, %v5249
  %v5251 = vpop.f32.mrf.mxu0
  %v5252 = vpop.f32.mrf.mxu0
  %v5253 = vadd.f32 0.0, %v5252
  %v5254 = vpop.f32.mrf.mxu0
  %5255 = vmatprep.mubr.bf16.mxu0 0
  %5256 = vmatmul.mubr.bf16.gmra.mxu0 %v5131
  %v5257 = vpop.f32.mrf.mxu0
  %v5258 = vpop.f32.mrf.mxu0
  %v5259 = vpop.f32.mrf.mxu0
  %v5260 = vadd.f32 0.0, %v5259
  %v5261 = vpop.f32.mrf.mxu0
  %5262 = vmatprep.mubr.bf16.mxu0 0
  %5263 = vmatmul.mubr.bf16.gmra.mxu0 %v5134
  %v5264 = vpop.f32.mrf.mxu0
  %v5265 = vadd.f32 0.0, %v5264
  %v5266 = vpop.f32.mrf.mxu0
  %v5267 = vpop.f32.mrf.mxu0
  %v5268 = vpop.f32.mrf.mxu0
  %5269 = vmatprep.mubr.bf16.mxu0 0
  %5270 = vmatmul.mubr.bf16.gmra.mxu0 %v5137
  %v5271 = vpop.f32.mrf.mxu0
  %v5272 = vadd.f32 0.0, %v5271
  %v5273 = vpop.f32.mrf.mxu0
  %v5274 = vpop.f32.mrf.mxu0
  %v5275 = vadd.f32 0.0, %v5274
  %v5276 = vpop.f32.mrf.mxu0
  %5277 = vmatprep.mubr.bf16.mxu0 0
  %5278 = vmatmul.mubr.bf16.gmra.mxu0 %v5140
  %v5279 = vpop.f32.mrf.mxu0
  %v5280 = vpop.f32.mrf.mxu0
  %v5281 = vpop.f32.mrf.mxu0
  %v5282 = vadd.f32 0.0, %v5281
  %v5283 = vpop.f32.mrf.mxu0
  %5284 = vmatprep.mubr.bf16.mxu0 0
  %5285 = vmatmul.mubr.bf16.gmra.mxu0 %v5143
  %v5286 = vpop.f32.mrf.mxu0
  %v5287 = vadd.f32 0.0, %v5286
  %v5288 = vpop.f32.mrf.mxu0
  %v5289 = vpop.f32.mrf.mxu0
  %v5290 = vpop.f32.mrf.mxu0
  %5291 = vmatprep.mubr.bf16.mxu0 0
  %5292 = vmatmul.mubr.bf16.gmra.mxu0 %v5146
  %v5293 = vpop.f32.mrf.mxu0
  %v5294 = vadd.f32 0.0, %v5293
  %v5295 = vpop.f32.mrf.mxu0
  %v5296 = vpop.f32.mrf.mxu0
  %v5297 = vadd.f32 0.0, %v5296
  %v5298 = vpop.f32.mrf.mxu0
  %5299 = vmatprep.mubr.bf16.mxu0 0
  %5300 = vmatmul.mubr.bf16.gmra.mxu0 %v5149
  %v5301 = vpop.f32.mrf.mxu0
  %v5302 = vpop.f32.mrf.mxu0
  %v5303 = vpop.f32.mrf.mxu0
  %v5304 = vadd.f32 0.0, %v5303
  %v5305 = vpop.f32.mrf.mxu0
  %5306 = vmatprep.mubr.bf16.mxu0 0
  %5307 = vmatmul.mubr.bf16.gmra.mxu0 %v5152
  %v5308 = vpop.f32.mrf.mxu0
  %v5309 = vadd.f32 0.0, %v5308
  %v5310 = vpop.f32.mrf.mxu0
  %v5311 = vpop.f32.mrf.mxu0
  %v5312 = vpop.f32.mrf.mxu0
  %5313 = vmatprep.mubr.bf16.mxu0 0
  %5314 = vmatmul.mubr.bf16.gmra.mxu0 %v5155
  %v5315 = vpop.f32.mrf.mxu0
  %v5316 = vadd.f32 0.0, %v5315
  %v5317 = vpop.f32.mrf.mxu0
  %v5318 = vpop.f32.mrf.mxu0
  %v5319 = vadd.f32 0.0, %v5318
  %v5320 = vpop.f32.mrf.mxu0
  %5321 = vmatprep.mubr.bf16.mxu0 0
  %5322 = vmatmul.mubr.bf16.gmra.mxu0 %v5158
  %v5323 = vpop.f32.mrf.mxu0
  %v5324 = vpop.f32.mrf.mxu0
  %v5325 = vpop.f32.mrf.mxu0
  %v5326 = vadd.f32 0.0, %v5325
  %v5327 = vpop.f32.mrf.mxu0
  %5328 = vmatprep.mubr.bf16.mxu0 0
  %5329 = vmatmul.mubr.bf16.gmra.mxu0 %v5161
  %v5330 = vpop.f32.mrf.mxu0
  %v5331 = vadd.f32 0.0, %v5330
  %v5332 = vpop.f32.mrf.mxu0
  %v5333 = vpop.f32.mrf.mxu0
  %v5334 = vpop.f32.mrf.mxu0
  %5335 = vmatprep.mubr.bf16.mxu0 0
  %5336 = vmatmul.mubr.bf16.gmra.mxu0 %v5164
  %v5337 = vpop.f32.mrf.mxu0
  %v5338 = vadd.f32 0.0, %v5337
  %v5339 = vpop.f32.mrf.mxu0
  %v5340 = vpop.f32.mrf.mxu0
  %v5341 = vadd.f32 0.0, %v5340
  %v5342 = vpop.f32.mrf.mxu0
  %5343 = vmatprep.mubr.bf16.mxu0 0
  %5344 = vmatmul.mubr.bf16.gmra.mxu0 %v5167
  %v5345 = vpop.f32.mrf.mxu0
  %v5346 = vpop.f32.mrf.mxu0
  %v5347 = vpop.f32.mrf.mxu0
  %v5348 = vadd.f32 0.0, %v5347
  %v5349 = vpop.f32.mrf.mxu0
  %5350 = vmatprep.mubr.bf16.mxu0 0
  %5351 = vmatmul.mubr.bf16.gmra.mxu0 %v5170
  %v5352 = vpop.f32.mrf.mxu0
  %v5353 = vadd.f32 0.0, %v5352
  %v5354 = vpop.f32.mrf.mxu0
  %v5355 = vpop.f32.mrf.mxu0
  %v5356 = vpop.f32.mrf.mxu0
  %5357 = vmatprep.mubr.bf16.mxu0 0
  %5358 = vmatmul.mubr.bf16.gmra.mxu0 %v5173
  %v5359 = vpop.f32.mrf.mxu0
  %v5360 = vadd.f32 0.0, %v5359
  %v5361 = vpop.f32.mrf.mxu0
  %v5362 = vpop.f32.mrf.mxu0
  %v5363 = vadd.f32 0.0, %v5362
  %v5364 = vpop.f32.mrf.mxu0
  %5365 = vmatprep.mubr.bf16.mxu0 0
  %5366 = vmatmul.mubr.bf16.gmra.mxu0 %v5176
  %v5367 = vpop.f32.mrf.mxu0
  %v5368 = vpop.f32.mrf.mxu0
  %v5369 = vpop.f32.mrf.mxu0
  %v5370 = vadd.f32 0.0, %v5369
  %v5371 = vpop.f32.mrf.mxu0
  %5372 = vmatprep.mubr.bf16.mxu0 0
  %5373 = vmatmul.mubr.bf16.gmra.mxu0 %v5179
  %v5374 = vpop.f32.mrf.mxu0
  %v5375 = vadd.f32 0.0, %v5374
  %v5376 = vpop.f32.mrf.mxu0
  %v5377 = vpop.f32.mrf.mxu0
  %v5378 = vpop.f32.mrf.mxu0
  %5379 = vmatprep.mubr.bf16.mxu0 0
  %5380 = vmatmul.mubr.bf16.gmra.mxu0 %v5182
  %v5381 = vpop.f32.mrf.mxu0
  %v5382 = vadd.f32 0.0, %v5381
  %v5383 = vpop.f32.mrf.mxu0
  %v5384 = vpop.f32.mrf.mxu0
  %v5385 = vadd.f32 0.0, %v5384
  %v5386 = vpop.f32.mrf.mxu0
  %5387 = vmatprep.mubr.bf16.mxu0 0
  %5388 = vmatmul.mubr.bf16.gmra.mxu0 %v5185
  %v5389 = vpop.f32.mrf.mxu0
  %v5390 = vpop.f32.mrf.mxu0
  %v5391 = vpop.f32.mrf.mxu0
  %v5392 = vadd.f32 0.0, %v5391
  %v5393 = vpop.f32.mrf.mxu0
  %5394 = vmatprep.mubr.bf16.mxu0 0
  %5395 = vmatmul.mubr.bf16.gmra.mxu0 %v5188
  %v5396 = vpop.f32.mrf.mxu0
  %v5397 = vadd.f32 0.0, %v5396
  %v5398 = vpop.f32.mrf.mxu0
  %v5399 = vpop.f32.mrf.mxu0
  %v5400 = vpop.f32.mrf.mxu0
  %5401 = vdwg.mxu0
  %v5402 = vadd.f32 %v4886, %v5228
  %v5403 = vadd.f32 %v4887, %v5231
  %v5404 = vadd.f32 %v4888, %v5238
  %v5405 = vadd.f32 %v4889, %v5243
  %v5406 = vadd.f32 %v4890, %v5250
  %v5407 = vadd.f32 %v4891, %v5253
  %v5408 = vadd.f32 %v4892, %v5260
  %v5409 = vadd.f32 %v4893, %v5265
  %v5410 = vadd.f32 %v4894, %v5272
  %v5411 = vadd.f32 %v4895, %v5275
  %v5412 = vadd.f32 %v4896, %v5282
  %v5413 = vadd.f32 %v4897, %v5287
  %v5414 = vadd.f32 %v4898, %v5294
  %v5415 = vadd.f32 %v4899, %v5297
  %v5416 = vadd.f32 %v4900, %v5304
  %v5417 = vadd.f32 %v4901, %v5309
  %v5418 = vadd.f32 %v4902, %v5316
  %v5419 = vadd.f32 %v4903, %v5319
  %v5420 = vadd.f32 %v4904, %v5326
  %v5421 = vadd.f32 %v4905, %v5331
  %v5422 = vadd.f32 %v4906, %v5338
  %v5423 = vadd.f32 %v4907, %v5341
  %v5424 = vadd.f32 %v4908, %v5348
  %v5425 = vadd.f32 %v4909, %v5353
  %v5426 = vadd.f32 %v4910, %v5360
  %v5427 = vadd.f32 %v4911, %v5363
  %v5428 = vadd.f32 %v4912, %v5370
  %v5429 = vadd.f32 %v4913, %v5375
  %v5430 = vadd.f32 %v4914, %v5382
  %v5431 = vadd.f32 %v4915, %v5385
  %v5432 = vadd.f32 %v4916, %v5392
  %v5433 = vadd.f32 %v4917, %v5397
  %v5434 = vld [vmem:[%s2] sm:$0x1]
  %v5436 = vlaneseq
  %v5437 = vshrl.u32 %v5436, 7
  %v5438 = vsub.s32 0, %v5437
  %v5439 = vrot.slane %v5434, %v5438
  %v5441 = vadd.f32 %v5402, %v5439
  %v5442 = vadd.f32 %v5403, %v5439
  %v5443 = vadd.f32 %v5404, %v5439
  %v5444 = vadd.f32 %v5405, %v5439
  %v5445 = vadd.f32 %v5406, %v5439
  %v5446 = vadd.f32 %v5407, %v5439
  %v5447 = vadd.f32 %v5408, %v5439
  %v5448 = vadd.f32 %v5409, %v5439
  %v5449 = vadd.f32 %v5410, %v5439
  %v5450 = vadd.f32 %v5411, %v5439
  %v5451 = vadd.f32 %v5412, %v5439
  %v5452 = vadd.f32 %v5413, %v5439
  %v5453 = vadd.f32 %v5414, %v5439
  %v5454 = vadd.f32 %v5415, %v5439
  %v5455 = vadd.f32 %v5416, %v5439
  %v5456 = vadd.f32 %v5417, %v5439
  %v5457 = vadd.f32 %v5418, %v5439
  %v5458 = vadd.f32 %v5419, %v5439
  %v5459 = vadd.f32 %v5420, %v5439
  %v5460 = vadd.f32 %v5421, %v5439
  %v5461 = vadd.f32 %v5422, %v5439
  %v5462 = vadd.f32 %v5423, %v5439
  %v5463 = vadd.f32 %v5424, %v5439
  %v5464 = vadd.f32 %v5425, %v5439
  %v5465 = vadd.f32 %v5426, %v5439
  %v5466 = vadd.f32 %v5427, %v5439
  %v5467 = vadd.f32 %v5428, %v5439
  %v5468 = vadd.f32 %v5429, %v5439
  %v5469 = vadd.f32 %v5430, %v5439
  %v5470 = vadd.f32 %v5431, %v5439
  %v5471 = vadd.f32 %v5432, %v5439
  %v5472 = vadd.f32 %v5433, %v5439
  %v5473 = vmax.f32 %v5441, 0.0
  %v5474 = vmax.f32 %v5442, 0.0
  %v5475 = vmax.f32 %v5443, 0.0
  %v5476 = vmax.f32 %v5444, 0.0
  %v5477 = vmax.f32 %v5445, 0.0
  %v5478 = vmax.f32 %v5446, 0.0
  %v5479 = vmax.f32 %v5447, 0.0
  %v5480 = vmax.f32 %v5448, 0.0
  %v5481 = vmax.f32 %v5449, 0.0
  %v5482 = vmax.f32 %v5450, 0.0
  %v5483 = vmax.f32 %v5451, 0.0
  %v5484 = vmax.f32 %v5452, 0.0
  %v5485 = vmax.f32 %v5453, 0.0
  %v5486 = vmax.f32 %v5454, 0.0
  %v5487 = vmax.f32 %v5455, 0.0
  %v5488 = vmax.f32 %v5456, 0.0
  %v5489 = vmax.f32 %v5457, 0.0
  %v5490 = vmax.f32 %v5458, 0.0
  %v5491 = vmax.f32 %v5459, 0.0
  %v5492 = vmax.f32 %v5460, 0.0
  %v5493 = vmax.f32 %v5461, 0.0
  %v5494 = vmax.f32 %v5462, 0.0
  %v5495 = vmax.f32 %v5463, 0.0
  %v5496 = vmax.f32 %v5464, 0.0
  %v5497 = vmax.f32 %v5465, 0.0
  %v5498 = vmax.f32 %v5466, 0.0
  %v5499 = vmax.f32 %v5467, 0.0
  %v5500 = vmax.f32 %v5468, 0.0
  %v5501 = vmax.f32 %v5469, 0.0
  %v5502 = vmax.f32 %v5470, 0.0
  %v5503 = vmax.f32 %v5471, 0.0
  %v5504 = vmax.f32 %v5472, 0.0
  %vm5505 = vcmask 64512
  %5506 = vst.msk [vmem:[%s3] sm:$0xff] %vm5505, %v5473
  %5507 = vst.msk [vmem:[%s3 + $0x8] sm:$0xff] %vm5505, %v5474
  %5508 = vst.msk [vmem:[%s3 + $0x10] sm:$0xff] %vm5505, %v5475
  %5509 = vst.msk [vmem:[%s3 + $0x18] sm:$0xff] %vm5505, %v5476
  %5510 = vst.msk [vmem:[%s3 + $0x20] sm:$0xff] %vm5505, %v5477
  %5511 = vst.msk [vmem:[%s3 + $0x28] sm:$0xff] %vm5505, %v5478
  %5512 = vst.msk [vmem:[%s3 + $0x30] sm:$0xff] %vm5505, %v5479
  %5513 = vst.msk [vmem:[%s3 + $0x38] sm:$0xff] %vm5505, %v5480
  %5514 = vst.msk [vmem:[%s3 + $0x40] sm:$0xff] %vm5505, %v5481
  %5515 = vst.msk [vmem:[%s3 + $0x48] sm:$0xff] %vm5505, %v5482
  %5516 = vst.msk [vmem:[%s3 + $0x50] sm:$0xff] %vm5505, %v5483
  %5517 = vst.msk [vmem:[%s3 + $0x58] sm:$0xff] %vm5505, %v5484
  %5518 = vst.msk [vmem:[%s3 + $0x60] sm:$0xff] %vm5505, %v5485
  %5519 = vst.msk [vmem:[%s3 + $0x68] sm:$0xff] %vm5505, %v5486
  %5520 = vst.msk [vmem:[%s3 + $0x70] sm:$0xff] %vm5505, %v5487
  %5521 = vst.msk [vmem:[%s3 + $0x78] sm:$0xff] %vm5505, %v5488
  %5522 = vst.msk [vmem:[%s3 + $0x80] sm:$0xff] %vm5505, %v5489
  %5523 = vst.msk [vmem:[%s3 + $0x88] sm:$0xff] %vm5505, %v5490
  %5524 = vst.msk [vmem:[%s3 + $0x90] sm:$0xff] %vm5505, %v5491
  %5525 = vst.msk [vmem:[%s3 + $0x98] sm:$0xff] %vm5505, %v5492
  %5526 = vst.msk [vmem:[%s3 + $0xa0] sm:$0xff] %vm5505, %v5493
  %5527 = vst.msk [vmem:[%s3 + $0xa8] sm:$0xff] %vm5505, %v5494
  %5528 = vst.msk [vmem:[%s3 + $0xb0] sm:$0xff] %vm5505, %v5495
  %5529 = vst.msk [vmem:[%s3 + $0xb8] sm:$0xff] %vm5505, %v5496
  %5530 = vst.msk [vmem:[%s3 + $0xc0] sm:$0xff] %vm5505, %v5497
  %5531 = vst.msk [vmem:[%s3 + $0xc8] sm:$0xff] %vm5505, %v5498
  %5532 = vst.msk [vmem:[%s3 + $0xd0] sm:$0xff] %vm5505, %v5499
  %5533 = vst.msk [vmem:[%s3 + $0xd8] sm:$0xff] %vm5505, %v5500
  %5534 = vst.msk [vmem:[%s3 + $0xe0] sm:$0xff] %vm5505, %v5501
  %5535 = vst.msk [vmem:[%s3 + $0xe8] sm:$0xff] %vm5505, %v5502
  %5536 = vst.msk [vmem:[%s3 + $0xf0] sm:$0xff] %vm5505, %v5503
  %5537 = vst.msk [vmem:[%s3 + $0xf8] sm:$0xff] %vm5505, %v5504
  // Predicated region
  $region14: #{tpu_custom_call.1} parent=0 // pred_check
    _
  $region15: #{tpu_custom_call.1} parent=0 // pred_check_branch
    %5539 = sbr.rel (0) target = $region17
  $region16: #{tpu_custom_call.1} parent=0 // pred_region
    _
  $region17: #{tpu_custom_call.1} parent=0 // pred_fallthru
    _
  // Predicated region
  $region18: #{tpu_custom_call.1} parent=0 // pred_check
    _
  $region19: #{tpu_custom_call.1} parent=0 // pred_check_branch
    %5541 = sbr.rel (0) target = $region21
  $region20: #{tpu_custom_call.1} parent=0 // pred_region
    _
  $region21: #{tpu_custom_call.1} parent=0 // pred_fallthru
    _

</llo_original>
